<compile_context>
chip_gen: v5e
topology: v5e:2x2
jax: 0.10.0
libtpu: 0.0.40
codegen_flags: <defaults>
</compile_context>

<pallas_src>
import functools

import jax
import jax.numpy as jnp
from jax.experimental import pallas as pl
from jax.experimental.pallas import tpu as pltpu


def _ru(x, m):
    return (x + m - 1) // m * m


def _downsampler_b_kernel(phases_ref, wc1_ref, wcomb_ref, gamma_ref, beta_ref,
                          alpha_ref, mask_c1_ref, mask_out_ref, out_ref,
                          c1pad_ref, tc1_ref, td_ref,
                          *, N, C8, M8, Wp, base, Lph_pad, S_pad, Lbuf, cnt,
                          dilations):
    Ln = N * Lph_pad

    # ---- 1) c1: 3x3 / stride 2 / pad 1 as ONE (M8, 9*C8) x (9*C8, Ln) dot.
    # Tap (ky, kx) of the stride-2 conv == unit shift (ky//2, kx//2) of the
    # stride-2 phase (ky%2, kx%2): a contiguous lane slice at flat offset
    # (ky//2)*Wp + (kx//2).  Each tap block is a full 8-sublane aligned store.
    for ky in range(3):
        for kx in range(3):
            t = ky * 3 + kx
            p = (ky % 2) * 2 + (kx % 2)
            off = (ky // 2) * Wp + (kx // 2)
            tc1_ref[t * C8:(t + 1) * C8, :] = phases_ref[p, :, off:off + Ln]
    c1 = jnp.dot(wc1_ref[...], tc1_ref[...],
                 preferred_element_type=jnp.float32)            # (M8, Ln)
    c1 = c1 * mask_c1_ref[...]        # zero all lanes outside valid outputs

    # ---- 2) place c1 into the flat zero-padded buffer; zero only the halos
    #         (front margin + top P rows, bottom P rows + end margin) -- the
    #         in-band pad columns are already zero via mask_c1.
    for b in range(N):
        c1pad_ref[b, :, 0:base] = jnp.zeros((M8, base), jnp.float32)
        c1pad_ref[b, :, base + S_pad:Lbuf] = jnp.zeros(
            (M8, Lbuf - base - S_pad), jnp.float32)
        c1pad_ref[b, :, base:base + S_pad] = \
            c1[:, b * Lph_pad:b * Lph_pad + S_pad]

    # ---- 3) ONE im2col slab for all 5 dilations and all images: tap (ky,kx)
    #         at dilation d is the contiguous lane slice at flat offset
    #         base + ((ky-1)*Wp + (kx-1))*d.  Destinations are fully aligned
    #         (8-sublane row blocks, 128-multiple lane offsets/lengths).
    for di, d in enumerate(dilations):
        for ky in range(3):
            for kx in range(3):
                t = di * 9 + ky * 3 + kx
                off = base + ((ky - 1) * Wp + (kx - 1)) * d
                for b in range(N):
                    td_ref[t * M8:(t + 1) * M8,
                           b * S_pad:(b + 1) * S_pad] = \
                        c1pad_ref[b, :, off:off + S_pad]

    # ---- 4) ONE block-lower-triangular matmul produces the concatenated,
    #         prefix-summed output [d1 | d2 | d2+d4 | ... | d2+..+d16].
    comb = jnp.dot(wcomb_ref[...], td_ref[...],
                   preferred_element_type=jnp.float32)   # (n_out_pad, N*S_pad)

    # ---- 5) training-mode BatchNorm (one-pass masked stats, eps=1e-3) +
    #         PReLU, then one aligned wide store per image.
    mask = mask_out_ref[...]                              # (1, N*S_pad)
    cm = comb * mask
    inv_cnt = 1.0 / cnt
    mean = jnp.sum(cm, axis=1, keepdims=True) * inv_cnt
    var = jnp.sum(cm * comb, axis=1, keepdims=True) * inv_cnt - mean * mean
    scale = gamma_ref[...] * jax.lax.rsqrt(var + 1e-3)
    shift = beta_ref[...] - mean * scale
    z = comb * scale + shift
    z = jnp.where(z > 0, z, alpha_ref[...] * z)
    for b in range(N):
        out_ref[b, :, :] = z[:, b * S_pad:(b + 1) * S_pad]


def downsampler_b(x_nchw, params):
    x = x_nchw.astype(jnp.float32)
    N, Cin, H, W = x.shape
    n_c = params["wc1"].shape[-1]
    n1 = params["wd1"].shape[-1]
    n_out = n1 + 4 * n_c
    Ho = (H - 1) // 2 + 1
    Wo = (W - 1) // 2 + 1
    Hop, Wop = Ho + 1, Wo + 1

    P = 16                              # max dilation -> halo size
    Wp = Wo + 2 * P                     # padded row width == row stride
    S = Ho * Wp                         # flat length of one output row band
    S_pad = _ru(S, 128)                 # 128-aligned band length
    Lph = Hop * Wp                      # flat length of one phase image
    Lph_pad = _ru(Lph, 128)             # 128-aligned per-image phase stride
    Ln = N * Lph_pad
    LnTot = Ln + _ru(Wp + 8, 128)       # tail so in-kernel tap slices fit
    base = _ru(P * Wp + P, 128)         # 128-aligned band start in c1pad
    Lbuf = 2 * base + S_pad             # flat padded-c1 buffer length

    C8 = _ru(Cin, 8)                    # input channels padded to sublanes
    M8 = _ru(n_c, 8)                    # c1 channels padded to sublanes
    n_out_pad = _ru(n_out, 8)
    dilations = (1, 2, 4, 8, 16)

    # ---- stride-2 phase split of the pad-1 input (1x traffic), channel- and
    #      lane-padded so every in-kernel access is tile-aligned.
    xp = jnp.pad(x, ((0, 0), (0, 0), (1, 2), (1, 2)))
    phase_list = []
    for py in (0, 1):
        for px in (0, 1):
            ph = xp[:, :, py:py + 2 * Hop:2, px:px + 2 * Wop:2]  # (N,Cin,Hop,Wop)
            ph = jnp.pad(ph, ((0, 0), (0, C8 - Cin), (0, 0),
                              (P, Wp - P - Wop)))                # (N,C8,Hop,Wp)
            ph = jnp.transpose(ph, (1, 0, 2, 3)).reshape(C8, N, Lph)
            ph = jnp.pad(ph, ((0, 0), (0, 0), (0, Lph_pad - Lph)))
            phase_list.append(ph.reshape(C8, Ln))
    phases = jnp.stack(phase_list, axis=0)
    phases = jnp.pad(phases, ((0, 0), (0, 0), (0, LnTot - Ln)))  # (4,C8,LnTot)

    # ---- weights: HWIO -> (Cout, 9*Cpad), K ordered (ky, kx, ci).
    def tapmat(w_hwio, cin_pad):
        kh, kw, ci, _ = w_hwio.shape
        wt = jnp.transpose(w_hwio.astype(jnp.float32), (3, 0, 1, 2))
        wt = jnp.pad(wt, ((0, 0), (0, 0), (0, 0), (0, cin_pad - ci)))
        return wt.reshape(wt.shape[0], kh * kw * cin_pad)

    wc1_mat = jnp.pad(tapmat(params["wc1"], C8), ((0, M8 - n_c), (0, 0)))

    # Block-lower-triangular fused weight: output chunk j gets the weights of
    # every dilation it accumulates, so the add chain happens inside the MXU.
    t1 = tapmat(params["wd1"], M8)
    t2 = tapmat(params["wd2"], M8)
    t4 = tapmat(params["wd4"], M8)
    t8 = tapmat(params["wd8"], M8)
    t16 = tapmat(params["wd16"], M8)
    K1 = 9 * M8
    zc = jnp.zeros((n_c, K1), jnp.float32)
    wcomb = jnp.concatenate([
        jnp.concatenate([t1, jnp.zeros((n1, 4 * K1), jnp.float32)], axis=1),
        jnp.concatenate([zc, t2, jnp.zeros((n_c, 3 * K1), jnp.float32)], axis=1),
        jnp.concatenate([zc, t2, t4, jnp.zeros((n_c, 2 * K1), jnp.float32)], axis=1),
        jnp.concatenate([zc, t2, t4, t8, jnp.zeros((n_c, K1), jnp.float32)], axis=1),
        jnp.concatenate([zc, t2, t4, t8, t16], axis=1),
        jnp.zeros((n_out_pad - n_out, 5 * K1), jnp.float32),
    ], axis=0)                                          # (n_out_pad, 45*M8)

    def padvec(v):
        v = v.astype(jnp.float32).reshape(-1)
        return jnp.pad(v, (0, n_out_pad - n_out)).reshape(n_out_pad, 1)

    gamma, beta, alpha = (padvec(params[k]) for k in ("gamma", "beta", "alpha"))

    # ---- validity masks (row < Ho and P <= col < P+Wo) on the flat lanes.
    li = jnp.arange(Ln, dtype=jnp.int32) % Lph_pad
    mask_c1 = ((li // Wp < Ho) & (li % Wp >= P) & (li % Wp < P + Wo))
    mask_c1 = mask_c1.astype(jnp.float32)[None, :]
    lo = jnp.arange(N * S_pad, dtype=jnp.int32) % S_pad
    mask_out = ((lo // Wp < Ho) & (lo % Wp >= P) & (lo % Wp < P + Wo))
    mask_out = mask_out.astype(jnp.float32)[None, :]

    # ---- right-size the VMEM request from the actual footprint.
    elems = (4 * C8 * LnTot + M8 * 9 * C8 + n_out_pad * 45 * M8
             + 3 * n_out_pad + Ln + N * S_pad            # inputs
             + N * n_out_pad * S_pad                     # output
             + N * M8 * Lbuf + 9 * C8 * Ln + 45 * M8 * N * S_pad   # scratch
             + M8 * Ln + 2 * n_out_pad * N * S_pad)      # live temporaries
    vmem_limit = min(max(2 * 4 * elems, 32 * 1024 * 1024), 64 * 1024 * 1024)

    kern = functools.partial(
        _downsampler_b_kernel, N=N, C8=C8, M8=M8, Wp=Wp, base=base,
        Lph_pad=Lph_pad, S_pad=S_pad, Lbuf=Lbuf, cnt=float(N * Ho * Wo),
        dilations=dilations)
    vmem = pl.BlockSpec(memory_space=pltpu.MemorySpace.VMEM)
    out_flat = pl.pallas_call(
        kern,
        out_shape=jax.ShapeDtypeStruct((N, n_out_pad, S_pad), jnp.float32),
        in_specs=[vmem] * 8,
        out_specs=vmem,
        scratch_shapes=[
            pltpu.VMEM((N, M8, Lbuf), jnp.float32),        # zero-padded c1
            pltpu.VMEM((9 * C8, Ln), jnp.float32),         # c1 im2col
            pltpu.VMEM((45 * M8, N * S_pad), jnp.float32)  # fused dilated im2col
        ],
        compiler_params=pltpu.CompilerParams(vmem_limit_bytes=vmem_limit),
    )(phases, wc1_mat, wcomb, gamma, beta, alpha, mask_c1, mask_out)

    # (N, n_out_pad, S_pad) -> NCHW: drop channel/lane padding, free reshape,
    # then drop the padded border columns.
    out = out_flat[:, :n_out, :S].reshape(N, n_out, Ho, Wp)[:, :, :, P:P + Wo]
    return out


# ----------------------------------------------------------------------------
# Pure-JAX reference (for correctness check)
# ----------------------------------------------------------------------------
def ref_downsampler_b(x_nchw, params):
    x = jnp.transpose(x_nchw, (0, 2, 3, 1))

    def conv(inp, w, stride, dil):
        pad = dil
        return jax.lax.conv_general_dilated(
            inp, w, window_strides=(stride, stride),
            padding=[(pad, pad), (pad, pad)], rhs_dilation=(dil, dil),
            dimension_numbers=("NHWC", "HWIO", "NHWC"))

    out = conv(x, params["wc1"], 2, 1)
    d1 = conv(out, params["wd1"], 1, 1)
    d2 = conv(out, params["wd2"], 1, 2)
    d4 = conv(out, params["wd4"], 1, 4)
    d8 = conv(out, params["wd8"], 1, 8)
    d16 = conv(out, params["wd16"], 1, 16)
    a1 = d2
    a2 = a1 + d4
    a3 = a2 + d8
    a4 = a3 + d16
    comb = jnp.concatenate([d1, a1, a2, a3, a4], axis=-1)
    mean = comb.mean((0, 1, 2), keepdims=True)
    var = ((comb - mean) ** 2).mean((0, 1, 2), keepdims=True)
    y = (comb - mean) / jnp.sqrt(var + 0.001)
    y = y * params["gamma"].reshape(1, 1, 1, -1) + params["beta"].reshape(1, 1, 1, -1)
    a = params["alpha"].reshape(1, 1, 1, -1)
    y = jnp.where(y > 0, y, a * y)
    return jnp.transpose(y, (0, 3, 1, 2))


if __name__ == "__main__":
    # DownSamplerB(n_in=4, n_out=20)  ->  n = 4, n1 = 20 - 4*4 = 4
    n_in, n_out = 4, 20
    n = n_out // 5
    n1 = n_out - 4 * n

    key = jax.random.PRNGKey(0)
    ks = jax.random.split(key, 10)
    params = {
        "wc1":  jax.random.normal(ks[0], (3, 3, n_in, n), jnp.float32) * 0.1,
        "wd1":  jax.random.normal(ks[1], (3, 3, n, n1), jnp.float32) * 0.1,
        "wd2":  jax.random.normal(ks[2], (3, 3, n, n), jnp.float32) * 0.1,
        "wd4":  jax.random.normal(ks[3], (3, 3, n, n), jnp.float32) * 0.1,
        "wd8":  jax.random.normal(ks[4], (3, 3, n, n), jnp.float32) * 0.1,
        "wd16": jax.random.normal(ks[5], (3, 3, n, n), jnp.float32) * 0.1,
        "gamma": 1.0 + 0.1 * jax.random.normal(ks[6], (n_out,), jnp.float32),
        "beta":  0.1 * jax.random.normal(ks[7], (n_out,), jnp.float32),
        "alpha": jnp.full((n_out,), 0.25, jnp.float32),   # PReLU init
    }

    x = jax.random.normal(ks[8], (2, 4, 16, 16), jnp.float32)  # NCHW

    out = jax.block_until_ready(jax.jit(downsampler_b)(x, params))
    assert out.shape == (2, n_out, 8, 8), out.shape

    ref = jax.block_until_ready(ref_downsampler_b(x, params))
    err = float(jnp.max(jnp.abs(out - ref)))
    assert jnp.allclose(out, ref, atol=2e-4, rtol=2e-4), err

    print("KERNEL_OK")
</pallas_src>

<mosaic_0001>
module attributes {stable_mosaic.version = 11 : i64} {
  func.func @_downsampler_b_kernel(%arg0: memref<4x8x896xf32, #tpu.memory_space<vmem>>, %arg1: memref<8x72xf32, #tpu.memory_space<vmem>>, %arg2: memref<24x360xf32, #tpu.memory_space<vmem>>, %arg3: memref<24x1xf32, #tpu.memory_space<vmem>>, %arg4: memref<24x1xf32, #tpu.memory_space<vmem>>, %arg5: memref<24x1xf32, #tpu.memory_space<vmem>>, %arg6: memref<1x768xf32, #tpu.memory_space<vmem>>, %arg7: memref<1x768xf32, #tpu.memory_space<vmem>>, %arg8: memref<2x24x384xf32, #tpu.memory_space<vmem>>, %arg9: memref<2x8x1920xf32, #tpu.memory_space<vmem>>, %arg10: memref<72x768xf32, #tpu.memory_space<vmem>>, %arg11: memref<360x768xf32, #tpu.memory_space<vmem>>) attributes {dimension_semantics = [], scalar_prefetch = 0 : i64, scratch_operands = 3 : i64, tpu.core_type = #tpu.core_type<tc>} {
    %c0 = arith.constant 0 : index
    %c0_0 = arith.constant 0 : index
    %c0_1 = arith.constant 0 : index
    %0 = vector.load %arg0[%c0, %c0_0, %c0_1] : memref<4x8x896xf32, #tpu.memory_space<vmem>>, vector<1x8x768xf32>
    %1 = vector.shape_cast %0 : vector<1x8x768xf32> to vector<8x768xf32>
    %c0_2 = arith.constant 0 : index
    %c0_3 = arith.constant 0 : index
    %2 = vector.load %arg10[%c0_2, %c0_3] : memref<72x768xf32, #tpu.memory_space<vmem>>, vector<8x768xf32>
    tpu.vector_store %arg10[%c0_2, %c0_3], %1 {strides = array<i32>} : memref<72x768xf32, #tpu.memory_space<vmem>>, vector<8x768xf32>,
    %c1 = arith.constant 1 : index
    %c0_4 = arith.constant 0 : index
    %c0_5 = arith.constant 0 : index
    %3 = vector.load %arg0[%c1, %c0_4, %c0_5] : memref<4x8x896xf32, #tpu.memory_space<vmem>>, vector<1x8x768xf32>
    %4 = vector.shape_cast %3 : vector<1x8x768xf32> to vector<8x768xf32>
    %c8 = arith.constant 8 : index
    %c0_6 = arith.constant 0 : index
    %5 = vector.load %arg10[%c8, %c0_6] : memref<72x768xf32, #tpu.memory_space<vmem>>, vector<8x768xf32>
    tpu.vector_store %arg10[%c8, %c0_6], %4 {strides = array<i32>} : memref<72x768xf32, #tpu.memory_space<vmem>>, vector<8x768xf32>,
    %c0_7 = arith.constant 0 : index
    %c0_8 = arith.constant 0 : index
    %c1_9 = arith.constant 1 : index
    %6 = vector.load %arg0[%c0_7, %c0_8, %c1_9] : memref<4x8x896xf32, #tpu.memory_space<vmem>>, vector<1x8x768xf32>
    %7 = vector.shape_cast %6 : vector<1x8x768xf32> to vector<8x768xf32>
    %c16 = arith.constant 16 : index
    %c0_10 = arith.constant 0 : index
    %8 = vector.load %arg10[%c16, %c0_10] : memref<72x768xf32, #tpu.memory_space<vmem>>, vector<8x768xf32>
    tpu.vector_store %arg10[%c16, %c0_10], %7 {strides = array<i32>} : memref<72x768xf32, #tpu.memory_space<vmem>>, vector<8x768xf32>,
    %c2 = arith.constant 2 : index
    %c0_11 = arith.constant 0 : index
    %c0_12 = arith.constant 0 : index
    %9 = vector.load %arg0[%c2, %c0_11, %c0_12] : memref<4x8x896xf32, #tpu.memory_space<vmem>>, vector<1x8x768xf32>
    %10 = vector.shape_cast %9 : vector<1x8x768xf32> to vector<8x768xf32>
    %c24 = arith.constant 24 : index
    %c0_13 = arith.constant 0 : index
    %11 = vector.load %arg10[%c24, %c0_13] : memref<72x768xf32, #tpu.memory_space<vmem>>, vector<8x768xf32>
    tpu.vector_store %arg10[%c24, %c0_13], %10 {strides = array<i32>} : memref<72x768xf32, #tpu.memory_space<vmem>>, vector<8x768xf32>,
    %c3 = arith.constant 3 : index
    %c0_14 = arith.constant 0 : index
    %c0_15 = arith.constant 0 : index
    %12 = vector.load %arg0[%c3, %c0_14, %c0_15] : memref<4x8x896xf32, #tpu.memory_space<vmem>>, vector<1x8x768xf32>
    %13 = vector.shape_cast %12 : vector<1x8x768xf32> to vector<8x768xf32>
    %c32 = arith.constant 32 : index
    %c0_16 = arith.constant 0 : index
    %14 = vector.load %arg10[%c32, %c0_16] : memref<72x768xf32, #tpu.memory_space<vmem>>, vector<8x768xf32>
    tpu.vector_store %arg10[%c32, %c0_16], %13 {strides = array<i32>} : memref<72x768xf32, #tpu.memory_space<vmem>>, vector<8x768xf32>,
    %c2_17 = arith.constant 2 : index
    %c0_18 = arith.constant 0 : index
    %c1_19 = arith.constant 1 : index
    %15 = vector.load %arg0[%c2_17, %c0_18, %c1_19] : memref<4x8x896xf32, #tpu.memory_space<vmem>>, vector<1x8x768xf32>
    %16 = vector.shape_cast %15 : vector<1x8x768xf32> to vector<8x768xf32>
    %c40 = arith.constant 40 : index
    %c0_20 = arith.constant 0 : index
    %17 = vector.load %arg10[%c40, %c0_20] : memref<72x768xf32, #tpu.memory_space<vmem>>, vector<8x768xf32>
    tpu.vector_store %arg10[%c40, %c0_20], %16 {strides = array<i32>} : memref<72x768xf32, #tpu.memory_space<vmem>>, vector<8x768xf32>,
    %c0_21 = arith.constant 0 : index
    %c0_22 = arith.constant 0 : index
    %c40_23 = arith.constant 40 : index
    %18 = vector.load %arg0[%c0_21, %c0_22, %c40_23] : memref<4x8x896xf32, #tpu.memory_space<vmem>>, vector<1x8x768xf32>
    %19 = vector.shape_cast %18 : vector<1x8x768xf32> to vector<8x768xf32>
    %c48 = arith.constant 48 : index
    %c0_24 = arith.constant 0 : index
    %20 = vector.load %arg10[%c48, %c0_24] : memref<72x768xf32, #tpu.memory_space<vmem>>, vector<8x768xf32>
    tpu.vector_store %arg10[%c48, %c0_24], %19 {strides = array<i32>} : memref<72x768xf32, #tpu.memory_space<vmem>>, vector<8x768xf32>,
    %c1_25 = arith.constant 1 : index
    %c0_26 = arith.constant 0 : index
    %c40_27 = arith.constant 40 : index
    %21 = vector.load %arg0[%c1_25, %c0_26, %c40_27] : memref<4x8x896xf32, #tpu.memory_space<vmem>>, vector<1x8x768xf32>
    %22 = vector.shape_cast %21 : vector<1x8x768xf32> to vector<8x768xf32>
    %c56 = arith.constant 56 : index
    %c0_28 = arith.constant 0 : index
    %23 = vector.load %arg10[%c56, %c0_28] : memref<72x768xf32, #tpu.memory_space<vmem>>, vector<8x768xf32>
    tpu.vector_store %arg10[%c56, %c0_28], %22 {strides = array<i32>} : memref<72x768xf32, #tpu.memory_space<vmem>>, vector<8x768xf32>,
    %c0_29 = arith.constant 0 : index
    %c0_30 = arith.constant 0 : index
    %c41 = arith.constant 41 : index
    %24 = vector.load %arg0[%c0_29, %c0_30, %c41] : memref<4x8x896xf32, #tpu.memory_space<vmem>>, vector<1x8x768xf32>
    %25 = vector.shape_cast %24 : vector<1x8x768xf32> to vector<8x768xf32>
    %c64 = arith.constant 64 : index
    %c0_31 = arith.constant 0 : index
    %26 = vector.load %arg10[%c64, %c0_31] : memref<72x768xf32, #tpu.memory_space<vmem>>, vector<8x768xf32>
    tpu.vector_store %arg10[%c64, %c0_31], %25 {strides = array<i32>} : memref<72x768xf32, #tpu.memory_space<vmem>>, vector<8x768xf32>,
    %c0_32 = arith.constant 0 : index
    %c0_33 = arith.constant 0 : index
    %27 = vector.load %arg1[%c0_32, %c0_33] : memref<8x72xf32, #tpu.memory_space<vmem>>, vector<8x72xf32>
    %c0_34 = arith.constant 0 : index
    %c0_35 = arith.constant 0 : index
    %28 = vector.load %arg10[%c0_34, %c0_35] : memref<72x768xf32, #tpu.memory_space<vmem>>, vector<72x768xf32>
    %cst = arith.constant dense<0.000000e+00> : vector<8x768xf32>
    %29 = tpu.matmul %27, %28, %cst {dimension_numbers = #tpu.dot_dimension_numbers<[1], [0], [0], [1], [0, 0, 1, 1], [], []>} : vector<8x72xf32>, vector<72x768xf32>, vector<8x768xf32> -> vector<8x768xf32>
    %c0_36 = arith.constant 0 : index
    %c0_37 = arith.constant 0 : index
    %30 = vector.load %arg6[%c0_36, %c0_37] : memref<1x768xf32, #tpu.memory_space<vmem>>, vector<1x768xf32>
    %31 = vector.broadcast %30 : vector<1x768xf32> to vector<8x768xf32>
    %32 = arith.mulf %29, %31 : vector<8x768xf32>
    %cst_38 = arith.constant 0.000000e+00 : f32
    %33 = vector.broadcast %cst_38 : f32 to vector<8x768xf32>
    %c0_39 = arith.constant 0 : index
    %c0_40 = arith.constant 0 : index
    %c0_41 = arith.constant 0 : index
    %34 = vector.load %arg9[%c0_39, %c0_40, %c0_41] : memref<2x8x1920xf32, #tpu.memory_space<vmem>>, vector<1x8x768xf32>
    %35 = vector.shape_cast %34 : vector<1x8x768xf32> to vector<8x768xf32>
    %36 = vector.shape_cast %33 : vector<8x768xf32> to vector<1x8x768xf32>
    tpu.vector_store %arg9[%c0_39, %c0_40, %c0_41], %36 {strides = array<i32>} : memref<2x8x1920xf32, #tpu.memory_space<vmem>>, vector<1x8x768xf32>,
    %cst_42 = arith.constant 0.000000e+00 : f32
    %37 = vector.broadcast %cst_42 : f32 to vector<8x768xf32>
    %c0_43 = arith.constant 0 : index
    %c0_44 = arith.constant 0 : index
    %c1152 = arith.constant 1152 : index
    %38 = vector.load %arg9[%c0_43, %c0_44, %c1152] : memref<2x8x1920xf32, #tpu.memory_space<vmem>>, vector<1x8x768xf32>
    %39 = vector.shape_cast %38 : vector<1x8x768xf32> to vector<8x768xf32>
    %40 = vector.shape_cast %37 : vector<8x768xf32> to vector<1x8x768xf32>
    tpu.vector_store %arg9[%c0_43, %c0_44, %c1152], %40 {strides = array<i32>} : memref<2x8x1920xf32, #tpu.memory_space<vmem>>, vector<1x8x768xf32>,
    %41 = vector.extract_strided_slice %32 {offsets = [0, 0], sizes = [8, 384], strides = [1, 1]} : vector<8x768xf32> to vector<8x384xf32>
    %c0_45 = arith.constant 0 : index
    %c0_46 = arith.constant 0 : index
    %c768 = arith.constant 768 : index
    %42 = vector.load %arg9[%c0_45, %c0_46, %c768] : memref<2x8x1920xf32, #tpu.memory_space<vmem>>, vector<1x8x384xf32>
    %43 = vector.shape_cast %42 : vector<1x8x384xf32> to vector<8x384xf32>
    %44 = vector.shape_cast %41 : vector<8x384xf32> to vector<1x8x384xf32>
    tpu.vector_store %arg9[%c0_45, %c0_46, %c768], %44 {strides = array<i32>} : memref<2x8x1920xf32, #tpu.memory_space<vmem>>, vector<1x8x384xf32>,
    %cst_47 = arith.constant 0.000000e+00 : f32
    %45 = vector.broadcast %cst_47 : f32 to vector<8x768xf32>
    %c1_48 = arith.constant 1 : index
    %c0_49 = arith.constant 0 : index
    %c0_50 = arith.constant 0 : index
    %46 = vector.load %arg9[%c1_48, %c0_49, %c0_50] : memref<2x8x1920xf32, #tpu.memory_space<vmem>>, vector<1x8x768xf32>
    %47 = vector.shape_cast %46 : vector<1x8x768xf32> to vector<8x768xf32>
    %48 = vector.shape_cast %45 : vector<8x768xf32> to vector<1x8x768xf32>
    tpu.vector_store %arg9[%c1_48, %c0_49, %c0_50], %48 {strides = array<i32>} : memref<2x8x1920xf32, #tpu.memory_space<vmem>>, vector<1x8x768xf32>,
    %cst_51 = arith.constant 0.000000e+00 : f32
    %49 = vector.broadcast %cst_51 : f32 to vector<8x768xf32>
    %c1_52 = arith.constant 1 : index
    %c0_53 = arith.constant 0 : index
    %c1152_54 = arith.constant 1152 : index
    %50 = vector.load %arg9[%c1_52, %c0_53, %c1152_54] : memref<2x8x1920xf32, #tpu.memory_space<vmem>>, vector<1x8x768xf32>
    %51 = vector.shape_cast %50 : vector<1x8x768xf32> to vector<8x768xf32>
    %52 = vector.shape_cast %49 : vector<8x768xf32> to vector<1x8x768xf32>
    tpu.vector_store %arg9[%c1_52, %c0_53, %c1152_54], %52 {strides = array<i32>} : memref<2x8x1920xf32, #tpu.memory_space<vmem>>, vector<1x8x768xf32>,
    %53 = vector.extract_strided_slice %32 {offsets = [0, 384], sizes = [8, 384], strides = [1, 1]} : vector<8x768xf32> to vector<8x384xf32>
    %c1_55 = arith.constant 1 : index
    %c0_56 = arith.constant 0 : index
    %c768_57 = arith.constant 768 : index
    %54 = vector.load %arg9[%c1_55, %c0_56, %c768_57] : memref<2x8x1920xf32, #tpu.memory_space<vmem>>, vector<1x8x384xf32>
    %55 = vector.shape_cast %54 : vector<1x8x384xf32> to vector<8x384xf32>
    %56 = vector.shape_cast %53 : vector<8x384xf32> to vector<1x8x384xf32>
    tpu.vector_store %arg9[%c1_55, %c0_56, %c768_57], %56 {strides = array<i32>} : memref<2x8x1920xf32, #tpu.memory_space<vmem>>, vector<1x8x384xf32>,
    %c0_58 = arith.constant 0 : index
    %c0_59 = arith.constant 0 : index
    %c727 = arith.constant 727 : index
    %57 = vector.load %arg9[%c0_58, %c0_59, %c727] : memref<2x8x1920xf32, #tpu.memory_space<vmem>>, vector<1x8x384xf32>
    %58 = vector.shape_cast %57 : vector<1x8x384xf32> to vector<8x384xf32>
    %c0_60 = arith.constant 0 : index
    %c0_61 = arith.constant 0 : index
    %59 = vector.load %arg11[%c0_60, %c0_61] : memref<360x768xf32, #tpu.memory_space<vmem>>, vector<8x384xf32>
    tpu.vector_store %arg11[%c0_60, %c0_61], %58 {strides = array<i32>} : memref<360x768xf32, #tpu.memory_space<vmem>>, vector<8x384xf32>,
    %c1_62 = arith.constant 1 : index
    %c0_63 = arith.constant 0 : index
    %c727_64 = arith.constant 727 : index
    %60 = vector.load %arg9[%c1_62, %c0_63, %c727_64] : memref<2x8x1920xf32, #tpu.memory_space<vmem>>, vector<1x8x384xf32>
    %61 = vector.shape_cast %60 : vector<1x8x384xf32> to vector<8x384xf32>
    %c0_65 = arith.constant 0 : index
    %c384 = arith.constant 384 : index
    %62 = vector.load %arg11[%c0_65, %c384] : memref<360x768xf32, #tpu.memory_space<vmem>>, vector<8x384xf32>
    tpu.vector_store %arg11[%c0_65, %c384], %61 {strides = array<i32>} : memref<360x768xf32, #tpu.memory_space<vmem>>, vector<8x384xf32>,
    %c0_66 = arith.constant 0 : index
    %c0_67 = arith.constant 0 : index
    %c728 = arith.constant 728 : index
    %63 = vector.load %arg9[%c0_66, %c0_67, %c728] : memref<2x8x1920xf32, #tpu.memory_space<vmem>>, vector<1x8x384xf32>
    %64 = vector.shape_cast %63 : vector<1x8x384xf32> to vector<8x384xf32>
    %c8_68 = arith.constant 8 : index
    %c0_69 = arith.constant 0 : index
    %65 = vector.load %arg11[%c8_68, %c0_69] : memref<360x768xf32, #tpu.memory_space<vmem>>, vector<8x384xf32>
    tpu.vector_store %arg11[%c8_68, %c0_69], %64 {strides = array<i32>} : memref<360x768xf32, #tpu.memory_space<vmem>>, vector<8x384xf32>,
    %c1_70 = arith.constant 1 : index
    %c0_71 = arith.constant 0 : index
    %c728_72 = arith.constant 728 : index
    %66 = vector.load %arg9[%c1_70, %c0_71, %c728_72] : memref<2x8x1920xf32, #tpu.memory_space<vmem>>, vector<1x8x384xf32>
    %67 = vector.shape_cast %66 : vector<1x8x384xf32> to vector<8x384xf32>
    %c8_73 = arith.constant 8 : index
    %c384_74 = arith.constant 384 : index
    %68 = vector.load %arg11[%c8_73, %c384_74] : memref<360x768xf32, #tpu.memory_space<vmem>>, vector<8x384xf32>
    tpu.vector_store %arg11[%c8_73, %c384_74], %67 {strides = array<i32>} : memref<360x768xf32, #tpu.memory_space<vmem>>, vector<8x384xf32>,
    %c0_75 = arith.constant 0 : index
    %c0_76 = arith.constant 0 : index
    %c729 = arith.constant 729 : index
    %69 = vector.load %arg9[%c0_75, %c0_76, %c729] : memref<2x8x1920xf32, #tpu.memory_space<vmem>>, vector<1x8x384xf32>
    %70 = vector.shape_cast %69 : vector<1x8x384xf32> to vector<8x384xf32>
    %c16_77 = arith.constant 16 : index
    %c0_78 = arith.constant 0 : index
    %71 = vector.load %arg11[%c16_77, %c0_78] : memref<360x768xf32, #tpu.memory_space<vmem>>, vector<8x384xf32>
    tpu.vector_store %arg11[%c16_77, %c0_78], %70 {strides = array<i32>} : memref<360x768xf32, #tpu.memory_space<vmem>>, vector<8x384xf32>,
    %c1_79 = arith.constant 1 : index
    %c0_80 = arith.constant 0 : index
    %c729_81 = arith.constant 729 : index
    %72 = vector.load %arg9[%c1_79, %c0_80, %c729_81] : memref<2x8x1920xf32, #tpu.memory_space<vmem>>, vector<1x8x384xf32>
    %73 = vector.shape_cast %72 : vector<1x8x384xf32> to vector<8x384xf32>
    %c16_82 = arith.constant 16 : index
    %c384_83 = arith.constant 384 : index
    %74 = vector.load %arg11[%c16_82, %c384_83] : memref<360x768xf32, #tpu.memory_space<vmem>>, vector<8x384xf32>
    tpu.vector_store %arg11[%c16_82, %c384_83], %73 {strides = array<i32>} : memref<360x768xf32, #tpu.memory_space<vmem>>, vector<8x384xf32>,
    %c0_84 = arith.constant 0 : index
    %c0_85 = arith.constant 0 : index
    %c767 = arith.constant 767 : index
    %75 = vector.load %arg9[%c0_84, %c0_85, %c767] : memref<2x8x1920xf32, #tpu.memory_space<vmem>>, vector<1x8x384xf32>
    %76 = vector.shape_cast %75 : vector<1x8x384xf32> to vector<8x384xf32>
    %c24_86 = arith.constant 24 : index
    %c0_87 = arith.constant 0 : index
    %77 = vector.load %arg11[%c24_86, %c0_87] : memref<360x768xf32, #tpu.memory_space<vmem>>, vector<8x384xf32>
    tpu.vector_store %arg11[%c24_86, %c0_87], %76 {strides = array<i32>} : memref<360x768xf32, #tpu.memory_space<vmem>>, vector<8x384xf32>,
    %c1_88 = arith.constant 1 : index
    %c0_89 = arith.constant 0 : index
    %c767_90 = arith.constant 767 : index
    %78 = vector.load %arg9[%c1_88, %c0_89, %c767_90] : memref<2x8x1920xf32, #tpu.memory_space<vmem>>, vector<1x8x384xf32>
    %79 = vector.shape_cast %78 : vector<1x8x384xf32> to vector<8x384xf32>
    %c24_91 = arith.constant 24 : index
    %c384_92 = arith.constant 384 : index
    %80 = vector.load %arg11[%c24_91, %c384_92] : memref<360x768xf32, #tpu.memory_space<vmem>>, vector<8x384xf32>
    tpu.vector_store %arg11[%c24_91, %c384_92], %79 {strides = array<i32>} : memref<360x768xf32, #tpu.memory_space<vmem>>, vector<8x384xf32>,
    %c0_93 = arith.constant 0 : index
    %c0_94 = arith.constant 0 : index
    %c768_95 = arith.constant 768 : index
    %81 = vector.load %arg9[%c0_93, %c0_94, %c768_95] : memref<2x8x1920xf32, #tpu.memory_space<vmem>>, vector<1x8x384xf32>
    %82 = vector.shape_cast %81 : vector<1x8x384xf32> to vector<8x384xf32>
    %c32_96 = arith.constant 32 : index
    %c0_97 = arith.constant 0 : index
    %83 = vector.load %arg11[%c32_96, %c0_97] : memref<360x768xf32, #tpu.memory_space<vmem>>, vector<8x384xf32>
    tpu.vector_store %arg11[%c32_96, %c0_97], %82 {strides = array<i32>} : memref<360x768xf32, #tpu.memory_space<vmem>>, vector<8x384xf32>,
    %c1_98 = arith.constant 1 : index
    %c0_99 = arith.constant 0 : index
    %c768_100 = arith.constant 768 : index
    %84 = vector.load %arg9[%c1_98, %c0_99, %c768_100] : memref<2x8x1920xf32, #tpu.memory_space<vmem>>, vector<1x8x384xf32>
    %85 = vector.shape_cast %84 : vector<1x8x384xf32> to vector<8x384xf32>
    %c32_101 = arith.constant 32 : index
    %c384_102 = arith.constant 384 : index
    %86 = vector.load %arg11[%c32_101, %c384_102] : memref<360x768xf32, #tpu.memory_space<vmem>>, vector<8x384xf32>
    tpu.vector_store %arg11[%c32_101, %c384_102], %85 {strides = array<i32>} : memref<360x768xf32, #tpu.memory_space<vmem>>, vector<8x384xf32>,
    %c0_103 = arith.constant 0 : index
    %c0_104 = arith.constant 0 : index
    %c769 = arith.constant 769 : index
    %87 = vector.load %arg9[%c0_103, %c0_104, %c769] : memref<2x8x1920xf32, #tpu.memory_space<vmem>>, vector<1x8x384xf32>
    %88 = vector.shape_cast %87 : vector<1x8x384xf32> to vector<8x384xf32>
    %c40_105 = arith.constant 40 : index
    %c0_106 = arith.constant 0 : index
    %89 = vector.load %arg11[%c40_105, %c0_106] : memref<360x768xf32, #tpu.memory_space<vmem>>, vector<8x384xf32>
    tpu.vector_store %arg11[%c40_105, %c0_106], %88 {strides = array<i32>} : memref<360x768xf32, #tpu.memory_space<vmem>>, vector<8x384xf32>,
    %c1_107 = arith.constant 1 : index
    %c0_108 = arith.constant 0 : index
    %c769_109 = arith.constant 769 : index
    %90 = vector.load %arg9[%c1_107, %c0_108, %c769_109] : memref<2x8x1920xf32, #tpu.memory_space<vmem>>, vector<1x8x384xf32>
    %91 = vector.shape_cast %90 : vector<1x8x384xf32> to vector<8x384xf32>
    %c40_110 = arith.constant 40 : index
    %c384_111 = arith.constant 384 : index
    %92 = vector.load %arg11[%c40_110, %c384_111] : memref<360x768xf32, #tpu.memory_space<vmem>>, vector<8x384xf32>
    tpu.vector_store %arg11[%c40_110, %c384_111], %91 {strides = array<i32>} : memref<360x768xf32, #tpu.memory_space<vmem>>, vector<8x384xf32>,
    %c0_112 = arith.constant 0 : index
    %c0_113 = arith.constant 0 : index
    %c807 = arith.constant 807 : index
    %93 = vector.load %arg9[%c0_112, %c0_113, %c807] : memref<2x8x1920xf32, #tpu.memory_space<vmem>>, vector<1x8x384xf32>
    %94 = vector.shape_cast %93 : vector<1x8x384xf32> to vector<8x384xf32>
    %c48_114 = arith.constant 48 : index
    %c0_115 = arith.constant 0 : index
    %95 = vector.load %arg11[%c48_114, %c0_115] : memref<360x768xf32, #tpu.memory_space<vmem>>, vector<8x384xf32>
    tpu.vector_store %arg11[%c48_114, %c0_115], %94 {strides = array<i32>} : memref<360x768xf32, #tpu.memory_space<vmem>>, vector<8x384xf32>,
    %c1_116 = arith.constant 1 : index
    %c0_117 = arith.constant 0 : index
    %c807_118 = arith.constant 807 : index
    %96 = vector.load %arg9[%c1_116, %c0_117, %c807_118] : memref<2x8x1920xf32, #tpu.memory_space<vmem>>, vector<1x8x384xf32>
    %97 = vector.shape_cast %96 : vector<1x8x384xf32> to vector<8x384xf32>
    %c48_119 = arith.constant 48 : index
    %c384_120 = arith.constant 384 : index
    %98 = vector.load %arg11[%c48_119, %c384_120] : memref<360x768xf32, #tpu.memory_space<vmem>>, vector<8x384xf32>
    tpu.vector_store %arg11[%c48_119, %c384_120], %97 {strides = array<i32>} : memref<360x768xf32, #tpu.memory_space<vmem>>, vector<8x384xf32>,
    %c0_121 = arith.constant 0 : index
    %c0_122 = arith.constant 0 : index
    %c808 = arith.constant 808 : index
    %99 = vector.load %arg9[%c0_121, %c0_122, %c808] : memref<2x8x1920xf32, #tpu.memory_space<vmem>>, vector<1x8x384xf32>
    %100 = vector.shape_cast %99 : vector<1x8x384xf32> to vector<8x384xf32>
    %c56_123 = arith.constant 56 : index
    %c0_124 = arith.constant 0 : index
    %101 = vector.load %arg11[%c56_123, %c0_124] : memref<360x768xf32, #tpu.memory_space<vmem>>, vector<8x384xf32>
    tpu.vector_store %arg11[%c56_123, %c0_124], %100 {strides = array<i32>} : memref<360x768xf32, #tpu.memory_space<vmem>>, vector<8x384xf32>,
    %c1_125 = arith.constant 1 : index
    %c0_126 = arith.constant 0 : index
    %c808_127 = arith.constant 808 : index
    %102 = vector.load %arg9[%c1_125, %c0_126, %c808_127] : memref<2x8x1920xf32, #tpu.memory_space<vmem>>, vector<1x8x384xf32>
    %103 = vector.shape_cast %102 : vector<1x8x384xf32> to vector<8x384xf32>
    %c56_128 = arith.constant 56 : index
    %c384_129 = arith.constant 384 : index
    %104 = vector.load %arg11[%c56_128, %c384_129] : memref<360x768xf32, #tpu.memory_space<vmem>>, vector<8x384xf32>
    tpu.vector_store %arg11[%c56_128, %c384_129], %103 {strides = array<i32>} : memref<360x768xf32, #tpu.memory_space<vmem>>, vector<8x384xf32>,
    %c0_130 = arith.constant 0 : index
    %c0_131 = arith.constant 0 : index
    %c809 = arith.constant 809 : index
    %105 = vector.load %arg9[%c0_130, %c0_131, %c809] : memref<2x8x1920xf32, #tpu.memory_space<vmem>>, vector<1x8x384xf32>
    %106 = vector.shape_cast %105 : vector<1x8x384xf32> to vector<8x384xf32>
    %c64_132 = arith.constant 64 : index
    %c0_133 = arith.constant 0 : index
    %107 = vector.load %arg11[%c64_132, %c0_133] : memref<360x768xf32, #tpu.memory_space<vmem>>, vector<8x384xf32>
    tpu.vector_store %arg11[%c64_132, %c0_133], %106 {strides = array<i32>} : memref<360x768xf32, #tpu.memory_space<vmem>>, vector<8x384xf32>,
    %c1_134 = arith.constant 1 : index
    %c0_135 = arith.constant 0 : index
    %c809_136 = arith.constant 809 : index
    %108 = vector.load %arg9[%c1_134, %c0_135, %c809_136] : memref<2x8x1920xf32, #tpu.memory_space<vmem>>, vector<1x8x384xf32>
    %109 = vector.shape_cast %108 : vector<1x8x384xf32> to vector<8x384xf32>
    %c64_137 = arith.constant 64 : index
    %c384_138 = arith.constant 384 : index
    %110 = vector.load %arg11[%c64_137, %c384_138] : memref<360x768xf32, #tpu.memory_space<vmem>>, vector<8x384xf32>
    tpu.vector_store %arg11[%c64_137, %c384_138], %109 {strides = array<i32>} : memref<360x768xf32, #tpu.memory_space<vmem>>, vector<8x384xf32>,
    %c0_139 = arith.constant 0 : index
    %c0_140 = arith.constant 0 : index
    %c686 = arith.constant 686 : index
    %111 = vector.load %arg9[%c0_139, %c0_140, %c686] : memref<2x8x1920xf32, #tpu.memory_space<vmem>>, vector<1x8x384xf32>
    %112 = vector.shape_cast %111 : vector<1x8x384xf32> to vector<8x384xf32>
    %c72 = arith.constant 72 : index
    %c0_141 = arith.constant 0 : index
    %113 = vector.load %arg11[%c72, %c0_141] : memref<360x768xf32, #tpu.memory_space<vmem>>, vector<8x384xf32>
    tpu.vector_store %arg11[%c72, %c0_141], %112 {strides = array<i32>} : memref<360x768xf32, #tpu.memory_space<vmem>>, vector<8x384xf32>,
    %c1_142 = arith.constant 1 : index
    %c0_143 = arith.constant 0 : index
    %c686_144 = arith.constant 686 : index
    %114 = vector.load %arg9[%c1_142, %c0_143, %c686_144] : memref<2x8x1920xf32, #tpu.memory_space<vmem>>, vector<1x8x384xf32>
    %115 = vector.shape_cast %114 : vector<1x8x384xf32> to vector<8x384xf32>
    %c72_145 = arith.constant 72 : index
    %c384_146 = arith.constant 384 : index
    %116 = vector.load %arg11[%c72_145, %c384_146] : memref<360x768xf32, #tpu.memory_space<vmem>>, vector<8x384xf32>
    tpu.vector_store %arg11[%c72_145, %c384_146], %115 {strides = array<i32>} : memref<360x768xf32, #tpu.memory_space<vmem>>, vector<8x384xf32>,
    %c0_147 = arith.constant 0 : index
    %c0_148 = arith.constant 0 : index
    %c688 = arith.constant 688 : index
    %117 = vector.load %arg9[%c0_147, %c0_148, %c688] : memref<2x8x1920xf32, #tpu.memory_space<vmem>>, vector<1x8x384xf32>
    %118 = vector.shape_cast %117 : vector<1x8x384xf32> to vector<8x384xf32>
    %c80 = arith.constant 80 : index
    %c0_149 = arith.constant 0 : index
    %119 = vector.load %arg11[%c80, %c0_149] : memref<360x768xf32, #tpu.memory_space<vmem>>, vector<8x384xf32>
    tpu.vector_store %arg11[%c80, %c0_149], %118 {strides = array<i32>} : memref<360x768xf32, #tpu.memory_space<vmem>>, vector<8x384xf32>,
    %c1_150 = arith.constant 1 : index
    %c0_151 = arith.constant 0 : index
    %c688_152 = arith.constant 688 : index
    %120 = vector.load %arg9[%c1_150, %c0_151, %c688_152] : memref<2x8x1920xf32, #tpu.memory_space<vmem>>, vector<1x8x384xf32>
    %121 = vector.shape_cast %120 : vector<1x8x384xf32> to vector<8x384xf32>
    %c80_153 = arith.constant 80 : index
    %c384_154 = arith.constant 384 : index
    %122 = vector.load %arg11[%c80_153, %c384_154] : memref<360x768xf32, #tpu.memory_space<vmem>>, vector<8x384xf32>
    tpu.vector_store %arg11[%c80_153, %c384_154], %121 {strides = array<i32>} : memref<360x768xf32, #tpu.memory_space<vmem>>, vector<8x384xf32>,
    %c0_155 = arith.constant 0 : index
    %c0_156 = arith.constant 0 : index
    %c690 = arith.constant 690 : index
    %123 = vector.load %arg9[%c0_155, %c0_156, %c690] : memref<2x8x1920xf32, #tpu.memory_space<vmem>>, vector<1x8x384xf32>
    %124 = vector.shape_cast %123 : vector<1x8x384xf32> to vector<8x384xf32>
    %c88 = arith.constant 88 : index
    %c0_157 = arith.constant 0 : index
    %125 = vector.load %arg11[%c88, %c0_157] : memref<360x768xf32, #tpu.memory_space<vmem>>, vector<8x384xf32>
    tpu.vector_store %arg11[%c88, %c0_157], %124 {strides = array<i32>} : memref<360x768xf32, #tpu.memory_space<vmem>>, vector<8x384xf32>,
    %c1_158 = arith.constant 1 : index
    %c0_159 = arith.constant 0 : index
    %c690_160 = arith.constant 690 : index
    %126 = vector.load %arg9[%c1_158, %c0_159, %c690_160] : memref<2x8x1920xf32, #tpu.memory_space<vmem>>, vector<1x8x384xf32>
    %127 = vector.shape_cast %126 : vector<1x8x384xf32> to vector<8x384xf32>
    %c88_161 = arith.constant 88 : index
    %c384_162 = arith.constant 384 : index
    %128 = vector.load %arg11[%c88_161, %c384_162] : memref<360x768xf32, #tpu.memory_space<vmem>>, vector<8x384xf32>
    tpu.vector_store %arg11[%c88_161, %c384_162], %127 {strides = array<i32>} : memref<360x768xf32, #tpu.memory_space<vmem>>, vector<8x384xf32>,
    %c0_163 = arith.constant 0 : index
    %c0_164 = arith.constant 0 : index
    %c766 = arith.constant 766 : index
    %129 = vector.load %arg9[%c0_163, %c0_164, %c766] : memref<2x8x1920xf32, #tpu.memory_space<vmem>>, vector<1x8x384xf32>
    %130 = vector.shape_cast %129 : vector<1x8x384xf32> to vector<8x384xf32>
    %c96 = arith.constant 96 : index
    %c0_165 = arith.constant 0 : index
    %131 = vector.load %arg11[%c96, %c0_165] : memref<360x768xf32, #tpu.memory_space<vmem>>, vector<8x384xf32>
    tpu.vector_store %arg11[%c96, %c0_165], %130 {strides = array<i32>} : memref<360x768xf32, #tpu.memory_space<vmem>>, vector<8x384xf32>,
    %c1_166 = arith.constant 1 : index
    %c0_167 = arith.constant 0 : index
    %c766_168 = arith.constant 766 : index
    %132 = vector.load %arg9[%c1_166, %c0_167, %c766_168] : memref<2x8x1920xf32, #tpu.memory_space<vmem>>, vector<1x8x384xf32>
    %133 = vector.shape_cast %132 : vector<1x8x384xf32> to vector<8x384xf32>
    %c96_169 = arith.constant 96 : index
    %c384_170 = arith.constant 384 : index
    %134 = vector.load %arg11[%c96_169, %c384_170] : memref<360x768xf32, #tpu.memory_space<vmem>>, vector<8x384xf32>
    tpu.vector_store %arg11[%c96_169, %c384_170], %133 {strides = array<i32>} : memref<360x768xf32, #tpu.memory_space<vmem>>, vector<8x384xf32>,
    %c0_171 = arith.constant 0 : index
    %c0_172 = arith.constant 0 : index
    %c768_173 = arith.constant 768 : index
    %135 = vector.load %arg9[%c0_171, %c0_172, %c768_173] : memref<2x8x1920xf32, #tpu.memory_space<vmem>>, vector<1x8x384xf32>
    %136 = vector.shape_cast %135 : vector<1x8x384xf32> to vector<8x384xf32>
    %c104 = arith.constant 104 : index
    %c0_174 = arith.constant 0 : index
    %137 = vector.load %arg11[%c104, %c0_174] : memref<360x768xf32, #tpu.memory_space<vmem>>, vector<8x384xf32>
    tpu.vector_store %arg11[%c104, %c0_174], %136 {strides = array<i32>} : memref<360x768xf32, #tpu.memory_space<vmem>>, vector<8x384xf32>,
    %c1_175 = arith.constant 1 : index
    %c0_176 = arith.constant 0 : index
    %c768_177 = arith.constant 768 : index
    %138 = vector.load %arg9[%c1_175, %c0_176, %c768_177] : memref<2x8x1920xf32, #tpu.memory_space<vmem>>, vector<1x8x384xf32>
    %139 = vector.shape_cast %138 : vector<1x8x384xf32> to vector<8x384xf32>
    %c104_178 = arith.constant 104 : index
    %c384_179 = arith.constant 384 : index
    %140 = vector.load %arg11[%c104_178, %c384_179] : memref<360x768xf32, #tpu.memory_space<vmem>>, vector<8x384xf32>
    tpu.vector_store %arg11[%c104_178, %c384_179], %139 {strides = array<i32>} : memref<360x768xf32, #tpu.memory_space<vmem>>, vector<8x384xf32>,
    %c0_180 = arith.constant 0 : index
    %c0_181 = arith.constant 0 : index
    %c770 = arith.constant 770 : index
    %141 = vector.load %arg9[%c0_180, %c0_181, %c770] : memref<2x8x1920xf32, #tpu.memory_space<vmem>>, vector<1x8x384xf32>
    %142 = vector.shape_cast %141 : vector<1x8x384xf32> to vector<8x384xf32>
    %c112 = arith.constant 112 : index
    %c0_182 = arith.constant 0 : index
    %143 = vector.load %arg11[%c112, %c0_182] : memref<360x768xf32, #tpu.memory_space<vmem>>, vector<8x384xf32>
    tpu.vector_store %arg11[%c112, %c0_182], %142 {strides = array<i32>} : memref<360x768xf32, #tpu.memory_space<vmem>>, vector<8x384xf32>,
    %c1_183 = arith.constant 1 : index
    %c0_184 = arith.constant 0 : index
    %c770_185 = arith.constant 770 : index
    %144 = vector.load %arg9[%c1_183, %c0_184, %c770_185] : memref<2x8x1920xf32, #tpu.memory_space<vmem>>, vector<1x8x384xf32>
    %145 = vector.shape_cast %144 : vector<1x8x384xf32> to vector<8x384xf32>
    %c112_186 = arith.constant 112 : index
    %c384_187 = arith.constant 384 : index
    %146 = vector.load %arg11[%c112_186, %c384_187] : memref<360x768xf32, #tpu.memory_space<vmem>>, vector<8x384xf32>
    tpu.vector_store %arg11[%c112_186, %c384_187], %145 {strides = array<i32>} : memref<360x768xf32, #tpu.memory_space<vmem>>, vector<8x384xf32>,
    %c0_188 = arith.constant 0 : index
    %c0_189 = arith.constant 0 : index
    %c846 = arith.constant 846 : index
    %147 = vector.load %arg9[%c0_188, %c0_189, %c846] : memref<2x8x1920xf32, #tpu.memory_space<vmem>>, vector<1x8x384xf32>
    %148 = vector.shape_cast %147 : vector<1x8x384xf32> to vector<8x384xf32>
    %c120 = arith.constant 120 : index
    %c0_190 = arith.constant 0 : index
    %149 = vector.load %arg11[%c120, %c0_190] : memref<360x768xf32, #tpu.memory_space<vmem>>, vector<8x384xf32>
    tpu.vector_store %arg11[%c120, %c0_190], %148 {strides = array<i32>} : memref<360x768xf32, #tpu.memory_space<vmem>>, vector<8x384xf32>,
    %c1_191 = arith.constant 1 : index
    %c0_192 = arith.constant 0 : index
    %c846_193 = arith.constant 846 : index
    %150 = vector.load %arg9[%c1_191, %c0_192, %c846_193] : memref<2x8x1920xf32, #tpu.memory_space<vmem>>, vector<1x8x384xf32>
    %151 = vector.shape_cast %150 : vector<1x8x384xf32> to vector<8x384xf32>
    %c120_194 = arith.constant 120 : index
    %c384_195 = arith.constant 384 : index
    %152 = vector.load %arg11[%c120_194, %c384_195] : memref<360x768xf32, #tpu.memory_space<vmem>>, vector<8x384xf32>
    tpu.vector_store %arg11[%c120_194, %c384_195], %151 {strides = array<i32>} : memref<360x768xf32, #tpu.memory_space<vmem>>, vector<8x384xf32>,
    %c0_196 = arith.constant 0 : index
    %c0_197 = arith.constant 0 : index
    %c848 = arith.constant 848 : index
    %153 = vector.load %arg9[%c0_196, %c0_197, %c848] : memref<2x8x1920xf32, #tpu.memory_space<vmem>>, vector<1x8x384xf32>
    %154 = vector.shape_cast %153 : vector<1x8x384xf32> to vector<8x384xf32>
    %c128 = arith.constant 128 : index
    %c0_198 = arith.constant 0 : index
    %155 = vector.load %arg11[%c128, %c0_198] : memref<360x768xf32, #tpu.memory_space<vmem>>, vector<8x384xf32>
    tpu.vector_store %arg11[%c128, %c0_198], %154 {strides = array<i32>} : memref<360x768xf32, #tpu.memory_space<vmem>>, vector<8x384xf32>,
    %c1_199 = arith.constant 1 : index
    %c0_200 = arith.constant 0 : index
    %c848_201 = arith.constant 848 : index
    %156 = vector.load %arg9[%c1_199, %c0_200, %c848_201] : memref<2x8x1920xf32, #tpu.memory_space<vmem>>, vector<1x8x384xf32>
    %157 = vector.shape_cast %156 : vector<1x8x384xf32> to vector<8x384xf32>
    %c128_202 = arith.constant 128 : index
    %c384_203 = arith.constant 384 : index
    %158 = vector.load %arg11[%c128_202, %c384_203] : memref<360x768xf32, #tpu.memory_space<vmem>>, vector<8x384xf32>
    tpu.vector_store %arg11[%c128_202, %c384_203], %157 {strides = array<i32>} : memref<360x768xf32, #tpu.memory_space<vmem>>, vector<8x384xf32>,
    %c0_204 = arith.constant 0 : index
    %c0_205 = arith.constant 0 : index
    %c850 = arith.constant 850 : index
    %159 = vector.load %arg9[%c0_204, %c0_205, %c850] : memref<2x8x1920xf32, #tpu.memory_space<vmem>>, vector<1x8x384xf32>
    %160 = vector.shape_cast %159 : vector<1x8x384xf32> to vector<8x384xf32>
    %c136 = arith.constant 136 : index
    %c0_206 = arith.constant 0 : index
    %161 = vector.load %arg11[%c136, %c0_206] : memref<360x768xf32, #tpu.memory_space<vmem>>, vector<8x384xf32>
    tpu.vector_store %arg11[%c136, %c0_206], %160 {strides = array<i32>} : memref<360x768xf32, #tpu.memory_space<vmem>>, vector<8x384xf32>,
    %c1_207 = arith.constant 1 : index
    %c0_208 = arith.constant 0 : index
    %c850_209 = arith.constant 850 : index
    %162 = vector.load %arg9[%c1_207, %c0_208, %c850_209] : memref<2x8x1920xf32, #tpu.memory_space<vmem>>, vector<1x8x384xf32>
    %163 = vector.shape_cast %162 : vector<1x8x384xf32> to vector<8x384xf32>
    %c136_210 = arith.constant 136 : index
    %c384_211 = arith.constant 384 : index
    %164 = vector.load %arg11[%c136_210, %c384_211] : memref<360x768xf32, #tpu.memory_space<vmem>>, vector<8x384xf32>
    tpu.vector_store %arg11[%c136_210, %c384_211], %163 {strides = array<i32>} : memref<360x768xf32, #tpu.memory_space<vmem>>, vector<8x384xf32>,
    %c0_212 = arith.constant 0 : index
    %c0_213 = arith.constant 0 : index
    %c604 = arith.constant 604 : index
    %165 = vector.load %arg9[%c0_212, %c0_213, %c604] : memref<2x8x1920xf32, #tpu.memory_space<vmem>>, vector<1x8x384xf32>
    %166 = vector.shape_cast %165 : vector<1x8x384xf32> to vector<8x384xf32>
    %c144 = arith.constant 144 : index
    %c0_214 = arith.constant 0 : index
    %167 = vector.load %arg11[%c144, %c0_214] : memref<360x768xf32, #tpu.memory_space<vmem>>, vector<8x384xf32>
    tpu.vector_store %arg11[%c144, %c0_214], %166 {strides = array<i32>} : memref<360x768xf32, #tpu.memory_space<vmem>>, vector<8x384xf32>,
    %c1_215 = arith.constant 1 : index
    %c0_216 = arith.constant 0 : index
    %c604_217 = arith.constant 604 : index
    %168 = vector.load %arg9[%c1_215, %c0_216, %c604_217] : memref<2x8x1920xf32, #tpu.memory_space<vmem>>, vector<1x8x384xf32>
    %169 = vector.shape_cast %168 : vector<1x8x384xf32> to vector<8x384xf32>
    %c144_218 = arith.constant 144 : index
    %c384_219 = arith.constant 384 : index
    %170 = vector.load %arg11[%c144_218, %c384_219] : memref<360x768xf32, #tpu.memory_space<vmem>>, vector<8x384xf32>
    tpu.vector_store %arg11[%c144_218, %c384_219], %169 {strides = array<i32>} : memref<360x768xf32, #tpu.memory_space<vmem>>, vector<8x384xf32>,
    %c0_220 = arith.constant 0 : index
    %c0_221 = arith.constant 0 : index
    %c608 = arith.constant 608 : index
    %171 = vector.load %arg9[%c0_220, %c0_221, %c608] : memref<2x8x1920xf32, #tpu.memory_space<vmem>>, vector<1x8x384xf32>
    %172 = vector.shape_cast %171 : vector<1x8x384xf32> to vector<8x384xf32>
    %c152 = arith.constant 152 : index
    %c0_222 = arith.constant 0 : index
    %173 = vector.load %arg11[%c152, %c0_222] : memref<360x768xf32, #tpu.memory_space<vmem>>, vector<8x384xf32>
    tpu.vector_store %arg11[%c152, %c0_222], %172 {strides = array<i32>} : memref<360x768xf32, #tpu.memory_space<vmem>>, vector<8x384xf32>,
    %c1_223 = arith.constant 1 : index
    %c0_224 = arith.constant 0 : index
    %c608_225 = arith.constant 608 : index
    %174 = vector.load %arg9[%c1_223, %c0_224, %c608_225] : memref<2x8x1920xf32, #tpu.memory_space<vmem>>, vector<1x8x384xf32>
    %175 = vector.shape_cast %174 : vector<1x8x384xf32> to vector<8x384xf32>
    %c152_226 = arith.constant 152 : index
    %c384_227 = arith.constant 384 : index
    %176 = vector.load %arg11[%c152_226, %c384_227] : memref<360x768xf32, #tpu.memory_space<vmem>>, vector<8x384xf32>
    tpu.vector_store %arg11[%c152_226, %c384_227], %175 {strides = array<i32>} : memref<360x768xf32, #tpu.memory_space<vmem>>, vector<8x384xf32>,
    %c0_228 = arith.constant 0 : index
    %c0_229 = arith.constant 0 : index
    %c612 = arith.constant 612 : index
    %177 = vector.load %arg9[%c0_228, %c0_229, %c612] : memref<2x8x1920xf32, #tpu.memory_space<vmem>>, vector<1x8x384xf32>
    %178 = vector.shape_cast %177 : vector<1x8x384xf32> to vector<8x384xf32>
    %c160 = arith.constant 160 : index
    %c0_230 = arith.constant 0 : index
    %179 = vector.load %arg11[%c160, %c0_230] : memref<360x768xf32, #tpu.memory_space<vmem>>, vector<8x384xf32>
    tpu.vector_store %arg11[%c160, %c0_230], %178 {strides = array<i32>} : memref<360x768xf32, #tpu.memory_space<vmem>>, vector<8x384xf32>,
    %c1_231 = arith.constant 1 : index
    %c0_232 = arith.constant 0 : index
    %c612_233 = arith.constant 612 : index
    %180 = vector.load %arg9[%c1_231, %c0_232, %c612_233] : memref<2x8x1920xf32, #tpu.memory_space<vmem>>, vector<1x8x384xf32>
    %181 = vector.shape_cast %180 : vector<1x8x384xf32> to vector<8x384xf32>
    %c160_234 = arith.constant 160 : index
    %c384_235 = arith.constant 384 : index
    %182 = vector.load %arg11[%c160_234, %c384_235] : memref<360x768xf32, #tpu.memory_space<vmem>>, vector<8x384xf32>
    tpu.vector_store %arg11[%c160_234, %c384_235], %181 {strides = array<i32>} : memref<360x768xf32, #tpu.memory_space<vmem>>, vector<8x384xf32>,
    %c0_236 = arith.constant 0 : index
    %c0_237 = arith.constant 0 : index
    %c764 = arith.constant 764 : index
    %183 = vector.load %arg9[%c0_236, %c0_237, %c764] : memref<2x8x1920xf32, #tpu.memory_space<vmem>>, vector<1x8x384xf32>
    %184 = vector.shape_cast %183 : vector<1x8x384xf32> to vector<8x384xf32>
    %c168 = arith.constant 168 : index
    %c0_238 = arith.constant 0 : index
    %185 = vector.load %arg11[%c168, %c0_238] : memref<360x768xf32, #tpu.memory_space<vmem>>, vector<8x384xf32>
    tpu.vector_store %arg11[%c168, %c0_238], %184 {strides = array<i32>} : memref<360x768xf32, #tpu.memory_space<vmem>>, vector<8x384xf32>,
    %c1_239 = arith.constant 1 : index
    %c0_240 = arith.constant 0 : index
    %c764_241 = arith.constant 764 : index
    %186 = vector.load %arg9[%c1_239, %c0_240, %c764_241] : memref<2x8x1920xf32, #tpu.memory_space<vmem>>, vector<1x8x384xf32>
    %187 = vector.shape_cast %186 : vector<1x8x384xf32> to vector<8x384xf32>
    %c168_242 = arith.constant 168 : index
    %c384_243 = arith.constant 384 : index
    %188 = vector.load %arg11[%c168_242, %c384_243] : memref<360x768xf32, #tpu.memory_space<vmem>>, vector<8x384xf32>
    tpu.vector_store %arg11[%c168_242, %c384_243], %187 {strides = array<i32>} : memref<360x768xf32, #tpu.memory_space<vmem>>, vector<8x384xf32>,
    %c0_244 = arith.constant 0 : index
    %c0_245 = arith.constant 0 : index
    %c768_246 = arith.constant 768 : index
    %189 = vector.load %arg9[%c0_244, %c0_245, %c768_246] : memref<2x8x1920xf32, #tpu.memory_space<vmem>>, vector<1x8x384xf32>
    %190 = vector.shape_cast %189 : vector<1x8x384xf32> to vector<8x384xf32>
    %c176 = arith.constant 176 : index
    %c0_247 = arith.constant 0 : index
    %191 = vector.load %arg11[%c176, %c0_247] : memref<360x768xf32, #tpu.memory_space<vmem>>, vector<8x384xf32>
    tpu.vector_store %arg11[%c176, %c0_247], %190 {strides = array<i32>} : memref<360x768xf32, #tpu.memory_space<vmem>>, vector<8x384xf32>,
    %c1_248 = arith.constant 1 : index
    %c0_249 = arith.constant 0 : index
    %c768_250 = arith.constant 768 : index
    %192 = vector.load %arg9[%c1_248, %c0_249, %c768_250] : memref<2x8x1920xf32, #tpu.memory_space<vmem>>, vector<1x8x384xf32>
    %193 = vector.shape_cast %192 : vector<1x8x384xf32> to vector<8x384xf32>
    %c176_251 = arith.constant 176 : index
    %c384_252 = arith.constant 384 : index
    %194 = vector.load %arg11[%c176_251, %c384_252] : memref<360x768xf32, #tpu.memory_space<vmem>>, vector<8x384xf32>
    tpu.vector_store %arg11[%c176_251, %c384_252], %193 {strides = array<i32>} : memref<360x768xf32, #tpu.memory_space<vmem>>, vector<8x384xf32>,
    %c0_253 = arith.constant 0 : index
    %c0_254 = arith.constant 0 : index
    %c772 = arith.constant 772 : index
    %195 = vector.load %arg9[%c0_253, %c0_254, %c772] : memref<2x8x1920xf32, #tpu.memory_space<vmem>>, vector<1x8x384xf32>
    %196 = vector.shape_cast %195 : vector<1x8x384xf32> to vector<8x384xf32>
    %c184 = arith.constant 184 : index
    %c0_255 = arith.constant 0 : index
    %197 = vector.load %arg11[%c184, %c0_255] : memref<360x768xf32, #tpu.memory_space<vmem>>, vector<8x384xf32>
    tpu.vector_store %arg11[%c184, %c0_255], %196 {strides = array<i32>} : memref<360x768xf32, #tpu.memory_space<vmem>>, vector<8x384xf32>,
    %c1_256 = arith.constant 1 : index
    %c0_257 = arith.constant 0 : index
    %c772_258 = arith.constant 772 : index
    %198 = vector.load %arg9[%c1_256, %c0_257, %c772_258] : memref<2x8x1920xf32, #tpu.memory_space<vmem>>, vector<1x8x384xf32>
    %199 = vector.shape_cast %198 : vector<1x8x384xf32> to vector<8x384xf32>
    %c184_259 = arith.constant 184 : index
    %c384_260 = arith.constant 384 : index
    %200 = vector.load %arg11[%c184_259, %c384_260] : memref<360x768xf32, #tpu.memory_space<vmem>>, vector<8x384xf32>
    tpu.vector_store %arg11[%c184_259, %c384_260], %199 {strides = array<i32>} : memref<360x768xf32, #tpu.memory_space<vmem>>, vector<8x384xf32>,
    %c0_261 = arith.constant 0 : index
    %c0_262 = arith.constant 0 : index
    %c924 = arith.constant 924 : index
    %201 = vector.load %arg9[%c0_261, %c0_262, %c924] : memref<2x8x1920xf32, #tpu.memory_space<vmem>>, vector<1x8x384xf32>
    %202 = vector.shape_cast %201 : vector<1x8x384xf32> to vector<8x384xf32>
    %c192 = arith.constant 192 : index
    %c0_263 = arith.constant 0 : index
    %203 = vector.load %arg11[%c192, %c0_263] : memref<360x768xf32, #tpu.memory_space<vmem>>, vector<8x384xf32>
    tpu.vector_store %arg11[%c192, %c0_263], %202 {strides = array<i32>} : memref<360x768xf32, #tpu.memory_space<vmem>>, vector<8x384xf32>,
    %c1_264 = arith.constant 1 : index
    %c0_265 = arith.constant 0 : index
    %c924_266 = arith.constant 924 : index
    %204 = vector.load %arg9[%c1_264, %c0_265, %c924_266] : memref<2x8x1920xf32, #tpu.memory_space<vmem>>, vector<1x8x384xf32>
    %205 = vector.shape_cast %204 : vector<1x8x384xf32> to vector<8x384xf32>
    %c192_267 = arith.constant 192 : index
    %c384_268 = arith.constant 384 : index
    %206 = vector.load %arg11[%c192_267, %c384_268] : memref<360x768xf32, #tpu.memory_space<vmem>>, vector<8x384xf32>
    tpu.vector_store %arg11[%c192_267, %c384_268], %205 {strides = array<i32>} : memref<360x768xf32, #tpu.memory_space<vmem>>, vector<8x384xf32>,
    %c0_269 = arith.constant 0 : index
    %c0_270 = arith.constant 0 : index
    %c928 = arith.constant 928 : index
    %207 = vector.load %arg9[%c0_269, %c0_270, %c928] : memref<2x8x1920xf32, #tpu.memory_space<vmem>>, vector<1x8x384xf32>
    %208 = vector.shape_cast %207 : vector<1x8x384xf32> to vector<8x384xf32>
    %c200 = arith.constant 200 : index
    %c0_271 = arith.constant 0 : index
    %209 = vector.load %arg11[%c200, %c0_271] : memref<360x768xf32, #tpu.memory_space<vmem>>, vector<8x384xf32>
    tpu.vector_store %arg11[%c200, %c0_271], %208 {strides = array<i32>} : memref<360x768xf32, #tpu.memory_space<vmem>>, vector<8x384xf32>,
    %c1_272 = arith.constant 1 : index
    %c0_273 = arith.constant 0 : index
    %c928_274 = arith.constant 928 : index
    %210 = vector.load %arg9[%c1_272, %c0_273, %c928_274] : memref<2x8x1920xf32, #tpu.memory_space<vmem>>, vector<1x8x384xf32>
    %211 = vector.shape_cast %210 : vector<1x8x384xf32> to vector<8x384xf32>
    %c200_275 = arith.constant 200 : index
    %c384_276 = arith.constant 384 : index
    %212 = vector.load %arg11[%c200_275, %c384_276] : memref<360x768xf32, #tpu.memory_space<vmem>>, vector<8x384xf32>
    tpu.vector_store %arg11[%c200_275, %c384_276], %211 {strides = array<i32>} : memref<360x768xf32, #tpu.memory_space<vmem>>, vector<8x384xf32>,
    %c0_277 = arith.constant 0 : index
    %c0_278 = arith.constant 0 : index
    %c932 = arith.constant 932 : index
    %213 = vector.load %arg9[%c0_277, %c0_278, %c932] : memref<2x8x1920xf32, #tpu.memory_space<vmem>>, vector<1x8x384xf32>
    %214 = vector.shape_cast %213 : vector<1x8x384xf32> to vector<8x384xf32>
    %c208 = arith.constant 208 : index
    %c0_279 = arith.constant 0 : index
    %215 = vector.load %arg11[%c208, %c0_279] : memref<360x768xf32, #tpu.memory_space<vmem>>, vector<8x384xf32>
    tpu.vector_store %arg11[%c208, %c0_279], %214 {strides = array<i32>} : memref<360x768xf32, #tpu.memory_space<vmem>>, vector<8x384xf32>,
    %c1_280 = arith.constant 1 : index
    %c0_281 = arith.constant 0 : index
    %c932_282 = arith.constant 932 : index
    %216 = vector.load %arg9[%c1_280, %c0_281, %c932_282] : memref<2x8x1920xf32, #tpu.memory_space<vmem>>, vector<1x8x384xf32>
    %217 = vector.shape_cast %216 : vector<1x8x384xf32> to vector<8x384xf32>
    %c208_283 = arith.constant 208 : index
    %c384_284 = arith.constant 384 : index
    %218 = vector.load %arg11[%c208_283, %c384_284] : memref<360x768xf32, #tpu.memory_space<vmem>>, vector<8x384xf32>
    tpu.vector_store %arg11[%c208_283, %c384_284], %217 {strides = array<i32>} : memref<360x768xf32, #tpu.memory_space<vmem>>, vector<8x384xf32>,
    %c0_285 = arith.constant 0 : index
    %c0_286 = arith.constant 0 : index
    %c440 = arith.constant 440 : index
    %219 = vector.load %arg9[%c0_285, %c0_286, %c440] : memref<2x8x1920xf32, #tpu.memory_space<vmem>>, vector<1x8x384xf32>
    %220 = vector.shape_cast %219 : vector<1x8x384xf32> to vector<8x384xf32>
    %c216 = arith.constant 216 : index
    %c0_287 = arith.constant 0 : index
    %221 = vector.load %arg11[%c216, %c0_287] : memref<360x768xf32, #tpu.memory_space<vmem>>, vector<8x384xf32>
    tpu.vector_store %arg11[%c216, %c0_287], %220 {strides = array<i32>} : memref<360x768xf32, #tpu.memory_space<vmem>>, vector<8x384xf32>,
    %c1_288 = arith.constant 1 : index
    %c0_289 = arith.constant 0 : index
    %c440_290 = arith.constant 440 : index
    %222 = vector.load %arg9[%c1_288, %c0_289, %c440_290] : memref<2x8x1920xf32, #tpu.memory_space<vmem>>, vector<1x8x384xf32>
    %223 = vector.shape_cast %222 : vector<1x8x384xf32> to vector<8x384xf32>
    %c216_291 = arith.constant 216 : index
    %c384_292 = arith.constant 384 : index
    %224 = vector.load %arg11[%c216_291, %c384_292] : memref<360x768xf32, #tpu.memory_space<vmem>>, vector<8x384xf32>
    tpu.vector_store %arg11[%c216_291, %c384_292], %223 {strides = array<i32>} : memref<360x768xf32, #tpu.memory_space<vmem>>, vector<8x384xf32>,
    %c0_293 = arith.constant 0 : index
    %c0_294 = arith.constant 0 : index
    %c448 = arith.constant 448 : index
    %225 = vector.load %arg9[%c0_293, %c0_294, %c448] : memref<2x8x1920xf32, #tpu.memory_space<vmem>>, vector<1x8x384xf32>
    %226 = vector.shape_cast %225 : vector<1x8x384xf32> to vector<8x384xf32>
    %c224 = arith.constant 224 : index
    %c0_295 = arith.constant 0 : index
    %227 = vector.load %arg11[%c224, %c0_295] : memref<360x768xf32, #tpu.memory_space<vmem>>, vector<8x384xf32>
    tpu.vector_store %arg11[%c224, %c0_295], %226 {strides = array<i32>} : memref<360x768xf32, #tpu.memory_space<vmem>>, vector<8x384xf32>,
    %c1_296 = arith.constant 1 : index
    %c0_297 = arith.constant 0 : index
    %c448_298 = arith.constant 448 : index
    %228 = vector.load %arg9[%c1_296, %c0_297, %c448_298] : memref<2x8x1920xf32, #tpu.memory_space<vmem>>, vector<1x8x384xf32>
    %229 = vector.shape_cast %228 : vector<1x8x384xf32> to vector<8x384xf32>
    %c224_299 = arith.constant 224 : index
    %c384_300 = arith.constant 384 : index
    %230 = vector.load %arg11[%c224_299, %c384_300] : memref<360x768xf32, #tpu.memory_space<vmem>>, vector<8x384xf32>
    tpu.vector_store %arg11[%c224_299, %c384_300], %229 {strides = array<i32>} : memref<360x768xf32, #tpu.memory_space<vmem>>, vector<8x384xf32>,
    %c0_301 = arith.constant 0 : index
    %c0_302 = arith.constant 0 : index
    %c456 = arith.constant 456 : index
    %231 = vector.load %arg9[%c0_301, %c0_302, %c456] : memref<2x8x1920xf32, #tpu.memory_space<vmem>>, vector<1x8x384xf32>
    %232 = vector.shape_cast %231 : vector<1x8x384xf32> to vector<8x384xf32>
    %c232 = arith.constant 232 : index
    %c0_303 = arith.constant 0 : index
    %233 = vector.load %arg11[%c232, %c0_303] : memref<360x768xf32, #tpu.memory_space<vmem>>, vector<8x384xf32>
    tpu.vector_store %arg11[%c232, %c0_303], %232 {strides = array<i32>} : memref<360x768xf32, #tpu.memory_space<vmem>>, vector<8x384xf32>,
    %c1_304 = arith.constant 1 : index
    %c0_305 = arith.constant 0 : index
    %c456_306 = arith.constant 456 : index
    %234 = vector.load %arg9[%c1_304, %c0_305, %c456_306] : memref<2x8x1920xf32, #tpu.memory_space<vmem>>, vector<1x8x384xf32>
    %235 = vector.shape_cast %234 : vector<1x8x384xf32> to vector<8x384xf32>
    %c232_307 = arith.constant 232 : index
    %c384_308 = arith.constant 384 : index
    %236 = vector.load %arg11[%c232_307, %c384_308] : memref<360x768xf32, #tpu.memory_space<vmem>>, vector<8x384xf32>
    tpu.vector_store %arg11[%c232_307, %c384_308], %235 {strides = array<i32>} : memref<360x768xf32, #tpu.memory_space<vmem>>, vector<8x384xf32>,
    %c0_309 = arith.constant 0 : index
    %c0_310 = arith.constant 0 : index
    %c760 = arith.constant 760 : index
    %237 = vector.load %arg9[%c0_309, %c0_310, %c760] : memref<2x8x1920xf32, #tpu.memory_space<vmem>>, vector<1x8x384xf32>
    %238 = vector.shape_cast %237 : vector<1x8x384xf32> to vector<8x384xf32>
    %c240 = arith.constant 240 : index
    %c0_311 = arith.constant 0 : index
    %239 = vector.load %arg11[%c240, %c0_311] : memref<360x768xf32, #tpu.memory_space<vmem>>, vector<8x384xf32>
    tpu.vector_store %arg11[%c240, %c0_311], %238 {strides = array<i32>} : memref<360x768xf32, #tpu.memory_space<vmem>>, vector<8x384xf32>,
    %c1_312 = arith.constant 1 : index
    %c0_313 = arith.constant 0 : index
    %c760_314 = arith.constant 760 : index
    %240 = vector.load %arg9[%c1_312, %c0_313, %c760_314] : memref<2x8x1920xf32, #tpu.memory_space<vmem>>, vector<1x8x384xf32>
    %241 = vector.shape_cast %240 : vector<1x8x384xf32> to vector<8x384xf32>
    %c240_315 = arith.constant 240 : index
    %c384_316 = arith.constant 384 : index
    %242 = vector.load %arg11[%c240_315, %c384_316] : memref<360x768xf32, #tpu.memory_space<vmem>>, vector<8x384xf32>
    tpu.vector_store %arg11[%c240_315, %c384_316], %241 {strides = array<i32>} : memref<360x768xf32, #tpu.memory_space<vmem>>, vector<8x384xf32>,
    %c0_317 = arith.constant 0 : index
    %c0_318 = arith.constant 0 : index
    %c768_319 = arith.constant 768 : index
    %243 = vector.load %arg9[%c0_317, %c0_318, %c768_319] : memref<2x8x1920xf32, #tpu.memory_space<vmem>>, vector<1x8x384xf32>
    %244 = vector.shape_cast %243 : vector<1x8x384xf32> to vector<8x384xf32>
    %c248 = arith.constant 248 : index
    %c0_320 = arith.constant 0 : index
    %245 = vector.load %arg11[%c248, %c0_320] : memref<360x768xf32, #tpu.memory_space<vmem>>, vector<8x384xf32>
    tpu.vector_store %arg11[%c248, %c0_320], %244 {strides = array<i32>} : memref<360x768xf32, #tpu.memory_space<vmem>>, vector<8x384xf32>,
    %c1_321 = arith.constant 1 : index
    %c0_322 = arith.constant 0 : index
    %c768_323 = arith.constant 768 : index
    %246 = vector.load %arg9[%c1_321, %c0_322, %c768_323] : memref<2x8x1920xf32, #tpu.memory_space<vmem>>, vector<1x8x384xf32>
    %247 = vector.shape_cast %246 : vector<1x8x384xf32> to vector<8x384xf32>
    %c248_324 = arith.constant 248 : index
    %c384_325 = arith.constant 384 : index
    %248 = vector.load %arg11[%c248_324, %c384_325] : memref<360x768xf32, #tpu.memory_space<vmem>>, vector<8x384xf32>
    tpu.vector_store %arg11[%c248_324, %c384_325], %247 {strides = array<i32>} : memref<360x768xf32, #tpu.memory_space<vmem>>, vector<8x384xf32>,
    %c0_326 = arith.constant 0 : index
    %c0_327 = arith.constant 0 : index
    %c776 = arith.constant 776 : index
    %249 = vector.load %arg9[%c0_326, %c0_327, %c776] : memref<2x8x1920xf32, #tpu.memory_space<vmem>>, vector<1x8x384xf32>
    %250 = vector.shape_cast %249 : vector<1x8x384xf32> to vector<8x384xf32>
    %c256 = arith.constant 256 : index
    %c0_328 = arith.constant 0 : index
    %251 = vector.load %arg11[%c256, %c0_328] : memref<360x768xf32, #tpu.memory_space<vmem>>, vector<8x384xf32>
    tpu.vector_store %arg11[%c256, %c0_328], %250 {strides = array<i32>} : memref<360x768xf32, #tpu.memory_space<vmem>>, vector<8x384xf32>,
    %c1_329 = arith.constant 1 : index
    %c0_330 = arith.constant 0 : index
    %c776_331 = arith.constant 776 : index
    %252 = vector.load %arg9[%c1_329, %c0_330, %c776_331] : memref<2x8x1920xf32, #tpu.memory_space<vmem>>, vector<1x8x384xf32>
    %253 = vector.shape_cast %252 : vector<1x8x384xf32> to vector<8x384xf32>
    %c256_332 = arith.constant 256 : index
    %c384_333 = arith.constant 384 : index
    %254 = vector.load %arg11[%c256_332, %c384_333] : memref<360x768xf32, #tpu.memory_space<vmem>>, vector<8x384xf32>
    tpu.vector_store %arg11[%c256_332, %c384_333], %253 {strides = array<i32>} : memref<360x768xf32, #tpu.memory_space<vmem>>, vector<8x384xf32>,
    %c0_334 = arith.constant 0 : index
    %c0_335 = arith.constant 0 : index
    %c1080 = arith.constant 1080 : index
    %255 = vector.load %arg9[%c0_334, %c0_335, %c1080] : memref<2x8x1920xf32, #tpu.memory_space<vmem>>, vector<1x8x384xf32>
    %256 = vector.shape_cast %255 : vector<1x8x384xf32> to vector<8x384xf32>
    %c264 = arith.constant 264 : index
    %c0_336 = arith.constant 0 : index
    %257 = vector.load %arg11[%c264, %c0_336] : memref<360x768xf32, #tpu.memory_space<vmem>>, vector<8x384xf32>
    tpu.vector_store %arg11[%c264, %c0_336], %256 {strides = array<i32>} : memref<360x768xf32, #tpu.memory_space<vmem>>, vector<8x384xf32>,
    %c1_337 = arith.constant 1 : index
    %c0_338 = arith.constant 0 : index
    %c1080_339 = arith.constant 1080 : index
    %258 = vector.load %arg9[%c1_337, %c0_338, %c1080_339] : memref<2x8x1920xf32, #tpu.memory_space<vmem>>, vector<1x8x384xf32>
    %259 = vector.shape_cast %258 : vector<1x8x384xf32> to vector<8x384xf32>
    %c264_340 = arith.constant 264 : index
    %c384_341 = arith.constant 384 : index
    %260 = vector.load %arg11[%c264_340, %c384_341] : memref<360x768xf32, #tpu.memory_space<vmem>>, vector<8x384xf32>
    tpu.vector_store %arg11[%c264_340, %c384_341], %259 {strides = array<i32>} : memref<360x768xf32, #tpu.memory_space<vmem>>, vector<8x384xf32>,
    %c0_342 = arith.constant 0 : index
    %c0_343 = arith.constant 0 : index
    %c1088 = arith.constant 1088 : index
    %261 = vector.load %arg9[%c0_342, %c0_343, %c1088] : memref<2x8x1920xf32, #tpu.memory_space<vmem>>, vector<1x8x384xf32>
    %262 = vector.shape_cast %261 : vector<1x8x384xf32> to vector<8x384xf32>
    %c272 = arith.constant 272 : index
    %c0_344 = arith.constant 0 : index
    %263 = vector.load %arg11[%c272, %c0_344] : memref<360x768xf32, #tpu.memory_space<vmem>>, vector<8x384xf32>
    tpu.vector_store %arg11[%c272, %c0_344], %262 {strides = array<i32>} : memref<360x768xf32, #tpu.memory_space<vmem>>, vector<8x384xf32>,
    %c1_345 = arith.constant 1 : index
    %c0_346 = arith.constant 0 : index
    %c1088_347 = arith.constant 1088 : index
    %264 = vector.load %arg9[%c1_345, %c0_346, %c1088_347] : memref<2x8x1920xf32, #tpu.memory_space<vmem>>, vector<1x8x384xf32>
    %265 = vector.shape_cast %264 : vector<1x8x384xf32> to vector<8x384xf32>
    %c272_348 = arith.constant 272 : index
    %c384_349 = arith.constant 384 : index
    %266 = vector.load %arg11[%c272_348, %c384_349] : memref<360x768xf32, #tpu.memory_space<vmem>>, vector<8x384xf32>
    tpu.vector_store %arg11[%c272_348, %c384_349], %265 {strides = array<i32>} : memref<360x768xf32, #tpu.memory_space<vmem>>, vector<8x384xf32>,
    %c0_350 = arith.constant 0 : index
    %c0_351 = arith.constant 0 : index
    %c1096 = arith.constant 1096 : index
    %267 = vector.load %arg9[%c0_350, %c0_351, %c1096] : memref<2x8x1920xf32, #tpu.memory_space<vmem>>, vector<1x8x384xf32>
    %268 = vector.shape_cast %267 : vector<1x8x384xf32> to vector<8x384xf32>
    %c280 = arith.constant 280 : index
    %c0_352 = arith.constant 0 : index
    %269 = vector.load %arg11[%c280, %c0_352] : memref<360x768xf32, #tpu.memory_space<vmem>>, vector<8x384xf32>
    tpu.vector_store %arg11[%c280, %c0_352], %268 {strides = array<i32>} : memref<360x768xf32, #tpu.memory_space<vmem>>, vector<8x384xf32>,
    %c1_353 = arith.constant 1 : index
    %c0_354 = arith.constant 0 : index
    %c1096_355 = arith.constant 1096 : index
    %270 = vector.load %arg9[%c1_353, %c0_354, %c1096_355] : memref<2x8x1920xf32, #tpu.memory_space<vmem>>, vector<1x8x384xf32>
    %271 = vector.shape_cast %270 : vector<1x8x384xf32> to vector<8x384xf32>
    %c280_356 = arith.constant 280 : index
    %c384_357 = arith.constant 384 : index
    %272 = vector.load %arg11[%c280_356, %c384_357] : memref<360x768xf32, #tpu.memory_space<vmem>>, vector<8x384xf32>
    tpu.vector_store %arg11[%c280_356, %c384_357], %271 {strides = array<i32>} : memref<360x768xf32, #tpu.memory_space<vmem>>, vector<8x384xf32>,
    %c0_358 = arith.constant 0 : index
    %c0_359 = arith.constant 0 : index
    %c112_360 = arith.constant 112 : index
    %273 = vector.load %arg9[%c0_358, %c0_359, %c112_360] : memref<2x8x1920xf32, #tpu.memory_space<vmem>>, vector<1x8x384xf32>
    %274 = vector.shape_cast %273 : vector<1x8x384xf32> to vector<8x384xf32>
    %c288 = arith.constant 288 : index
    %c0_361 = arith.constant 0 : index
    %275 = vector.load %arg11[%c288, %c0_361] : memref<360x768xf32, #tpu.memory_space<vmem>>, vector<8x384xf32>
    tpu.vector_store %arg11[%c288, %c0_361], %274 {strides = array<i32>} : memref<360x768xf32, #tpu.memory_space<vmem>>, vector<8x384xf32>,
    %c1_362 = arith.constant 1 : index
    %c0_363 = arith.constant 0 : index
    %c112_364 = arith.constant 112 : index
    %276 = vector.load %arg9[%c1_362, %c0_363, %c112_364] : memref<2x8x1920xf32, #tpu.memory_space<vmem>>, vector<1x8x384xf32>
    %277 = vector.shape_cast %276 : vector<1x8x384xf32> to vector<8x384xf32>
    %c288_365 = arith.constant 288 : index
    %c384_366 = arith.constant 384 : index
    %278 = vector.load %arg11[%c288_365, %c384_366] : memref<360x768xf32, #tpu.memory_space<vmem>>, vector<8x384xf32>
    tpu.vector_store %arg11[%c288_365, %c384_366], %277 {strides = array<i32>} : memref<360x768xf32, #tpu.memory_space<vmem>>, vector<8x384xf32>,
    %c0_367 = arith.constant 0 : index
    %c0_368 = arith.constant 0 : index
    %c128_369 = arith.constant 128 : index
    %279 = vector.load %arg9[%c0_367, %c0_368, %c128_369] : memref<2x8x1920xf32, #tpu.memory_space<vmem>>, vector<1x8x384xf32>
    %280 = vector.shape_cast %279 : vector<1x8x384xf32> to vector<8x384xf32>
    %c296 = arith.constant 296 : index
    %c0_370 = arith.constant 0 : index
    %281 = vector.load %arg11[%c296, %c0_370] : memref<360x768xf32, #tpu.memory_space<vmem>>, vector<8x384xf32>
    tpu.vector_store %arg11[%c296, %c0_370], %280 {strides = array<i32>} : memref<360x768xf32, #tpu.memory_space<vmem>>, vector<8x384xf32>,
    %c1_371 = arith.constant 1 : index
    %c0_372 = arith.constant 0 : index
    %c128_373 = arith.constant 128 : index
    %282 = vector.load %arg9[%c1_371, %c0_372, %c128_373] : memref<2x8x1920xf32, #tpu.memory_space<vmem>>, vector<1x8x384xf32>
    %283 = vector.shape_cast %282 : vector<1x8x384xf32> to vector<8x384xf32>
    %c296_374 = arith.constant 296 : index
    %c384_375 = arith.constant 384 : index
    %284 = vector.load %arg11[%c296_374, %c384_375] : memref<360x768xf32, #tpu.memory_space<vmem>>, vector<8x384xf32>
    tpu.vector_store %arg11[%c296_374, %c384_375], %283 {strides = array<i32>} : memref<360x768xf32, #tpu.memory_space<vmem>>, vector<8x384xf32>,
    %c0_376 = arith.constant 0 : index
    %c0_377 = arith.constant 0 : index
    %c144_378 = arith.constant 144 : index
    %285 = vector.load %arg9[%c0_376, %c0_377, %c144_378] : memref<2x8x1920xf32, #tpu.memory_space<vmem>>, vector<1x8x384xf32>
    %286 = vector.shape_cast %285 : vector<1x8x384xf32> to vector<8x384xf32>
    %c304 = arith.constant 304 : index
    %c0_379 = arith.constant 0 : index
    %287 = vector.load %arg11[%c304, %c0_379] : memref<360x768xf32, #tpu.memory_space<vmem>>, vector<8x384xf32>
    tpu.vector_store %arg11[%c304, %c0_379], %286 {strides = array<i32>} : memref<360x768xf32, #tpu.memory_space<vmem>>, vector<8x384xf32>,
    %c1_380 = arith.constant 1 : index
    %c0_381 = arith.constant 0 : index
    %c144_382 = arith.constant 144 : index
    %288 = vector.load %arg9[%c1_380, %c0_381, %c144_382] : memref<2x8x1920xf32, #tpu.memory_space<vmem>>, vector<1x8x384xf32>
    %289 = vector.shape_cast %288 : vector<1x8x384xf32> to vector<8x384xf32>
    %c304_383 = arith.constant 304 : index
    %c384_384 = arith.constant 384 : index
    %290 = vector.load %arg11[%c304_383, %c384_384] : memref<360x768xf32, #tpu.memory_space<vmem>>, vector<8x384xf32>
    tpu.vector_store %arg11[%c304_383, %c384_384], %289 {strides = array<i32>} : memref<360x768xf32, #tpu.memory_space<vmem>>, vector<8x384xf32>,
    %c0_385 = arith.constant 0 : index
    %c0_386 = arith.constant 0 : index
    %c752 = arith.constant 752 : index
    %291 = vector.load %arg9[%c0_385, %c0_386, %c752] : memref<2x8x1920xf32, #tpu.memory_space<vmem>>, vector<1x8x384xf32>
    %292 = vector.shape_cast %291 : vector<1x8x384xf32> to vector<8x384xf32>
    %c312 = arith.constant 312 : index
    %c0_387 = arith.constant 0 : index
    %293 = vector.load %arg11[%c312, %c0_387] : memref<360x768xf32, #tpu.memory_space<vmem>>, vector<8x384xf32>
    tpu.vector_store %arg11[%c312, %c0_387], %292 {strides = array<i32>} : memref<360x768xf32, #tpu.memory_space<vmem>>, vector<8x384xf32>,
    %c1_388 = arith.constant 1 : index
    %c0_389 = arith.constant 0 : index
    %c752_390 = arith.constant 752 : index
    %294 = vector.load %arg9[%c1_388, %c0_389, %c752_390] : memref<2x8x1920xf32, #tpu.memory_space<vmem>>, vector<1x8x384xf32>
    %295 = vector.shape_cast %294 : vector<1x8x384xf32> to vector<8x384xf32>
    %c312_391 = arith.constant 312 : index
    %c384_392 = arith.constant 384 : index
    %296 = vector.load %arg11[%c312_391, %c384_392] : memref<360x768xf32, #tpu.memory_space<vmem>>, vector<8x384xf32>
    tpu.vector_store %arg11[%c312_391, %c384_392], %295 {strides = array<i32>} : memref<360x768xf32, #tpu.memory_space<vmem>>, vector<8x384xf32>,
    %c0_393 = arith.constant 0 : index
    %c0_394 = arith.constant 0 : index
    %c768_395 = arith.constant 768 : index
    %297 = vector.load %arg9[%c0_393, %c0_394, %c768_395] : memref<2x8x1920xf32, #tpu.memory_space<vmem>>, vector<1x8x384xf32>
    %298 = vector.shape_cast %297 : vector<1x8x384xf32> to vector<8x384xf32>
    %c320 = arith.constant 320 : index
    %c0_396 = arith.constant 0 : index
    %299 = vector.load %arg11[%c320, %c0_396] : memref<360x768xf32, #tpu.memory_space<vmem>>, vector<8x384xf32>
    tpu.vector_store %arg11[%c320, %c0_396], %298 {strides = array<i32>} : memref<360x768xf32, #tpu.memory_space<vmem>>, vector<8x384xf32>,
    %c1_397 = arith.constant 1 : index
    %c0_398 = arith.constant 0 : index
    %c768_399 = arith.constant 768 : index
    %300 = vector.load %arg9[%c1_397, %c0_398, %c768_399] : memref<2x8x1920xf32, #tpu.memory_space<vmem>>, vector<1x8x384xf32>
    %301 = vector.shape_cast %300 : vector<1x8x384xf32> to vector<8x384xf32>
    %c320_400 = arith.constant 320 : index
    %c384_401 = arith.constant 384 : index
    %302 = vector.load %arg11[%c320_400, %c384_401] : memref<360x768xf32, #tpu.memory_space<vmem>>, vector<8x384xf32>
    tpu.vector_store %arg11[%c320_400, %c384_401], %301 {strides = array<i32>} : memref<360x768xf32, #tpu.memory_space<vmem>>, vector<8x384xf32>,
    %c0_402 = arith.constant 0 : index
    %c0_403 = arith.constant 0 : index
    %c784 = arith.constant 784 : index
    %303 = vector.load %arg9[%c0_402, %c0_403, %c784] : memref<2x8x1920xf32, #tpu.memory_space<vmem>>, vector<1x8x384xf32>
    %304 = vector.shape_cast %303 : vector<1x8x384xf32> to vector<8x384xf32>
    %c328 = arith.constant 328 : index
    %c0_404 = arith.constant 0 : index
    %305 = vector.load %arg11[%c328, %c0_404] : memref<360x768xf32, #tpu.memory_space<vmem>>, vector<8x384xf32>
    tpu.vector_store %arg11[%c328, %c0_404], %304 {strides = array<i32>} : memref<360x768xf32, #tpu.memory_space<vmem>>, vector<8x384xf32>,
    %c1_405 = arith.constant 1 : index
    %c0_406 = arith.constant 0 : index
    %c784_407 = arith.constant 784 : index
    %306 = vector.load %arg9[%c1_405, %c0_406, %c784_407] : memref<2x8x1920xf32, #tpu.memory_space<vmem>>, vector<1x8x384xf32>
    %307 = vector.shape_cast %306 : vector<1x8x384xf32> to vector<8x384xf32>
    %c328_408 = arith.constant 328 : index
    %c384_409 = arith.constant 384 : index
    %308 = vector.load %arg11[%c328_408, %c384_409] : memref<360x768xf32, #tpu.memory_space<vmem>>, vector<8x384xf32>
    tpu.vector_store %arg11[%c328_408, %c384_409], %307 {strides = array<i32>} : memref<360x768xf32, #tpu.memory_space<vmem>>, vector<8x384xf32>,
    %c0_410 = arith.constant 0 : index
    %c0_411 = arith.constant 0 : index
    %c1392 = arith.constant 1392 : index
    %309 = vector.load %arg9[%c0_410, %c0_411, %c1392] : memref<2x8x1920xf32, #tpu.memory_space<vmem>>, vector<1x8x384xf32>
    %310 = vector.shape_cast %309 : vector<1x8x384xf32> to vector<8x384xf32>
    %c336 = arith.constant 336 : index
    %c0_412 = arith.constant 0 : index
    %311 = vector.load %arg11[%c336, %c0_412] : memref<360x768xf32, #tpu.memory_space<vmem>>, vector<8x384xf32>
    tpu.vector_store %arg11[%c336, %c0_412], %310 {strides = array<i32>} : memref<360x768xf32, #tpu.memory_space<vmem>>, vector<8x384xf32>,
    %c1_413 = arith.constant 1 : index
    %c0_414 = arith.constant 0 : index
    %c1392_415 = arith.constant 1392 : index
    %312 = vector.load %arg9[%c1_413, %c0_414, %c1392_415] : memref<2x8x1920xf32, #tpu.memory_space<vmem>>, vector<1x8x384xf32>
    %313 = vector.shape_cast %312 : vector<1x8x384xf32> to vector<8x384xf32>
    %c336_416 = arith.constant 336 : index
    %c384_417 = arith.constant 384 : index
    %314 = vector.load %arg11[%c336_416, %c384_417] : memref<360x768xf32, #tpu.memory_space<vmem>>, vector<8x384xf32>
    tpu.vector_store %arg11[%c336_416, %c384_417], %313 {strides = array<i32>} : memref<360x768xf32, #tpu.memory_space<vmem>>, vector<8x384xf32>,
    %c0_418 = arith.constant 0 : index
    %c0_419 = arith.constant 0 : index
    %c1408 = arith.constant 1408 : index
    %315 = vector.load %arg9[%c0_418, %c0_419, %c1408] : memref<2x8x1920xf32, #tpu.memory_space<vmem>>, vector<1x8x384xf32>
    %316 = vector.shape_cast %315 : vector<1x8x384xf32> to vector<8x384xf32>
    %c344 = arith.constant 344 : index
    %c0_420 = arith.constant 0 : index
    %317 = vector.load %arg11[%c344, %c0_420] : memref<360x768xf32, #tpu.memory_space<vmem>>, vector<8x384xf32>
    tpu.vector_store %arg11[%c344, %c0_420], %316 {strides = array<i32>} : memref<360x768xf32, #tpu.memory_space<vmem>>, vector<8x384xf32>,
    %c1_421 = arith.constant 1 : index
    %c0_422 = arith.constant 0 : index
    %c1408_423 = arith.constant 1408 : index
    %318 = vector.load %arg9[%c1_421, %c0_422, %c1408_423] : memref<2x8x1920xf32, #tpu.memory_space<vmem>>, vector<1x8x384xf32>
    %319 = vector.shape_cast %318 : vector<1x8x384xf32> to vector<8x384xf32>
    %c344_424 = arith.constant 344 : index
    %c384_425 = arith.constant 384 : index
    %320 = vector.load %arg11[%c344_424, %c384_425] : memref<360x768xf32, #tpu.memory_space<vmem>>, vector<8x384xf32>
    tpu.vector_store %arg11[%c344_424, %c384_425], %319 {strides = array<i32>} : memref<360x768xf32, #tpu.memory_space<vmem>>, vector<8x384xf32>,
    %c0_426 = arith.constant 0 : index
    %c0_427 = arith.constant 0 : index
    %c1424 = arith.constant 1424 : index
    %321 = vector.load %arg9[%c0_426, %c0_427, %c1424] : memref<2x8x1920xf32, #tpu.memory_space<vmem>>, vector<1x8x384xf32>
    %322 = vector.shape_cast %321 : vector<1x8x384xf32> to vector<8x384xf32>
    %c352 = arith.constant 352 : index
    %c0_428 = arith.constant 0 : index
    %323 = vector.load %arg11[%c352, %c0_428] : memref<360x768xf32, #tpu.memory_space<vmem>>, vector<8x384xf32>
    tpu.vector_store %arg11[%c352, %c0_428], %322 {strides = array<i32>} : memref<360x768xf32, #tpu.memory_space<vmem>>, vector<8x384xf32>,
    %c1_429 = arith.constant 1 : index
    %c0_430 = arith.constant 0 : index
    %c1424_431 = arith.constant 1424 : index
    %324 = vector.load %arg9[%c1_429, %c0_430, %c1424_431] : memref<2x8x1920xf32, #tpu.memory_space<vmem>>, vector<1x8x384xf32>
    %325 = vector.shape_cast %324 : vector<1x8x384xf32> to vector<8x384xf32>
    %c352_432 = arith.constant 352 : index
    %c384_433 = arith.constant 384 : index
    %326 = vector.load %arg11[%c352_432, %c384_433] : memref<360x768xf32, #tpu.memory_space<vmem>>, vector<8x384xf32>
    tpu.vector_store %arg11[%c352_432, %c384_433], %325 {strides = array<i32>} : memref<360x768xf32, #tpu.memory_space<vmem>>, vector<8x384xf32>,
    %c0_434 = arith.constant 0 : index
    %c0_435 = arith.constant 0 : index
    %327 = vector.load %arg2[%c0_434, %c0_435] : memref<24x360xf32, #tpu.memory_space<vmem>>, vector<24x360xf32>
    %c0_436 = arith.constant 0 : index
    %c0_437 = arith.constant 0 : index
    %328 = vector.load %arg11[%c0_436, %c0_437] : memref<360x768xf32, #tpu.memory_space<vmem>>, vector<360x768xf32>
    %cst_438 = arith.constant dense<0.000000e+00> : vector<24x768xf32>
    %329 = tpu.matmul %327, %328, %cst_438 {dimension_numbers = #tpu.dot_dimension_numbers<[1], [0], [0], [1], [0, 0, 1, 1], [], []>} : vector<24x360xf32>, vector<360x768xf32>, vector<24x768xf32> -> vector<24x768xf32>
    %c0_439 = arith.constant 0 : index
    %c0_440 = arith.constant 0 : index
    %330 = vector.load %arg7[%c0_439, %c0_440] : memref<1x768xf32, #tpu.memory_space<vmem>>, vector<1x768xf32>
    %331 = vector.broadcast %330 : vector<1x768xf32> to vector<24x768xf32>
    %332 = arith.mulf %329, %331 : vector<24x768xf32>
    %cst_441 = arith.constant dense<0.000000e+00> : vector<24xf32>
    %333 = vector.multi_reduction <add>, %332, %cst_441 [1] : vector<24x768xf32> to vector<24xf32>
    %334 = vector.shape_cast %333 : vector<24xf32> to vector<24x1xf32>
    %cst_442 = arith.constant 7.812500e-03 : f32
    %335 = vector.broadcast %cst_442 : f32 to vector<24x1xf32>
    %336 = arith.mulf %334, %335 : vector<24x1xf32>
    %337 = arith.mulf %332, %329 : vector<24x768xf32>
    %cst_443 = arith.constant dense<0.000000e+00> : vector<24xf32>
    %338 = vector.multi_reduction <add>, %337, %cst_443 [1] : vector<24x768xf32> to vector<24xf32>
    %339 = vector.shape_cast %338 : vector<24xf32> to vector<24x1xf32>
    %cst_444 = arith.constant 7.812500e-03 : f32
    %340 = vector.broadcast %cst_444 : f32 to vector<24x1xf32>
    %341 = arith.mulf %339, %340 : vector<24x1xf32>
    %342 = arith.mulf %336, %336 : vector<24x1xf32>
    %343 = arith.subf %341, %342 : vector<24x1xf32>
    %c0_445 = arith.constant 0 : index
    %c0_446 = arith.constant 0 : index
    %344 = vector.load %arg3[%c0_445, %c0_446] : memref<24x1xf32, #tpu.memory_space<vmem>>, vector<24x1xf32>
    %cst_447 = arith.constant 1.000000e-03 : f32
    %345 = vector.broadcast %cst_447 : f32 to vector<24x1xf32>
    %346 = arith.addf %343, %345 : vector<24x1xf32>
    %347 = math.rsqrt %346 : vector<24x1xf32>
    %348 = arith.mulf %344, %347 : vector<24x1xf32>
    %c0_448 = arith.constant 0 : index
    %c0_449 = arith.constant 0 : index
    %349 = vector.load %arg4[%c0_448, %c0_449] : memref<24x1xf32, #tpu.memory_space<vmem>>, vector<24x1xf32>
    %350 = arith.mulf %336, %348 : vector<24x1xf32>
    %351 = arith.subf %349, %350 : vector<24x1xf32>
    %352 = vector.broadcast %348 : vector<24x1xf32> to vector<24x768xf32>
    %353 = arith.mulf %329, %352 : vector<24x768xf32>
    %354 = vector.broadcast %351 : vector<24x1xf32> to vector<24x768xf32>
    %355 = arith.addf %353, %354 : vector<24x768xf32>
    %cst_450 = arith.constant 0.000000e+00 : f32
    %356 = vector.broadcast %cst_450 : f32 to vector<24x768xf32>
    %357 = arith.cmpf ogt, %355, %356 : vector<24x768xf32>
    %c0_451 = arith.constant 0 : index
    %c0_452 = arith.constant 0 : index
    %358 = vector.load %arg5[%c0_451, %c0_452] : memref<24x1xf32, #tpu.memory_space<vmem>>, vector<24x1xf32>
    %359 = vector.broadcast %358 : vector<24x1xf32> to vector<24x768xf32>
    %360 = arith.mulf %359, %355 : vector<24x768xf32>
    %361 = arith.select %357, %355, %360 : vector<24x768xi1>, vector<24x768xf32>
    %362 = vector.extract_strided_slice %361 {offsets = [0, 0], sizes = [24, 384], strides = [1, 1]} : vector<24x768xf32> to vector<24x384xf32>
    %c0_453 = arith.constant 0 : index
    %c0_454 = arith.constant 0 : index
    %c0_455 = arith.constant 0 : index
    %363 = vector.load %arg8[%c0_453, %c0_454, %c0_455] : memref<2x24x384xf32, #tpu.memory_space<vmem>>, vector<1x24x384xf32>
    %364 = vector.shape_cast %363 : vector<1x24x384xf32> to vector<24x384xf32>
    %365 = vector.shape_cast %362 : vector<24x384xf32> to vector<1x24x384xf32>
    tpu.vector_store %arg8[%c0_453, %c0_454, %c0_455], %365 {strides = array<i32>} : memref<2x24x384xf32, #tpu.memory_space<vmem>>, vector<1x24x384xf32>,
    %366 = vector.extract_strided_slice %361 {offsets = [0, 384], sizes = [24, 384], strides = [1, 1]} : vector<24x768xf32> to vector<24x384xf32>
    %c1_456 = arith.constant 1 : index
    %c0_457 = arith.constant 0 : index
    %c0_458 = arith.constant 0 : index
    %367 = vector.load %arg8[%c1_456, %c0_457, %c0_458] : memref<2x24x384xf32, #tpu.memory_space<vmem>>, vector<1x24x384xf32>
    %368 = vector.shape_cast %367 : vector<1x24x384xf32> to vector<24x384xf32>
    %369 = vector.shape_cast %366 : vector<24x384xf32> to vector<1x24x384xf32>
    tpu.vector_store %arg8[%c1_456, %c0_457, %c0_458], %369 {strides = array<i32>} : memref<2x24x384xf32, #tpu.memory_space<vmem>>, vector<1x24x384xf32>,
    return
  }
}

</mosaic_0001>

<llo_original>
// kernel: downsampler_b.1
$region0: #{downsampler_b.1}
  #allocation0 [shape = 'u32[]', space=smem, size = 0x4, offset = 0x4, fixed_abs, tag = 'smem constant byte address 0x4 - core index']
  #allocation1 [shape = 'u32[72,128]{1,0:T(1,128)}', space=vmem, size = 0x9000, scoped, tag = 'internal scratch']
  #allocation2 [shape = 'f32[2,8,1920]{2,1,0:T(8,128)}', space=vmem, size = 0x1e000, scoped, tag = 'scratch operand']
  #allocation3 [shape = 'f32[72,768]{1,0:T(8,128)}', space=vmem, size = 0x36000, scoped, tag = 'scratch operand']
  #allocation4 [shape = 'f32[360,768]{1,0:T(8,128)}', space=vmem, size = 0x10e000, scoped, tag = 'scratch operand']
  %s0 = inlined_call_operand.vmem [shape: f32[4,8,896], index: 0, kind: input, shape index: {}]
  %s1 = inlined_call_operand.vmem [shape: f32[8,72], index: 1, kind: input, shape index: {}]
  %s2 = inlined_call_operand.vmem [shape: f32[24,360], index: 2, kind: input, shape index: {}]
  %s3 = inlined_call_operand.vmem [shape: f32[24,1], index: 3, kind: input, shape index: {}]
  %s4 = inlined_call_operand.vmem [shape: f32[24,1], index: 4, kind: input, shape index: {}]
  %s5 = inlined_call_operand.vmem [shape: f32[24,1], index: 5, kind: input, shape index: {}]
  %s6 = inlined_call_operand.vmem [shape: f32[1,768], index: 6, kind: input, shape index: {}, may-alias: {6,7}]
  %s7 = inlined_call_operand.vmem [shape: f32[1,768], index: 7, kind: input, shape index: {}, may-alias: {6,7}]
  %s8 = inlined_call_operand.vmem [shape: f32[2,24,384], index: 8, kind: output, shape index: {}]
  %s9 = sld [smem:[#allocation0]]
  $region42: #{downsampler_b.1} parent=0
    _
  %s11 = ssub.s32 1, %s9
  %s12 = scalar_select 0, %s11, %s9
  // Predicated region
  $region2: #{downsampler_b.1} parent=0 // pred_check
    _
  $region3: #{downsampler_b.1} parent=0 // pred_check_branch
    %14 = sbr.rel (0) target = $region5
  $region4: #{downsampler_b.1} parent=0 // pred_region
    _
  $region5: #{downsampler_b.1} parent=0 // pred_fallthru
    _
  // Predicated region
  $region6: #{downsampler_b.1} parent=0 // pred_check
    _
  $region7: #{downsampler_b.1} parent=0 // pred_check_branch
    %16 = sbr.rel (0) target = $region9
  $region8: #{downsampler_b.1} parent=0 // pred_region
    _
  $region9: #{downsampler_b.1} parent=0 // pred_fallthru
    _
  // Predicated region
  $region10: #{downsampler_b.1} parent=0 // pred_check
    _
  $region11: #{downsampler_b.1} parent=0 // pred_check_branch
    %18 = sbr.rel (0) target = $region13
  $region12: #{downsampler_b.1} parent=0 // pred_region
    _
  $region13: #{downsampler_b.1} parent=0 // pred_fallthru
    _
  // Predicated region
  $region14: #{downsampler_b.1} parent=0 // pred_check
    _
  $region15: #{downsampler_b.1} parent=0 // pred_check_branch
    %20 = sbr.rel (0) target = $region17
  $region16: #{downsampler_b.1} parent=0 // pred_region
    _
  $region17: #{downsampler_b.1} parent=0 // pred_fallthru
    _
  // Predicated region
  $region18: #{downsampler_b.1} parent=0 // pred_check
    _
  $region19: #{downsampler_b.1} parent=0 // pred_check_branch
    %22 = sbr.rel (0) target = $region21
  $region20: #{downsampler_b.1} parent=0 // pred_region
    _
  $region21: #{downsampler_b.1} parent=0 // pred_fallthru
    _
  // Predicated region
  $region22: #{downsampler_b.1} parent=0 // pred_check
    _
  $region23: #{downsampler_b.1} parent=0 // pred_check_branch
    %24 = sbr.rel (0) target = $region25
  $region24: #{downsampler_b.1} parent=0 // pred_region
    _
  $region25: #{downsampler_b.1} parent=0 // pred_fallthru
    _
  // Predicated region
  $region26: #{downsampler_b.1} parent=0 // pred_check
    _
  $region27: #{downsampler_b.1} parent=0 // pred_check_branch
    %26 = sbr.rel (0) target = $region29
  $region28: #{downsampler_b.1} parent=0 // pred_region
    _
  $region29: #{downsampler_b.1} parent=0 // pred_fallthru
    _
  // Predicated region
  $region30: #{downsampler_b.1} parent=0 // pred_check
    _
  $region31: #{downsampler_b.1} parent=0 // pred_check_branch
    %28 = sbr.rel (0) target = $region33
  $region32: #{downsampler_b.1} parent=0 // pred_region
    _
  $region33: #{downsampler_b.1} parent=0 // pred_fallthru
    _
  %v29 = vld [vmem:[%s0] sm:$0xff]
  %v30 = vld [vmem:[%s0 + $0x8] sm:$0xff]
  %v31 = vld [vmem:[%s0 + $0x10] sm:$0xff]
  %v32 = vld [vmem:[%s0 + $0x18] sm:$0xff]
  %v33 = vld [vmem:[%s0 + $0x20] sm:$0xff]
  %v34 = vld [vmem:[%s0 + $0x28] sm:$0xff]
  %35 = vst [vmem:[#allocation3] sm:$0xff] %v29
  %36 = vst [vmem:[#allocation3 + $0x8] sm:$0xff] %v30
  %37 = vst [vmem:[#allocation3 + $0x10] sm:$0xff] %v31
  %38 = vst [vmem:[#allocation3 + $0x18] sm:$0xff] %v32
  %39 = vst [vmem:[#allocation3 + $0x20] sm:$0xff] %v33
  %40 = vst [vmem:[#allocation3 + $0x28] sm:$0xff] %v34
  %s41 = scalar_lea.vmem %s0, 56
  %v42 = vld [vmem:[%s41] sm:$0xff]
  %v43 = vld [vmem:[%s41 + $0x8] sm:$0xff]
  %v44 = vld [vmem:[%s41 + $0x10] sm:$0xff]
  %v45 = vld [vmem:[%s41 + $0x18] sm:$0xff]
  %v46 = vld [vmem:[%s41 + $0x20] sm:$0xff]
  %v47 = vld [vmem:[%s41 + $0x28] sm:$0xff]
  %48 = vst [vmem:[#allocation3 + $0x30] sm:$0xff] %v42
  %49 = vst [vmem:[#allocation3 + $0x38] sm:$0xff] %v43
  %50 = vst [vmem:[#allocation3 + $0x40] sm:$0xff] %v44
  %51 = vst [vmem:[#allocation3 + $0x48] sm:$0xff] %v45
  %52 = vst [vmem:[#allocation3 + $0x50] sm:$0xff] %v46
  %53 = vst [vmem:[#allocation3 + $0x58] sm:$0xff] %v47
  %v54 = vld [vmem:[%s0] sm:$0xff]
  %v55 = vld [vmem:[%s0 + $0x8] sm:$0xff]
  %v56 = vld [vmem:[%s0 + $0x10] sm:$0xff]
  %v57 = vld [vmem:[%s0 + $0x18] sm:$0xff]
  %v58 = vld [vmem:[%s0 + $0x20] sm:$0xff]
  %v59 = vld [vmem:[%s0 + $0x28] sm:$0xff]
  %v60 = vld [vmem:[%s0 + $0x30] sm:$0xff]
  %68 = vrot.lane.b32.xlu0 %v54, 127
  %v69 = vpop.permute.xlu0 %68
  %70 = vrot.lane.b32.xlu0 %v55, 127
  %v71 = vpop.permute.xlu0 %70
  %72 = vrot.lane.b32.xlu0 %v56, 127
  %v73 = vpop.permute.xlu0 %72
  %74 = vrot.lane.b32.xlu0 %v57, 127
  %v75 = vpop.permute.xlu0 %74
  %76 = vrot.lane.b32.xlu0 %v58, 127
  %v77 = vpop.permute.xlu0 %76
  %78 = vrot.lane.b32.xlu0 %v59, 127
  %v79 = vpop.permute.xlu0 %78
  %80 = vrot.lane.b32.xlu0 %v60, 127
  %v81 = vpop.permute.xlu0 %80
  %vm82 = vcmask 1039360
  %v83 = vsel %vm82, %v69, %v71
  %v84 = vsel %vm82, %v71, %v73
  %v85 = vsel %vm82, %v73, %v75
  %v86 = vsel %vm82, %v75, %v77
  %v87 = vsel %vm82, %v77, %v79
  %v88 = vsel %vm82, %v79, %v81
  %95 = vst [vmem:[#allocation3 + $0x60] sm:$0xff] %v83
  %96 = vst [vmem:[#allocation3 + $0x68] sm:$0xff] %v84
  %97 = vst [vmem:[#allocation3 + $0x70] sm:$0xff] %v85
  %98 = vst [vmem:[#allocation3 + $0x78] sm:$0xff] %v86
  %99 = vst [vmem:[#allocation3 + $0x80] sm:$0xff] %v87
  %100 = vst [vmem:[#allocation3 + $0x88] sm:$0xff] %v88
  %s101 = scalar_lea.vmem %s0, 112
  %v102 = vld [vmem:[%s101] sm:$0xff]
  %v103 = vld [vmem:[%s101 + $0x8] sm:$0xff]
  %v104 = vld [vmem:[%s101 + $0x10] sm:$0xff]
  %v105 = vld [vmem:[%s101 + $0x18] sm:$0xff]
  %v106 = vld [vmem:[%s101 + $0x20] sm:$0xff]
  %v107 = vld [vmem:[%s101 + $0x28] sm:$0xff]
  %108 = vst [vmem:[#allocation3 + $0x90] sm:$0xff] %v102
  %109 = vst [vmem:[#allocation3 + $0x98] sm:$0xff] %v103
  %110 = vst [vmem:[#allocation3 + $0xa0] sm:$0xff] %v104
  %111 = vst [vmem:[#allocation3 + $0xa8] sm:$0xff] %v105
  %112 = vst [vmem:[#allocation3 + $0xb0] sm:$0xff] %v106
  %113 = vst [vmem:[#allocation3 + $0xb8] sm:$0xff] %v107
  %s114 = scalar_lea.vmem %s0, 168
  %v115 = vld [vmem:[%s114] sm:$0xff]
  %v116 = vld [vmem:[%s114 + $0x8] sm:$0xff]
  %v117 = vld [vmem:[%s114 + $0x10] sm:$0xff]
  %v118 = vld [vmem:[%s114 + $0x18] sm:$0xff]
  %v119 = vld [vmem:[%s114 + $0x20] sm:$0xff]
  %v120 = vld [vmem:[%s114 + $0x28] sm:$0xff]
  %121 = vst [vmem:[#allocation3 + $0xc0] sm:$0xff] %v115
  %122 = vst [vmem:[#allocation3 + $0xc8] sm:$0xff] %v116
  %123 = vst [vmem:[#allocation3 + $0xd0] sm:$0xff] %v117
  %124 = vst [vmem:[#allocation3 + $0xd8] sm:$0xff] %v118
  %125 = vst [vmem:[#allocation3 + $0xe0] sm:$0xff] %v119
  %126 = vst [vmem:[#allocation3 + $0xe8] sm:$0xff] %v120
  %v127 = vld [vmem:[%s101] sm:$0xff]
  %v128 = vld [vmem:[%s101 + $0x8] sm:$0xff]
  %v129 = vld [vmem:[%s101 + $0x10] sm:$0xff]
  %v130 = vld [vmem:[%s101 + $0x18] sm:$0xff]
  %v131 = vld [vmem:[%s101 + $0x20] sm:$0xff]
  %v132 = vld [vmem:[%s101 + $0x28] sm:$0xff]
  %v133 = vld [vmem:[%s101 + $0x30] sm:$0xff]
  %141 = vrot.lane.b32.xlu0 %v127, 127
  %v142 = vpop.permute.xlu0 %141
  %143 = vrot.lane.b32.xlu0 %v128, 127
  %v144 = vpop.permute.xlu0 %143
  %145 = vrot.lane.b32.xlu0 %v129, 127
  %v146 = vpop.permute.xlu0 %145
  %147 = vrot.lane.b32.xlu0 %v130, 127
  %v148 = vpop.permute.xlu0 %147
  %149 = vrot.lane.b32.xlu0 %v131, 127
  %v150 = vpop.permute.xlu0 %149
  %151 = vrot.lane.b32.xlu0 %v132, 127
  %v152 = vpop.permute.xlu0 %151
  %153 = vrot.lane.b32.xlu0 %v133, 127
  %v154 = vpop.permute.xlu0 %153
  %v155 = vsel %vm82, %v142, %v144
  %v156 = vsel %vm82, %v144, %v146
  %v157 = vsel %vm82, %v146, %v148
  %v158 = vsel %vm82, %v148, %v150
  %v159 = vsel %vm82, %v150, %v152
  %v160 = vsel %vm82, %v152, %v154
  %167 = vst [vmem:[#allocation3 + $0xf0] sm:$0xff] %v155
  %168 = vst [vmem:[#allocation3 + $0xf8] sm:$0xff] %v156
  %169 = vst [vmem:[#allocation3 + $0x100] sm:$0xff] %v157
  %170 = vst [vmem:[#allocation3 + $0x108] sm:$0xff] %v158
  %171 = vst [vmem:[#allocation3 + $0x110] sm:$0xff] %v159
  %172 = vst [vmem:[#allocation3 + $0x118] sm:$0xff] %v160
  %v173 = vld [vmem:[%s0] sm:$0xff]
  %v174 = vld [vmem:[%s0 + $0x8] sm:$0xff]
  %v175 = vld [vmem:[%s0 + $0x10] sm:$0xff]
  %v176 = vld [vmem:[%s0 + $0x18] sm:$0xff]
  %v177 = vld [vmem:[%s0 + $0x20] sm:$0xff]
  %v178 = vld [vmem:[%s0 + $0x28] sm:$0xff]
  %v179 = vld [vmem:[%s0 + $0x30] sm:$0xff]
  %187 = vrot.lane.b32.xlu0 %v173, 88
  %v188 = vpop.permute.xlu0 %187
  %189 = vrot.lane.b32.xlu0 %v174, 88
  %v190 = vpop.permute.xlu0 %189
  %191 = vrot.lane.b32.xlu0 %v175, 88
  %v192 = vpop.permute.xlu0 %191
  %193 = vrot.lane.b32.xlu0 %v176, 88
  %v194 = vpop.permute.xlu0 %193
  %195 = vrot.lane.b32.xlu0 %v177, 88
  %v196 = vpop.permute.xlu0 %195
  %197 = vrot.lane.b32.xlu0 %v178, 88
  %v198 = vpop.permute.xlu0 %197
  %199 = vrot.lane.b32.xlu0 %v179, 88
  %v200 = vpop.permute.xlu0 %199
  %vm201 = vcmask 719872
  %v202 = vsel %vm201, %v188, %v190
  %v203 = vsel %vm201, %v190, %v192
  %v204 = vsel %vm201, %v192, %v194
  %v205 = vsel %vm201, %v194, %v196
  %v206 = vsel %vm201, %v196, %v198
  %v207 = vsel %vm201, %v198, %v200
  %214 = vst [vmem:[#allocation3 + $0x120] sm:$0xff] %v202
  %215 = vst [vmem:[#allocation3 + $0x128] sm:$0xff] %v203
  %216 = vst [vmem:[#allocation3 + $0x130] sm:$0xff] %v204
  %217 = vst [vmem:[#allocation3 + $0x138] sm:$0xff] %v205
  %218 = vst [vmem:[#allocation3 + $0x140] sm:$0xff] %v206
  %219 = vst [vmem:[#allocation3 + $0x148] sm:$0xff] %v207
  %v220 = vld [vmem:[%s41] sm:$0xff]
  %v221 = vld [vmem:[%s41 + $0x8] sm:$0xff]
  %v222 = vld [vmem:[%s41 + $0x10] sm:$0xff]
  %v223 = vld [vmem:[%s41 + $0x18] sm:$0xff]
  %v224 = vld [vmem:[%s41 + $0x20] sm:$0xff]
  %v225 = vld [vmem:[%s41 + $0x28] sm:$0xff]
  %v226 = vld [vmem:[%s41 + $0x30] sm:$0xff]
  %234 = vrot.lane.b32.xlu0 %v220, 88
  %v235 = vpop.permute.xlu0 %234
  %236 = vrot.lane.b32.xlu0 %v221, 88
  %v237 = vpop.permute.xlu0 %236
  %238 = vrot.lane.b32.xlu0 %v222, 88
  %v239 = vpop.permute.xlu0 %238
  %240 = vrot.lane.b32.xlu0 %v223, 88
  %v241 = vpop.permute.xlu0 %240
  %242 = vrot.lane.b32.xlu0 %v224, 88
  %v243 = vpop.permute.xlu0 %242
  %244 = vrot.lane.b32.xlu0 %v225, 88
  %v245 = vpop.permute.xlu0 %244
  %246 = vrot.lane.b32.xlu0 %v226, 88
  %v247 = vpop.permute.xlu0 %246
  %v248 = vsel %vm201, %v235, %v237
  %v249 = vsel %vm201, %v237, %v239
  %v250 = vsel %vm201, %v239, %v241
  %v251 = vsel %vm201, %v241, %v243
  %v252 = vsel %vm201, %v243, %v245
  %v253 = vsel %vm201, %v245, %v247
  %260 = vst [vmem:[#allocation3 + $0x150] sm:$0xff] %v248
  %261 = vst [vmem:[#allocation3 + $0x158] sm:$0xff] %v249
  %262 = vst [vmem:[#allocation3 + $0x160] sm:$0xff] %v250
  %263 = vst [vmem:[#allocation3 + $0x168] sm:$0xff] %v251
  %264 = vst [vmem:[#allocation3 + $0x170] sm:$0xff] %v252
  %265 = vst [vmem:[#allocation3 + $0x178] sm:$0xff] %v253
  %v266 = vld [vmem:[%s0] sm:$0xff]
  %v267 = vld [vmem:[%s0 + $0x8] sm:$0xff]
  %v268 = vld [vmem:[%s0 + $0x10] sm:$0xff]
  %v269 = vld [vmem:[%s0 + $0x18] sm:$0xff]
  %v270 = vld [vmem:[%s0 + $0x20] sm:$0xff]
  %v271 = vld [vmem:[%s0 + $0x28] sm:$0xff]
  %v272 = vld [vmem:[%s0 + $0x30] sm:$0xff]
  %280 = vrot.lane.b32.xlu0 %v266, 87
  %v281 = vpop.permute.xlu0 %280
  %282 = vrot.lane.b32.xlu0 %v267, 87
  %v283 = vpop.permute.xlu0 %282
  %284 = vrot.lane.b32.xlu0 %v268, 87
  %v285 = vpop.permute.xlu0 %284
  %286 = vrot.lane.b32.xlu0 %v269, 87
  %v287 = vpop.permute.xlu0 %286
  %288 = vrot.lane.b32.xlu0 %v270, 87
  %v289 = vpop.permute.xlu0 %288
  %290 = vrot.lane.b32.xlu0 %v271, 87
  %v291 = vpop.permute.xlu0 %290
  %292 = vrot.lane.b32.xlu0 %v272, 87
  %v293 = vpop.permute.xlu0 %292
  %vm294 = vcmask 711680
  %v295 = vsel %vm294, %v281, %v283
  %v296 = vsel %vm294, %v283, %v285
  %v297 = vsel %vm294, %v285, %v287
  %v298 = vsel %vm294, %v287, %v289
  %v299 = vsel %vm294, %v289, %v291
  %v300 = vsel %vm294, %v291, %v293
  %307 = vst [vmem:[#allocation3 + $0x180] sm:$0xff] %v295
  %308 = vst [vmem:[#allocation3 + $0x188] sm:$0xff] %v296
  %309 = vst [vmem:[#allocation3 + $0x190] sm:$0xff] %v297
  %310 = vst [vmem:[#allocation3 + $0x198] sm:$0xff] %v298
  %311 = vst [vmem:[#allocation3 + $0x1a0] sm:$0xff] %v299
  %312 = vst [vmem:[#allocation3 + $0x1a8] sm:$0xff] %v300
  %v313 = vld [vmem:[%s1] sm:$0xff]
  %v314 = vld [vmem:[#allocation3] sm:$0xff]
  %v315 = vld [vmem:[#allocation3 + $0x8] sm:$0xff]
  %v316 = vld [vmem:[#allocation3 + $0x10] sm:$0xff]
  %v317 = vld [vmem:[#allocation3 + $0x18] sm:$0xff]
  %v318 = vld [vmem:[#allocation3 + $0x20] sm:$0xff]
  %v319 = vld [vmem:[#allocation3 + $0x28] sm:$0xff]
  %v320 = vld [vmem:[#allocation3 + $0x30] sm:$0xff]
  %v321 = vld [vmem:[#allocation3 + $0x38] sm:$0xff]
  %v322 = vld [vmem:[#allocation3 + $0x40] sm:$0xff]
  %v323 = vld [vmem:[#allocation3 + $0x48] sm:$0xff]
  %v324 = vld [vmem:[#allocation3 + $0x50] sm:$0xff]
  %v325 = vld [vmem:[#allocation3 + $0x58] sm:$0xff]
  %v326 = vld [vmem:[#allocation3 + $0x60] sm:$0xff]
  %v327 = vld [vmem:[#allocation3 + $0x68] sm:$0xff]
  %v328 = vld [vmem:[#allocation3 + $0x70] sm:$0xff]
  %v329 = vld [vmem:[#allocation3 + $0x78] sm:$0xff]
  %v330 = vld [vmem:[#allocation3 + $0x80] sm:$0xff]
  %v331 = vld [vmem:[#allocation3 + $0x88] sm:$0xff]
  %v332 = vld [vmem:[#allocation3 + $0x90] sm:$0xff]
  %v333 = vld [vmem:[#allocation3 + $0x98] sm:$0xff]
  %v334 = vld [vmem:[#allocation3 + $0xa0] sm:$0xff]
  %v335 = vld [vmem:[#allocation3 + $0xa8] sm:$0xff]
  %v336 = vld [vmem:[#allocation3 + $0xb0] sm:$0xff]
  %v337 = vld [vmem:[#allocation3 + $0xb8] sm:$0xff]
  %v338 = vld [vmem:[#allocation3 + $0xc0] sm:$0xff]
  %v339 = vld [vmem:[#allocation3 + $0xc8] sm:$0xff]
  %v340 = vld [vmem:[#allocation3 + $0xd0] sm:$0xff]
  %v341 = vld [vmem:[#allocation3 + $0xd8] sm:$0xff]
  %v342 = vld [vmem:[#allocation3 + $0xe0] sm:$0xff]
  %v343 = vld [vmem:[#allocation3 + $0xe8] sm:$0xff]
  %v344 = vld [vmem:[#allocation3 + $0xf0] sm:$0xff]
  %v345 = vld [vmem:[#allocation3 + $0xf8] sm:$0xff]
  %v346 = vld [vmem:[#allocation3 + $0x100] sm:$0xff]
  %v347 = vld [vmem:[#allocation3 + $0x108] sm:$0xff]
  %v348 = vld [vmem:[#allocation3 + $0x110] sm:$0xff]
  %v349 = vld [vmem:[#allocation3 + $0x118] sm:$0xff]
  %v350 = vld [vmem:[#allocation3 + $0x120] sm:$0xff]
  %v351 = vld [vmem:[#allocation3 + $0x128] sm:$0xff]
  %v352 = vld [vmem:[#allocation3 + $0x130] sm:$0xff]
  %v353 = vld [vmem:[#allocation3 + $0x138] sm:$0xff]
  %v354 = vld [vmem:[#allocation3 + $0x140] sm:$0xff]
  %v355 = vld [vmem:[#allocation3 + $0x148] sm:$0xff]
  %v356 = vld [vmem:[#allocation3 + $0x150] sm:$0xff]
  %v357 = vld [vmem:[#allocation3 + $0x158] sm:$0xff]
  %v358 = vld [vmem:[#allocation3 + $0x160] sm:$0xff]
  %v359 = vld [vmem:[#allocation3 + $0x168] sm:$0xff]
  %v360 = vld [vmem:[#allocation3 + $0x170] sm:$0xff]
  %v361 = vld [vmem:[#allocation3 + $0x178] sm:$0xff]
  %v362 = vld [vmem:[#allocation3 + $0x180] sm:$0xff]
  %v363 = vld [vmem:[#allocation3 + $0x188] sm:$0xff]
  %v364 = vld [vmem:[#allocation3 + $0x190] sm:$0xff]
  %v365 = vld [vmem:[#allocation3 + $0x198] sm:$0xff]
  %v366 = vld [vmem:[#allocation3 + $0x1a0] sm:$0xff]
  %v367 = vld [vmem:[#allocation3 + $0x1a8] sm:$0xff]
  %vm368 = vcmask 588800
  %v370 = vsel %vm368, %v313, 0
  %372 = vmatpush.msra.mxu0 0.0
  %373 = vmatpush.msra.mxu0 0.0
  %374 = vmatpush.msra.mxu0 0.0
  %375 = vmatpush.msra.mxu0 0.0
  %376 = vmatpush.msra.mxu0 0.0
  %377 = vmatpush.msra.mxu0 0.0
  %378 = vmatpush.msra.mxu0 0.0
  %379 = vmatpush.msra.mxu0 %v362
  %380 = vmatpush.msra.mxu0 %v356
  %381 = vmatpush.msra.mxu0 %v350
  %382 = vmatpush.msra.mxu0 %v344
  %383 = vmatpush.msra.mxu0 %v338
  %384 = vmatpush.msra.mxu0 %v332
  %385 = vmatpush.msra.mxu0 %v326
  %386 = vmatpush.msra.mxu0 %v320
  %387 = vmatpush.msra.mxu0 %v314
  %388 = vmatmul.f32.gmra.mxu0 %v370
  %v389 = vpop.f32.mrf.mxu0
  %v390 = vadd.f32 0.0, %v389
  %391 = vdwg.mxu0
  %392 = vmatpush.msra.mxu0 0.0
  %393 = vmatpush.msra.mxu0 0.0
  %394 = vmatpush.msra.mxu0 0.0
  %395 = vmatpush.msra.mxu0 0.0
  %396 = vmatpush.msra.mxu0 0.0
  %397 = vmatpush.msra.mxu0 0.0
  %398 = vmatpush.msra.mxu0 0.0
  %399 = vmatpush.msra.mxu0 %v363
  %400 = vmatpush.msra.mxu0 %v357
  %401 = vmatpush.msra.mxu0 %v351
  %402 = vmatpush.msra.mxu0 %v345
  %403 = vmatpush.msra.mxu0 %v339
  %404 = vmatpush.msra.mxu0 %v333
  %405 = vmatpush.msra.mxu0 %v327
  %406 = vmatpush.msra.mxu0 %v321
  %407 = vmatpush.msra.mxu0 %v315
  %408 = vmatmul.f32.gmra.mxu0 %v370
  %v409 = vpop.f32.mrf.mxu0
  %v410 = vadd.f32 0.0, %v409
  %411 = vdwg.mxu0
  %412 = vmatpush.msra.mxu0 0.0
  %413 = vmatpush.msra.mxu0 0.0
  %414 = vmatpush.msra.mxu0 0.0
  %415 = vmatpush.msra.mxu0 0.0
  %416 = vmatpush.msra.mxu0 0.0
  %417 = vmatpush.msra.mxu0 0.0
  %418 = vmatpush.msra.mxu0 0.0
  %419 = vmatpush.msra.mxu0 %v364
  %420 = vmatpush.msra.mxu0 %v358
  %421 = vmatpush.msra.mxu0 %v352
  %422 = vmatpush.msra.mxu0 %v346
  %423 = vmatpush.msra.mxu0 %v340
  %424 = vmatpush.msra.mxu0 %v334
  %425 = vmatpush.msra.mxu0 %v328
  %426 = vmatpush.msra.mxu0 %v322
  %427 = vmatpush.msra.mxu0 %v316
  %428 = vmatmul.f32.gmra.mxu0 %v370
  %v429 = vpop.f32.mrf.mxu0
  %v430 = vadd.f32 0.0, %v429
  %431 = vdwg.mxu0
  %432 = vmatpush.msra.mxu0 0.0
  %433 = vmatpush.msra.mxu0 0.0
  %434 = vmatpush.msra.mxu0 0.0
  %435 = vmatpush.msra.mxu0 0.0
  %436 = vmatpush.msra.mxu0 0.0
  %437 = vmatpush.msra.mxu0 0.0
  %438 = vmatpush.msra.mxu0 0.0
  %439 = vmatpush.msra.mxu0 %v365
  %440 = vmatpush.msra.mxu0 %v359
  %441 = vmatpush.msra.mxu0 %v353
  %442 = vmatpush.msra.mxu0 %v347
  %443 = vmatpush.msra.mxu0 %v341
  %444 = vmatpush.msra.mxu0 %v335
  %445 = vmatpush.msra.mxu0 %v329
  %446 = vmatpush.msra.mxu0 %v323
  %447 = vmatpush.msra.mxu0 %v317
  %448 = vmatmul.f32.gmra.mxu0 %v370
  %v449 = vpop.f32.mrf.mxu0
  %v450 = vadd.f32 0.0, %v449
  %451 = vdwg.mxu0
  %452 = vmatpush.msra.mxu0 0.0
  %453 = vmatpush.msra.mxu0 0.0
  %454 = vmatpush.msra.mxu0 0.0
  %455 = vmatpush.msra.mxu0 0.0
  %456 = vmatpush.msra.mxu0 0.0
  %457 = vmatpush.msra.mxu0 0.0
  %458 = vmatpush.msra.mxu0 0.0
  %459 = vmatpush.msra.mxu0 %v366
  %460 = vmatpush.msra.mxu0 %v360
  %461 = vmatpush.msra.mxu0 %v354
  %462 = vmatpush.msra.mxu0 %v348
  %463 = vmatpush.msra.mxu0 %v342
  %464 = vmatpush.msra.mxu0 %v336
  %465 = vmatpush.msra.mxu0 %v330
  %466 = vmatpush.msra.mxu0 %v324
  %467 = vmatpush.msra.mxu0 %v318
  %468 = vmatmul.f32.gmra.mxu0 %v370
  %v469 = vpop.f32.mrf.mxu0
  %v470 = vadd.f32 0.0, %v469
  %471 = vdwg.mxu0
  %472 = vmatpush.msra.mxu0 0.0
  %473 = vmatpush.msra.mxu0 0.0
  %474 = vmatpush.msra.mxu0 0.0
  %475 = vmatpush.msra.mxu0 0.0
  %476 = vmatpush.msra.mxu0 0.0
  %477 = vmatpush.msra.mxu0 0.0
  %478 = vmatpush.msra.mxu0 0.0
  %479 = vmatpush.msra.mxu0 %v367
  %480 = vmatpush.msra.mxu0 %v361
  %481 = vmatpush.msra.mxu0 %v355
  %482 = vmatpush.msra.mxu0 %v349
  %483 = vmatpush.msra.mxu0 %v343
  %484 = vmatpush.msra.mxu0 %v337
  %485 = vmatpush.msra.mxu0 %v331
  %486 = vmatpush.msra.mxu0 %v325
  %487 = vmatpush.msra.mxu0 %v319
  %488 = vmatmul.f32.gmra.mxu0 %v370
  %v489 = vpop.f32.mrf.mxu0
  %v490 = vadd.f32 0.0, %v489
  %491 = vdwg.mxu0
  %v492 = vld [vmem:[%s6] sm:$0x3f]
  %v494 = vperm.slane %v492, 0
  %v495 = vperm.slane %v492, 1
  %v496 = vperm.slane %v492, 2
  %v497 = vperm.slane %v492, 3
  %v498 = vperm.slane %v492, 4
  %v499 = vperm.slane %v492, 5
  %v506 = vmul.f32 %v390, %v494
  %v507 = vmul.f32 %v410, %v495
  %v508 = vmul.f32 %v430, %v496
  %v509 = vmul.f32 %v450, %v497
  %v510 = vmul.f32 %v470, %v498
  %v511 = vmul.f32 %v490, %v499
  %512 = vst [vmem:[#allocation2] sm:$0xff] 0.0
  %513 = vst [vmem:[#allocation2 + $0x8] sm:$0xff] 0.0
  %514 = vst [vmem:[#allocation2 + $0x10] sm:$0xff] 0.0
  %515 = vst [vmem:[#allocation2 + $0x18] sm:$0xff] 0.0
  %516 = vst [vmem:[#allocation2 + $0x20] sm:$0xff] 0.0
  %517 = vst [vmem:[#allocation2 + $0x28] sm:$0xff] 0.0
  %518 = vst [vmem:[#allocation2 + $0x48] sm:$0xff] 0.0
  %519 = vst [vmem:[#allocation2 + $0x50] sm:$0xff] 0.0
  %520 = vst [vmem:[#allocation2 + $0x58] sm:$0xff] 0.0
  %521 = vst [vmem:[#allocation2 + $0x60] sm:$0xff] 0.0
  %522 = vst [vmem:[#allocation2 + $0x68] sm:$0xff] 0.0
  %523 = vst [vmem:[#allocation2 + $0x70] sm:$0xff] 0.0
  %524 = vst [vmem:[#allocation2 + $0x30] sm:$0xff] %v506
  %525 = vst [vmem:[#allocation2 + $0x38] sm:$0xff] %v507
  %526 = vst [vmem:[#allocation2 + $0x40] sm:$0xff] %v508
  %s527 = scalar_lea.vmem [#allocation2], 120
  %528 = vst [vmem:[%s527] sm:$0xff] 0.0
  %529 = vst [vmem:[%s527 + $0x8] sm:$0xff] 0.0
  %530 = vst [vmem:[%s527 + $0x10] sm:$0xff] 0.0
  %531 = vst [vmem:[%s527 + $0x18] sm:$0xff] 0.0
  %532 = vst [vmem:[%s527 + $0x20] sm:$0xff] 0.0
  %533 = vst [vmem:[%s527 + $0x28] sm:$0xff] 0.0
  %534 = vst [vmem:[%s527 + $0x48] sm:$0xff] 0.0
  %535 = vst [vmem:[%s527 + $0x50] sm:$0xff] 0.0
  %536 = vst [vmem:[%s527 + $0x58] sm:$0xff] 0.0
  %537 = vst [vmem:[%s527 + $0x60] sm:$0xff] 0.0
  %538 = vst [vmem:[%s527 + $0x68] sm:$0xff] 0.0
  %539 = vst [vmem:[%s527 + $0x70] sm:$0xff] 0.0
  %540 = vst [vmem:[%s527 + $0x30] sm:$0xff] %v509
  %541 = vst [vmem:[%s527 + $0x38] sm:$0xff] %v510
  %542 = vst [vmem:[%s527 + $0x40] sm:$0xff] %v511
  %v543 = vld [vmem:[#allocation2 + $0x28] sm:$0xff]
  %v544 = vld [vmem:[#allocation2 + $0x30] sm:$0xff]
  %v545 = vld [vmem:[#allocation2 + $0x38] sm:$0xff]
  %v546 = vld [vmem:[#allocation2 + $0x40] sm:$0xff]
  %551 = vrot.lane.b32.xlu0 %v543, 41
  %v552 = vpop.permute.xlu0 %551
  %553 = vrot.lane.b32.xlu0 %v544, 41
  %v554 = vpop.permute.xlu0 %553
  %555 = vrot.lane.b32.xlu0 %v545, 41
  %v556 = vpop.permute.xlu0 %555
  %557 = vrot.lane.b32.xlu0 %v546, 41
  %v558 = vpop.permute.xlu0 %557
  %vm559 = vcmask 334848
  %v560 = vsel %vm559, %v552, %v554
  %v561 = vsel %vm559, %v554, %v556
  %v562 = vsel %vm559, %v556, %v558
  %566 = vst [vmem:[#allocation4] sm:$0xff] %v560
  %567 = vst [vmem:[#allocation4 + $0x8] sm:$0xff] %v561
  %568 = vst [vmem:[#allocation4 + $0x10] sm:$0xff] %v562
  %v569 = vld [vmem:[%s527 + $0x28] sm:$0xff]
  %v570 = vld [vmem:[%s527 + $0x30] sm:$0xff]
  %v571 = vld [vmem:[%s527 + $0x38] sm:$0xff]
  %v572 = vld [vmem:[%s527 + $0x40] sm:$0xff]
  %577 = vrot.lane.b32.xlu0 %v569, 41
  %v578 = vpop.permute.xlu0 %577
  %579 = vrot.lane.b32.xlu0 %v570, 41
  %v580 = vpop.permute.xlu0 %579
  %581 = vrot.lane.b32.xlu0 %v571, 41
  %v582 = vpop.permute.xlu0 %581
  %583 = vrot.lane.b32.xlu0 %v572, 41
  %v584 = vpop.permute.xlu0 %583
  %v585 = vsel %vm559, %v578, %v580
  %v586 = vsel %vm559, %v580, %v582
  %v587 = vsel %vm559, %v582, %v584
  %591 = vst [vmem:[#allocation4 + $0x18] sm:$0xff] %v585
  %592 = vst [vmem:[#allocation4 + $0x20] sm:$0xff] %v586
  %593 = vst [vmem:[#allocation4 + $0x28] sm:$0xff] %v587
  %v594 = vld [vmem:[#allocation2 + $0x28] sm:$0xff]
  %v595 = vld [vmem:[#allocation2 + $0x30] sm:$0xff]
  %v596 = vld [vmem:[#allocation2 + $0x38] sm:$0xff]
  %v597 = vld [vmem:[#allocation2 + $0x40] sm:$0xff]
  %602 = vrot.lane.b32.xlu0 %v594, 40
  %v603 = vpop.permute.xlu0 %602
  %604 = vrot.lane.b32.xlu0 %v595, 40
  %v605 = vpop.permute.xlu0 %604
  %606 = vrot.lane.b32.xlu0 %v596, 40
  %v607 = vpop.permute.xlu0 %606
  %608 = vrot.lane.b32.xlu0 %v597, 40
  %v609 = vpop.permute.xlu0 %608
  %vm610 = vcmask 326656
  %v611 = vsel %vm610, %v603, %v605
  %v612 = vsel %vm610, %v605, %v607
  %v613 = vsel %vm610, %v607, %v609
  %617 = vst [vmem:[#allocation4 + $0x30] sm:$0xff] %v611
  %618 = vst [vmem:[#allocation4 + $0x38] sm:$0xff] %v612
  %619 = vst [vmem:[#allocation4 + $0x40] sm:$0xff] %v613
  %v620 = vld [vmem:[%s527 + $0x28] sm:$0xff]
  %v621 = vld [vmem:[%s527 + $0x30] sm:$0xff]
  %v622 = vld [vmem:[%s527 + $0x38] sm:$0xff]
  %v623 = vld [vmem:[%s527 + $0x40] sm:$0xff]
  %628 = vrot.lane.b32.xlu0 %v620, 40
  %v629 = vpop.permute.xlu0 %628
  %630 = vrot.lane.b32.xlu0 %v621, 40
  %v631 = vpop.permute.xlu0 %630
  %632 = vrot.lane.b32.xlu0 %v622, 40
  %v633 = vpop.permute.xlu0 %632
  %634 = vrot.lane.b32.xlu0 %v623, 40
  %v635 = vpop.permute.xlu0 %634
  %v636 = vsel %vm610, %v629, %v631
  %v637 = vsel %vm610, %v631, %v633
  %v638 = vsel %vm610, %v633, %v635
  %642 = vst [vmem:[#allocation4 + $0x48] sm:$0xff] %v636
  %643 = vst [vmem:[#allocation4 + $0x50] sm:$0xff] %v637
  %644 = vst [vmem:[#allocation4 + $0x58] sm:$0xff] %v638
  %v645 = vld [vmem:[#allocation2 + $0x28] sm:$0xff]
  %v646 = vld [vmem:[#allocation2 + $0x30] sm:$0xff]
  %v647 = vld [vmem:[#allocation2 + $0x38] sm:$0xff]
  %v648 = vld [vmem:[#allocation2 + $0x40] sm:$0xff]
  %653 = vrot.lane.b32.xlu0 %v645, 39
  %v654 = vpop.permute.xlu0 %653
  %655 = vrot.lane.b32.xlu0 %v646, 39
  %v656 = vpop.permute.xlu0 %655
  %657 = vrot.lane.b32.xlu0 %v647, 39
  %v658 = vpop.permute.xlu0 %657
  %659 = vrot.lane.b32.xlu0 %v648, 39
  %v660 = vpop.permute.xlu0 %659
  %vm661 = vcmask 318464
  %v662 = vsel %vm661, %v654, %v656
  %v663 = vsel %vm661, %v656, %v658
  %v664 = vsel %vm661, %v658, %v660
  %668 = vst [vmem:[#allocation4 + $0x60] sm:$0xff] %v662
  %669 = vst [vmem:[#allocation4 + $0x68] sm:$0xff] %v663
  %670 = vst [vmem:[#allocation4 + $0x70] sm:$0xff] %v664
  %v671 = vld [vmem:[%s527 + $0x28] sm:$0xff]
  %v672 = vld [vmem:[%s527 + $0x30] sm:$0xff]
  %v673 = vld [vmem:[%s527 + $0x38] sm:$0xff]
  %v674 = vld [vmem:[%s527 + $0x40] sm:$0xff]
  %679 = vrot.lane.b32.xlu0 %v671, 39
  %v680 = vpop.permute.xlu0 %679
  %681 = vrot.lane.b32.xlu0 %v672, 39
  %v682 = vpop.permute.xlu0 %681
  %683 = vrot.lane.b32.xlu0 %v673, 39
  %v684 = vpop.permute.xlu0 %683
  %685 = vrot.lane.b32.xlu0 %v674, 39
  %v686 = vpop.permute.xlu0 %685
  %v687 = vsel %vm661, %v680, %v682
  %v688 = vsel %vm661, %v682, %v684
  %v689 = vsel %vm661, %v684, %v686
  %693 = vst [vmem:[#allocation4 + $0x78] sm:$0xff] %v687
  %694 = vst [vmem:[#allocation4 + $0x80] sm:$0xff] %v688
  %695 = vst [vmem:[#allocation4 + $0x88] sm:$0xff] %v689
  %v696 = vld [vmem:[#allocation2 + $0x28] sm:$0xff]
  %v697 = vld [vmem:[#allocation2 + $0x30] sm:$0xff]
  %v698 = vld [vmem:[#allocation2 + $0x38] sm:$0xff]
  %v699 = vld [vmem:[#allocation2 + $0x40] sm:$0xff]
  %704 = vrot.lane.b32.xlu0 %v696, 1
  %v705 = vpop.permute.xlu0 %704
  %706 = vrot.lane.b32.xlu0 %v697, 1
  %v707 = vpop.permute.xlu0 %706
  %708 = vrot.lane.b32.xlu0 %v698, 1
  %v709 = vpop.permute.xlu0 %708
  %710 = vrot.lane.b32.xlu0 %v699, 1
  %v711 = vpop.permute.xlu0 %710
  %vm712 = vcmask 7168
  %v713 = vsel %vm712, %v705, %v707
  %v714 = vsel %vm712, %v707, %v709
  %v715 = vsel %vm712, %v709, %v711
  %719 = vst [vmem:[#allocation4 + $0x90] sm:$0xff] %v713
  %720 = vst [vmem:[#allocation4 + $0x98] sm:$0xff] %v714
  %721 = vst [vmem:[#allocation4 + $0xa0] sm:$0xff] %v715
  %v722 = vld [vmem:[%s527 + $0x28] sm:$0xff]
  %v723 = vld [vmem:[%s527 + $0x30] sm:$0xff]
  %v724 = vld [vmem:[%s527 + $0x38] sm:$0xff]
  %v725 = vld [vmem:[%s527 + $0x40] sm:$0xff]
  %730 = vrot.lane.b32.xlu0 %v722, 1
  %v731 = vpop.permute.xlu0 %730
  %732 = vrot.lane.b32.xlu0 %v723, 1
  %v733 = vpop.permute.xlu0 %732
  %734 = vrot.lane.b32.xlu0 %v724, 1
  %v735 = vpop.permute.xlu0 %734
  %736 = vrot.lane.b32.xlu0 %v725, 1
  %v737 = vpop.permute.xlu0 %736
  %v738 = vsel %vm712, %v731, %v733
  %v739 = vsel %vm712, %v733, %v735
  %v740 = vsel %vm712, %v735, %v737
  %744 = vst [vmem:[#allocation4 + $0xa8] sm:$0xff] %v738
  %745 = vst [vmem:[#allocation4 + $0xb0] sm:$0xff] %v739
  %746 = vst [vmem:[#allocation4 + $0xb8] sm:$0xff] %v740
  %v747 = vld [vmem:[#allocation2 + $0x30] sm:$0xff]
  %v748 = vld [vmem:[#allocation2 + $0x38] sm:$0xff]
  %v749 = vld [vmem:[#allocation2 + $0x40] sm:$0xff]
  %750 = vst [vmem:[#allocation4 + $0xc0] sm:$0xff] %v747
  %751 = vst [vmem:[#allocation4 + $0xc8] sm:$0xff] %v748
  %752 = vst [vmem:[#allocation4 + $0xd0] sm:$0xff] %v749
  %v753 = vld [vmem:[%s527 + $0x30] sm:$0xff]
  %v754 = vld [vmem:[%s527 + $0x38] sm:$0xff]
  %v755 = vld [vmem:[%s527 + $0x40] sm:$0xff]
  %756 = vst [vmem:[#allocation4 + $0xd8] sm:$0xff] %v753
  %757 = vst [vmem:[#allocation4 + $0xe0] sm:$0xff] %v754
  %758 = vst [vmem:[#allocation4 + $0xe8] sm:$0xff] %v755
  %v759 = vld [vmem:[#allocation2 + $0x30] sm:$0xff]
  %v760 = vld [vmem:[#allocation2 + $0x38] sm:$0xff]
  %v761 = vld [vmem:[#allocation2 + $0x40] sm:$0xff]
  %v762 = vld [vmem:[#allocation2 + $0x48] sm:$0xff]
  %767 = vrot.lane.b32.xlu0 %v759, 127
  %v768 = vpop.permute.xlu0 %767
  %769 = vrot.lane.b32.xlu0 %v760, 127
  %v770 = vpop.permute.xlu0 %769
  %771 = vrot.lane.b32.xlu0 %v761, 127
  %v772 = vpop.permute.xlu0 %771
  %773 = vrot.lane.b32.xlu0 %v762, 127
  %v774 = vpop.permute.xlu0 %773
  %v775 = vsel %vm82, %v768, %v770
  %v776 = vsel %vm82, %v770, %v772
  %v777 = vsel %vm82, %v772, %v774
  %781 = vst [vmem:[#allocation4 + $0xf0] sm:$0xff] %v775
  %782 = vst [vmem:[#allocation4 + $0xf8] sm:$0xff] %v776
  %783 = vst [vmem:[#allocation4 + $0x100] sm:$0xff] %v777
  %v784 = vld [vmem:[%s527 + $0x30] sm:$0xff]
  %v785 = vld [vmem:[%s527 + $0x38] sm:$0xff]
  %v786 = vld [vmem:[%s527 + $0x40] sm:$0xff]
  %v787 = vld [vmem:[%s527 + $0x48] sm:$0xff]
  %792 = vrot.lane.b32.xlu0 %v784, 127
  %v793 = vpop.permute.xlu0 %792
  %794 = vrot.lane.b32.xlu0 %v785, 127
  %v795 = vpop.permute.xlu0 %794
  %796 = vrot.lane.b32.xlu0 %v786, 127
  %v797 = vpop.permute.xlu0 %796
  %798 = vrot.lane.b32.xlu0 %v787, 127
  %v799 = vpop.permute.xlu0 %798
  %v800 = vsel %vm82, %v793, %v795
  %v801 = vsel %vm82, %v795, %v797
  %v802 = vsel %vm82, %v797, %v799
  %806 = vst [vmem:[#allocation4 + $0x108] sm:$0xff] %v800
  %807 = vst [vmem:[#allocation4 + $0x110] sm:$0xff] %v801
  %808 = vst [vmem:[#allocation4 + $0x118] sm:$0xff] %v802
  %v809 = vld [vmem:[#allocation2 + $0x30] sm:$0xff]
  %v810 = vld [vmem:[#allocation2 + $0x38] sm:$0xff]
  %v811 = vld [vmem:[#allocation2 + $0x40] sm:$0xff]
  %v812 = vld [vmem:[#allocation2 + $0x48] sm:$0xff]
  %817 = vrot.lane.b32.xlu0 %v809, 89
  %v818 = vpop.permute.xlu0 %817
  %819 = vrot.lane.b32.xlu0 %v810, 89
  %v820 = vpop.permute.xlu0 %819
  %821 = vrot.lane.b32.xlu0 %v811, 89
  %v822 = vpop.permute.xlu0 %821
  %823 = vrot.lane.b32.xlu0 %v812, 89
  %v824 = vpop.permute.xlu0 %823
  %vm825 = vcmask 728064
  %v826 = vsel %vm825, %v818, %v820
  %v827 = vsel %vm825, %v820, %v822
  %v828 = vsel %vm825, %v822, %v824
  %832 = vst [vmem:[#allocation4 + $0x120] sm:$0xff] %v826
  %833 = vst [vmem:[#allocation4 + $0x128] sm:$0xff] %v827
  %834 = vst [vmem:[#allocation4 + $0x130] sm:$0xff] %v828
  %v835 = vld [vmem:[%s527 + $0x30] sm:$0xff]
  %v836 = vld [vmem:[%s527 + $0x38] sm:$0xff]
  %v837 = vld [vmem:[%s527 + $0x40] sm:$0xff]
  %v838 = vld [vmem:[%s527 + $0x48] sm:$0xff]
  %843 = vrot.lane.b32.xlu0 %v835, 89
  %v844 = vpop.permute.xlu0 %843
  %845 = vrot.lane.b32.xlu0 %v836, 89
  %v846 = vpop.permute.xlu0 %845
  %847 = vrot.lane.b32.xlu0 %v837, 89
  %v848 = vpop.permute.xlu0 %847
  %849 = vrot.lane.b32.xlu0 %v838, 89
  %v850 = vpop.permute.xlu0 %849
  %v851 = vsel %vm825, %v844, %v846
  %v852 = vsel %vm825, %v846, %v848
  %v853 = vsel %vm825, %v848, %v850
  %857 = vst [vmem:[#allocation4 + $0x138] sm:$0xff] %v851
  %858 = vst [vmem:[#allocation4 + $0x140] sm:$0xff] %v852
  %859 = vst [vmem:[#allocation4 + $0x148] sm:$0xff] %v853
  %v860 = vld [vmem:[#allocation2 + $0x30] sm:$0xff]
  %v861 = vld [vmem:[#allocation2 + $0x38] sm:$0xff]
  %v862 = vld [vmem:[#allocation2 + $0x40] sm:$0xff]
  %v863 = vld [vmem:[#allocation2 + $0x48] sm:$0xff]
  %868 = vrot.lane.b32.xlu0 %v860, 88
  %v869 = vpop.permute.xlu0 %868
  %870 = vrot.lane.b32.xlu0 %v861, 88
  %v871 = vpop.permute.xlu0 %870
  %872 = vrot.lane.b32.xlu0 %v862, 88
  %v873 = vpop.permute.xlu0 %872
  %874 = vrot.lane.b32.xlu0 %v863, 88
  %v875 = vpop.permute.xlu0 %874
  %v876 = vsel %vm201, %v869, %v871
  %v877 = vsel %vm201, %v871, %v873
  %v878 = vsel %vm201, %v873, %v875
  %882 = vst [vmem:[#allocation4 + $0x150] sm:$0xff] %v876
  %883 = vst [vmem:[#allocation4 + $0x158] sm:$0xff] %v877
  %884 = vst [vmem:[#allocation4 + $0x160] sm:$0xff] %v878
  %v885 = vld [vmem:[%s527 + $0x30] sm:$0xff]
  %v886 = vld [vmem:[%s527 + $0x38] sm:$0xff]
  %v887 = vld [vmem:[%s527 + $0x40] sm:$0xff]
  %v888 = vld [vmem:[%s527 + $0x48] sm:$0xff]
  %893 = vrot.lane.b32.xlu0 %v885, 88
  %v894 = vpop.permute.xlu0 %893
  %895 = vrot.lane.b32.xlu0 %v886, 88
  %v896 = vpop.permute.xlu0 %895
  %897 = vrot.lane.b32.xlu0 %v887, 88
  %v898 = vpop.permute.xlu0 %897
  %899 = vrot.lane.b32.xlu0 %v888, 88
  %v900 = vpop.permute.xlu0 %899
  %v901 = vsel %vm201, %v894, %v896
  %v902 = vsel %vm201, %v896, %v898
  %v903 = vsel %vm201, %v898, %v900
  %907 = vst [vmem:[#allocation4 + $0x168] sm:$0xff] %v901
  %908 = vst [vmem:[#allocation4 + $0x170] sm:$0xff] %v902
  %909 = vst [vmem:[#allocation4 + $0x178] sm:$0xff] %v903
  %v910 = vld [vmem:[#allocation2 + $0x30] sm:$0xff]
  %v911 = vld [vmem:[#allocation2 + $0x38] sm:$0xff]
  %v912 = vld [vmem:[#allocation2 + $0x40] sm:$0xff]
  %v913 = vld [vmem:[#allocation2 + $0x48] sm:$0xff]
  %918 = vrot.lane.b32.xlu0 %v910, 87
  %v919 = vpop.permute.xlu0 %918
  %920 = vrot.lane.b32.xlu0 %v911, 87
  %v921 = vpop.permute.xlu0 %920
  %922 = vrot.lane.b32.xlu0 %v912, 87
  %v923 = vpop.permute.xlu0 %922
  %924 = vrot.lane.b32.xlu0 %v913, 87
  %v925 = vpop.permute.xlu0 %924
  %v926 = vsel %vm294, %v919, %v921
  %v927 = vsel %vm294, %v921, %v923
  %v928 = vsel %vm294, %v923, %v925
  %932 = vst [vmem:[#allocation4 + $0x180] sm:$0xff] %v926
  %933 = vst [vmem:[#allocation4 + $0x188] sm:$0xff] %v927
  %934 = vst [vmem:[#allocation4 + $0x190] sm:$0xff] %v928
  %v935 = vld [vmem:[%s527 + $0x30] sm:$0xff]
  %v936 = vld [vmem:[%s527 + $0x38] sm:$0xff]
  %v937 = vld [vmem:[%s527 + $0x40] sm:$0xff]
  %v938 = vld [vmem:[%s527 + $0x48] sm:$0xff]
  %943 = vrot.lane.b32.xlu0 %v935, 87
  %v944 = vpop.permute.xlu0 %943
  %945 = vrot.lane.b32.xlu0 %v936, 87
  %v946 = vpop.permute.xlu0 %945
  %947 = vrot.lane.b32.xlu0 %v937, 87
  %v948 = vpop.permute.xlu0 %947
  %949 = vrot.lane.b32.xlu0 %v938, 87
  %v950 = vpop.permute.xlu0 %949
  %v951 = vsel %vm294, %v944, %v946
  %v952 = vsel %vm294, %v946, %v948
  %v953 = vsel %vm294, %v948, %v950
  %957 = vst [vmem:[#allocation4 + $0x198] sm:$0xff] %v951
  %958 = vst [vmem:[#allocation4 + $0x1a0] sm:$0xff] %v952
  %959 = vst [vmem:[#allocation4 + $0x1a8] sm:$0xff] %v953
  %v960 = vld [vmem:[#allocation2 + $0x28] sm:$0xff]
  %v961 = vld [vmem:[#allocation2 + $0x30] sm:$0xff]
  %v962 = vld [vmem:[#allocation2 + $0x38] sm:$0xff]
  %v963 = vld [vmem:[#allocation2 + $0x40] sm:$0xff]
  %968 = vrot.lane.b32.xlu0 %v960, 82
  %v969 = vpop.permute.xlu0 %968
  %970 = vrot.lane.b32.xlu0 %v961, 82
  %v971 = vpop.permute.xlu0 %970
  %972 = vrot.lane.b32.xlu0 %v962, 82
  %v973 = vpop.permute.xlu0 %972
  %974 = vrot.lane.b32.xlu0 %v963, 82
  %v975 = vpop.permute.xlu0 %974
  %vm976 = vcmask 670720
  %v977 = vsel %vm976, %v969, %v971
  %v978 = vsel %vm976, %v971, %v973
  %v979 = vsel %vm976, %v973, %v975
  %983 = vst [vmem:[#allocation4 + $0x1b0] sm:$0xff] %v977
  %984 = vst [vmem:[#allocation4 + $0x1b8] sm:$0xff] %v978
  %985 = vst [vmem:[#allocation4 + $0x1c0] sm:$0xff] %v979
  %v986 = vld [vmem:[%s527 + $0x28] sm:$0xff]
  %v987 = vld [vmem:[%s527 + $0x30] sm:$0xff]
  %v988 = vld [vmem:[%s527 + $0x38] sm:$0xff]
  %v989 = vld [vmem:[%s527 + $0x40] sm:$0xff]
  %994 = vrot.lane.b32.xlu0 %v986, 82
  %v995 = vpop.permute.xlu0 %994
  %996 = vrot.lane.b32.xlu0 %v987, 82
  %v997 = vpop.permute.xlu0 %996
  %998 = vrot.lane.b32.xlu0 %v988, 82
  %v999 = vpop.permute.xlu0 %998
  %1000 = vrot.lane.b32.xlu0 %v989, 82
  %v1001 = vpop.permute.xlu0 %1000
  %v1002 = vsel %vm976, %v995, %v997
  %v1003 = vsel %vm976, %v997, %v999
  %v1004 = vsel %vm976, %v999, %v1001
  %1008 = vst [vmem:[#allocation4 + $0x1c8] sm:$0xff] %v1002
  %1009 = vst [vmem:[#allocation4 + $0x1d0] sm:$0xff] %v1003
  %1010 = vst [vmem:[#allocation4 + $0x1d8] sm:$0xff] %v1004
  %v1011 = vld [vmem:[#allocation2 + $0x28] sm:$0xff]
  %v1012 = vld [vmem:[#allocation2 + $0x30] sm:$0xff]
  %v1013 = vld [vmem:[#allocation2 + $0x38] sm:$0xff]
  %v1014 = vld [vmem:[#allocation2 + $0x40] sm:$0xff]
  %1019 = vrot.lane.b32.xlu0 %v1011, 80
  %v1020 = vpop.permute.xlu0 %1019
  %1021 = vrot.lane.b32.xlu0 %v1012, 80
  %v1022 = vpop.permute.xlu0 %1021
  %1023 = vrot.lane.b32.xlu0 %v1013, 80
  %v1024 = vpop.permute.xlu0 %1023
  %1025 = vrot.lane.b32.xlu0 %v1014, 80
  %v1026 = vpop.permute.xlu0 %1025
  %vm1027 = vcmask 654336
  %v1028 = vsel %vm1027, %v1020, %v1022
  %v1029 = vsel %vm1027, %v1022, %v1024
  %v1030 = vsel %vm1027, %v1024, %v1026
  %1034 = vst [vmem:[#allocation4 + $0x1e0] sm:$0xff] %v1028
  %1035 = vst [vmem:[#allocation4 + $0x1e8] sm:$0xff] %v1029
  %1036 = vst [vmem:[#allocation4 + $0x1f0] sm:$0xff] %v1030
  %v1037 = vld [vmem:[%s527 + $0x28] sm:$0xff]
  %v1038 = vld [vmem:[%s527 + $0x30] sm:$0xff]
  %v1039 = vld [vmem:[%s527 + $0x38] sm:$0xff]
  %v1040 = vld [vmem:[%s527 + $0x40] sm:$0xff]
  %1045 = vrot.lane.b32.xlu0 %v1037, 80
  %v1046 = vpop.permute.xlu0 %1045
  %1047 = vrot.lane.b32.xlu0 %v1038, 80
  %v1048 = vpop.permute.xlu0 %1047
  %1049 = vrot.lane.b32.xlu0 %v1039, 80
  %v1050 = vpop.permute.xlu0 %1049
  %1051 = vrot.lane.b32.xlu0 %v1040, 80
  %v1052 = vpop.permute.xlu0 %1051
  %v1053 = vsel %vm1027, %v1046, %v1048
  %v1054 = vsel %vm1027, %v1048, %v1050
  %v1055 = vsel %vm1027, %v1050, %v1052
  %1059 = vst [vmem:[#allocation4 + $0x1f8] sm:$0xff] %v1053
  %1060 = vst [vmem:[#allocation4 + $0x200] sm:$0xff] %v1054
  %1061 = vst [vmem:[#allocation4 + $0x208] sm:$0xff] %v1055
  %v1062 = vld [vmem:[#allocation2 + $0x28] sm:$0xff]
  %v1063 = vld [vmem:[#allocation2 + $0x30] sm:$0xff]
  %v1064 = vld [vmem:[#allocation2 + $0x38] sm:$0xff]
  %v1065 = vld [vmem:[#allocation2 + $0x40] sm:$0xff]
  %1070 = vrot.lane.b32.xlu0 %v1062, 78
  %v1071 = vpop.permute.xlu0 %1070
  %1072 = vrot.lane.b32.xlu0 %v1063, 78
  %v1073 = vpop.permute.xlu0 %1072
  %1074 = vrot.lane.b32.xlu0 %v1064, 78
  %v1075 = vpop.permute.xlu0 %1074
  %1076 = vrot.lane.b32.xlu0 %v1065, 78
  %v1077 = vpop.permute.xlu0 %1076
  %vm1078 = vcmask 637952
  %v1079 = vsel %vm1078, %v1071, %v1073
  %v1080 = vsel %vm1078, %v1073, %v1075
  %v1081 = vsel %vm1078, %v1075, %v1077
  %1085 = vst [vmem:[#allocation4 + $0x210] sm:$0xff] %v1079
  %1086 = vst [vmem:[#allocation4 + $0x218] sm:$0xff] %v1080
  %1087 = vst [vmem:[#allocation4 + $0x220] sm:$0xff] %v1081
  %v1088 = vld [vmem:[%s527 + $0x28] sm:$0xff]
  %v1089 = vld [vmem:[%s527 + $0x30] sm:$0xff]
  %v1090 = vld [vmem:[%s527 + $0x38] sm:$0xff]
  %v1091 = vld [vmem:[%s527 + $0x40] sm:$0xff]
  %1096 = vrot.lane.b32.xlu0 %v1088, 78
  %v1097 = vpop.permute.xlu0 %1096
  %1098 = vrot.lane.b32.xlu0 %v1089, 78
  %v1099 = vpop.permute.xlu0 %1098
  %1100 = vrot.lane.b32.xlu0 %v1090, 78
  %v1101 = vpop.permute.xlu0 %1100
  %1102 = vrot.lane.b32.xlu0 %v1091, 78
  %v1103 = vpop.permute.xlu0 %1102
  %v1104 = vsel %vm1078, %v1097, %v1099
  %v1105 = vsel %vm1078, %v1099, %v1101
  %v1106 = vsel %vm1078, %v1101, %v1103
  %1110 = vst [vmem:[#allocation4 + $0x228] sm:$0xff] %v1104
  %1111 = vst [vmem:[#allocation4 + $0x230] sm:$0xff] %v1105
  %1112 = vst [vmem:[#allocation4 + $0x238] sm:$0xff] %v1106
  %v1113 = vld [vmem:[#allocation2 + $0x28] sm:$0xff]
  %v1114 = vld [vmem:[#allocation2 + $0x30] sm:$0xff]
  %v1115 = vld [vmem:[#allocation2 + $0x38] sm:$0xff]
  %v1116 = vld [vmem:[#allocation2 + $0x40] sm:$0xff]
  %1121 = vrot.lane.b32.xlu0 %v1113, 2
  %v1122 = vpop.permute.xlu0 %1121
  %1123 = vrot.lane.b32.xlu0 %v1114, 2
  %v1124 = vpop.permute.xlu0 %1123
  %1125 = vrot.lane.b32.xlu0 %v1115, 2
  %v1126 = vpop.permute.xlu0 %1125
  %1127 = vrot.lane.b32.xlu0 %v1116, 2
  %v1128 = vpop.permute.xlu0 %1127
  %vm1129 = vcmask 15360
  %v1130 = vsel %vm1129, %v1122, %v1124
  %v1131 = vsel %vm1129, %v1124, %v1126
  %v1132 = vsel %vm1129, %v1126, %v1128
  %1136 = vst [vmem:[#allocation4 + $0x240] sm:$0xff] %v1130
  %1137 = vst [vmem:[#allocation4 + $0x248] sm:$0xff] %v1131
  %1138 = vst [vmem:[#allocation4 + $0x250] sm:$0xff] %v1132
  %v1139 = vld [vmem:[%s527 + $0x28] sm:$0xff]
  %v1140 = vld [vmem:[%s527 + $0x30] sm:$0xff]
  %v1141 = vld [vmem:[%s527 + $0x38] sm:$0xff]
  %v1142 = vld [vmem:[%s527 + $0x40] sm:$0xff]
  %1147 = vrot.lane.b32.xlu0 %v1139, 2
  %v1148 = vpop.permute.xlu0 %1147
  %1149 = vrot.lane.b32.xlu0 %v1140, 2
  %v1150 = vpop.permute.xlu0 %1149
  %1151 = vrot.lane.b32.xlu0 %v1141, 2
  %v1152 = vpop.permute.xlu0 %1151
  %1153 = vrot.lane.b32.xlu0 %v1142, 2
  %v1154 = vpop.permute.xlu0 %1153
  %v1155 = vsel %vm1129, %v1148, %v1150
  %v1156 = vsel %vm1129, %v1150, %v1152
  %v1157 = vsel %vm1129, %v1152, %v1154
  %1161 = vst [vmem:[#allocation4 + $0x258] sm:$0xff] %v1155
  %1162 = vst [vmem:[#allocation4 + $0x260] sm:$0xff] %v1156
  %1163 = vst [vmem:[#allocation4 + $0x268] sm:$0xff] %v1157
  %v1164 = vld [vmem:[#allocation2 + $0x30] sm:$0xff]
  %v1165 = vld [vmem:[#allocation2 + $0x38] sm:$0xff]
  %v1166 = vld [vmem:[#allocation2 + $0x40] sm:$0xff]
  %1167 = vst [vmem:[#allocation4 + $0x270] sm:$0xff] %v1164
  %1168 = vst [vmem:[#allocation4 + $0x278] sm:$0xff] %v1165
  %1169 = vst [vmem:[#allocation4 + $0x280] sm:$0xff] %v1166
  %v1170 = vld [vmem:[%s527 + $0x30] sm:$0xff]
  %v1171 = vld [vmem:[%s527 + $0x38] sm:$0xff]
  %v1172 = vld [vmem:[%s527 + $0x40] sm:$0xff]
  %1173 = vst [vmem:[#allocation4 + $0x288] sm:$0xff] %v1170
  %1174 = vst [vmem:[#allocation4 + $0x290] sm:$0xff] %v1171
  %1175 = vst [vmem:[#allocation4 + $0x298] sm:$0xff] %v1172
  %v1176 = vld [vmem:[#allocation2 + $0x30] sm:$0xff]
  %v1177 = vld [vmem:[#allocation2 + $0x38] sm:$0xff]
  %v1178 = vld [vmem:[#allocation2 + $0x40] sm:$0xff]
  %v1179 = vld [vmem:[#allocation2 + $0x48] sm:$0xff]
  %1184 = vrot.lane.b32.xlu0 %v1176, 126
  %v1185 = vpop.permute.xlu0 %1184
  %1186 = vrot.lane.b32.xlu0 %v1177, 126
  %v1187 = vpop.permute.xlu0 %1186
  %1188 = vrot.lane.b32.xlu0 %v1178, 126
  %v1189 = vpop.permute.xlu0 %1188
  %1190 = vrot.lane.b32.xlu0 %v1179, 126
  %v1191 = vpop.permute.xlu0 %1190
  %vm1192 = vcmask 1031168
  %v1193 = vsel %vm1192, %v1185, %v1187
  %v1194 = vsel %vm1192, %v1187, %v1189
  %v1195 = vsel %vm1192, %v1189, %v1191
  %1199 = vst [vmem:[#allocation4 + $0x2a0] sm:$0xff] %v1193
  %1200 = vst [vmem:[#allocation4 + $0x2a8] sm:$0xff] %v1194
  %1201 = vst [vmem:[#allocation4 + $0x2b0] sm:$0xff] %v1195
  %v1202 = vld [vmem:[%s527 + $0x30] sm:$0xff]
  %v1203 = vld [vmem:[%s527 + $0x38] sm:$0xff]
  %v1204 = vld [vmem:[%s527 + $0x40] sm:$0xff]
  %v1205 = vld [vmem:[%s527 + $0x48] sm:$0xff]
  %1210 = vrot.lane.b32.xlu0 %v1202, 126
  %v1211 = vpop.permute.xlu0 %1210
  %1212 = vrot.lane.b32.xlu0 %v1203, 126
  %v1213 = vpop.permute.xlu0 %1212
  %1214 = vrot.lane.b32.xlu0 %v1204, 126
  %v1215 = vpop.permute.xlu0 %1214
  %1216 = vrot.lane.b32.xlu0 %v1205, 126
  %v1217 = vpop.permute.xlu0 %1216
  %v1218 = vsel %vm1192, %v1211, %v1213
  %v1219 = vsel %vm1192, %v1213, %v1215
  %v1220 = vsel %vm1192, %v1215, %v1217
  %1224 = vst [vmem:[#allocation4 + $0x2b8] sm:$0xff] %v1218
  %1225 = vst [vmem:[#allocation4 + $0x2c0] sm:$0xff] %v1219
  %1226 = vst [vmem:[#allocation4 + $0x2c8] sm:$0xff] %v1220
  %v1227 = vld [vmem:[#allocation2 + $0x30] sm:$0xff]
  %v1228 = vld [vmem:[#allocation2 + $0x38] sm:$0xff]
  %v1229 = vld [vmem:[#allocation2 + $0x40] sm:$0xff]
  %v1230 = vld [vmem:[#allocation2 + $0x48] sm:$0xff]
  %1235 = vrot.lane.b32.xlu0 %v1227, 50
  %v1236 = vpop.permute.xlu0 %1235
  %1237 = vrot.lane.b32.xlu0 %v1228, 50
  %v1238 = vpop.permute.xlu0 %1237
  %1239 = vrot.lane.b32.xlu0 %v1229, 50
  %v1240 = vpop.permute.xlu0 %1239
  %1241 = vrot.lane.b32.xlu0 %v1230, 50
  %v1242 = vpop.permute.xlu0 %1241
  %vm1243 = vcmask 408576
  %v1244 = vsel %vm1243, %v1236, %v1238
  %v1245 = vsel %vm1243, %v1238, %v1240
  %v1246 = vsel %vm1243, %v1240, %v1242
  %1250 = vst [vmem:[#allocation4 + $0x2d0] sm:$0xff] %v1244
  %1251 = vst [vmem:[#allocation4 + $0x2d8] sm:$0xff] %v1245
  %1252 = vst [vmem:[#allocation4 + $0x2e0] sm:$0xff] %v1246
  %v1253 = vld [vmem:[%s527 + $0x30] sm:$0xff]
  %v1254 = vld [vmem:[%s527 + $0x38] sm:$0xff]
  %v1255 = vld [vmem:[%s527 + $0x40] sm:$0xff]
  %v1256 = vld [vmem:[%s527 + $0x48] sm:$0xff]
  %1261 = vrot.lane.b32.xlu0 %v1253, 50
  %v1262 = vpop.permute.xlu0 %1261
  %1263 = vrot.lane.b32.xlu0 %v1254, 50
  %v1264 = vpop.permute.xlu0 %1263
  %1265 = vrot.lane.b32.xlu0 %v1255, 50
  %v1266 = vpop.permute.xlu0 %1265
  %1267 = vrot.lane.b32.xlu0 %v1256, 50
  %v1268 = vpop.permute.xlu0 %1267
  %v1269 = vsel %vm1243, %v1262, %v1264
  %v1270 = vsel %vm1243, %v1264, %v1266
  %v1271 = vsel %vm1243, %v1266, %v1268
  %1275 = vst [vmem:[#allocation4 + $0x2e8] sm:$0xff] %v1269
  %1276 = vst [vmem:[#allocation4 + $0x2f0] sm:$0xff] %v1270
  %1277 = vst [vmem:[#allocation4 + $0x2f8] sm:$0xff] %v1271
  %v1278 = vld [vmem:[#allocation2 + $0x30] sm:$0xff]
  %v1279 = vld [vmem:[#allocation2 + $0x38] sm:$0xff]
  %v1280 = vld [vmem:[#allocation2 + $0x40] sm:$0xff]
  %v1281 = vld [vmem:[#allocation2 + $0x48] sm:$0xff]
  %1286 = vrot.lane.b32.xlu0 %v1278, 48
  %v1287 = vpop.permute.xlu0 %1286
  %1288 = vrot.lane.b32.xlu0 %v1279, 48
  %v1289 = vpop.permute.xlu0 %1288
  %1290 = vrot.lane.b32.xlu0 %v1280, 48
  %v1291 = vpop.permute.xlu0 %1290
  %1292 = vrot.lane.b32.xlu0 %v1281, 48
  %v1293 = vpop.permute.xlu0 %1292
  %vm1294 = vcmask 392192
  %v1295 = vsel %vm1294, %v1287, %v1289
  %v1296 = vsel %vm1294, %v1289, %v1291
  %v1297 = vsel %vm1294, %v1291, %v1293
  %1301 = vst [vmem:[#allocation4 + $0x300] sm:$0xff] %v1295
  %1302 = vst [vmem:[#allocation4 + $0x308] sm:$0xff] %v1296
  %1303 = vst [vmem:[#allocation4 + $0x310] sm:$0xff] %v1297
  %v1304 = vld [vmem:[%s527 + $0x30] sm:$0xff]
  %v1305 = vld [vmem:[%s527 + $0x38] sm:$0xff]
  %v1306 = vld [vmem:[%s527 + $0x40] sm:$0xff]
  %v1307 = vld [vmem:[%s527 + $0x48] sm:$0xff]
  %1312 = vrot.lane.b32.xlu0 %v1304, 48
  %v1313 = vpop.permute.xlu0 %1312
  %1314 = vrot.lane.b32.xlu0 %v1305, 48
  %v1315 = vpop.permute.xlu0 %1314
  %1316 = vrot.lane.b32.xlu0 %v1306, 48
  %v1317 = vpop.permute.xlu0 %1316
  %1318 = vrot.lane.b32.xlu0 %v1307, 48
  %v1319 = vpop.permute.xlu0 %1318
  %v1320 = vsel %vm1294, %v1313, %v1315
  %v1321 = vsel %vm1294, %v1315, %v1317
  %v1322 = vsel %vm1294, %v1317, %v1319
  %1326 = vst [vmem:[#allocation4 + $0x318] sm:$0xff] %v1320
  %1327 = vst [vmem:[#allocation4 + $0x320] sm:$0xff] %v1321
  %1328 = vst [vmem:[#allocation4 + $0x328] sm:$0xff] %v1322
  %v1329 = vld [vmem:[#allocation2 + $0x30] sm:$0xff]
  %v1330 = vld [vmem:[#allocation2 + $0x38] sm:$0xff]
  %v1331 = vld [vmem:[#allocation2 + $0x40] sm:$0xff]
  %v1332 = vld [vmem:[#allocation2 + $0x48] sm:$0xff]
  %1337 = vrot.lane.b32.xlu0 %v1329, 46
  %v1338 = vpop.permute.xlu0 %1337
  %1339 = vrot.lane.b32.xlu0 %v1330, 46
  %v1340 = vpop.permute.xlu0 %1339
  %1341 = vrot.lane.b32.xlu0 %v1331, 46
  %v1342 = vpop.permute.xlu0 %1341
  %1343 = vrot.lane.b32.xlu0 %v1332, 46
  %v1344 = vpop.permute.xlu0 %1343
  %vm1345 = vcmask 375808
  %v1346 = vsel %vm1345, %v1338, %v1340
  %v1347 = vsel %vm1345, %v1340, %v1342
  %v1348 = vsel %vm1345, %v1342, %v1344
  %1352 = vst [vmem:[#allocation4 + $0x330] sm:$0xff] %v1346
  %1353 = vst [vmem:[#allocation4 + $0x338] sm:$0xff] %v1347
  %1354 = vst [vmem:[#allocation4 + $0x340] sm:$0xff] %v1348
  %v1355 = vld [vmem:[%s527 + $0x30] sm:$0xff]
  %v1356 = vld [vmem:[%s527 + $0x38] sm:$0xff]
  %v1357 = vld [vmem:[%s527 + $0x40] sm:$0xff]
  %v1358 = vld [vmem:[%s527 + $0x48] sm:$0xff]
  %1363 = vrot.lane.b32.xlu0 %v1355, 46
  %v1364 = vpop.permute.xlu0 %1363
  %1365 = vrot.lane.b32.xlu0 %v1356, 46
  %v1366 = vpop.permute.xlu0 %1365
  %1367 = vrot.lane.b32.xlu0 %v1357, 46
  %v1368 = vpop.permute.xlu0 %1367
  %1369 = vrot.lane.b32.xlu0 %v1358, 46
  %v1370 = vpop.permute.xlu0 %1369
  %v1371 = vsel %vm1345, %v1364, %v1366
  %v1372 = vsel %vm1345, %v1366, %v1368
  %v1373 = vsel %vm1345, %v1368, %v1370
  %1377 = vst [vmem:[#allocation4 + $0x348] sm:$0xff] %v1371
  %1378 = vst [vmem:[#allocation4 + $0x350] sm:$0xff] %v1372
  %1379 = vst [vmem:[#allocation4 + $0x358] sm:$0xff] %v1373
  %v1380 = vld [vmem:[#allocation2 + $0x20] sm:$0xff]
  %v1381 = vld [vmem:[#allocation2 + $0x28] sm:$0xff]
  %v1382 = vld [vmem:[#allocation2 + $0x30] sm:$0xff]
  %v1383 = vld [vmem:[#allocation2 + $0x38] sm:$0xff]
  %1388 = vrot.lane.b32.xlu0 %v1380, 36
  %v1389 = vpop.permute.xlu0 %1388
  %1390 = vrot.lane.b32.xlu0 %v1381, 36
  %v1391 = vpop.permute.xlu0 %1390
  %1392 = vrot.lane.b32.xlu0 %v1382, 36
  %v1393 = vpop.permute.xlu0 %1392
  %1394 = vrot.lane.b32.xlu0 %v1383, 36
  %v1395 = vpop.permute.xlu0 %1394
  %vm1396 = vcmask 293888
  %v1397 = vsel %vm1396, %v1389, %v1391
  %v1398 = vsel %vm1396, %v1391, %v1393
  %v1399 = vsel %vm1396, %v1393, %v1395
  %1403 = vst [vmem:[#allocation4 + $0x360] sm:$0xff] %v1397
  %1404 = vst [vmem:[#allocation4 + $0x368] sm:$0xff] %v1398
  %1405 = vst [vmem:[#allocation4 + $0x370] sm:$0xff] %v1399
  %v1406 = vld [vmem:[%s527 + $0x20] sm:$0xff]
  %v1407 = vld [vmem:[%s527 + $0x28] sm:$0xff]
  %v1408 = vld [vmem:[%s527 + $0x30] sm:$0xff]
  %v1409 = vld [vmem:[%s527 + $0x38] sm:$0xff]
  %1414 = vrot.lane.b32.xlu0 %v1406, 36
  %v1415 = vpop.permute.xlu0 %1414
  %1416 = vrot.lane.b32.xlu0 %v1407, 36
  %v1417 = vpop.permute.xlu0 %1416
  %1418 = vrot.lane.b32.xlu0 %v1408, 36
  %v1419 = vpop.permute.xlu0 %1418
  %1420 = vrot.lane.b32.xlu0 %v1409, 36
  %v1421 = vpop.permute.xlu0 %1420
  %v1422 = vsel %vm1396, %v1415, %v1417
  %v1423 = vsel %vm1396, %v1417, %v1419
  %v1424 = vsel %vm1396, %v1419, %v1421
  %1428 = vst [vmem:[#allocation4 + $0x378] sm:$0xff] %v1422
  %1429 = vst [vmem:[#allocation4 + $0x380] sm:$0xff] %v1423
  %1430 = vst [vmem:[#allocation4 + $0x388] sm:$0xff] %v1424
  %v1431 = vld [vmem:[#allocation2 + $0x20] sm:$0xff]
  %v1432 = vld [vmem:[#allocation2 + $0x28] sm:$0xff]
  %v1433 = vld [vmem:[#allocation2 + $0x30] sm:$0xff]
  %v1434 = vld [vmem:[#allocation2 + $0x38] sm:$0xff]
  %1439 = vrot.lane.b32.xlu0 %v1431, 32
  %v1440 = vpop.permute.xlu0 %1439
  %1441 = vrot.lane.b32.xlu0 %v1432, 32
  %v1442 = vpop.permute.xlu0 %1441
  %1443 = vrot.lane.b32.xlu0 %v1433, 32
  %v1444 = vpop.permute.xlu0 %1443
  %1445 = vrot.lane.b32.xlu0 %v1434, 32
  %v1446 = vpop.permute.xlu0 %1445
  %vm1447 = vcmask 261120
  %v1448 = vsel %vm1447, %v1440, %v1442
  %v1449 = vsel %vm1447, %v1442, %v1444
  %v1450 = vsel %vm1447, %v1444, %v1446
  %1454 = vst [vmem:[#allocation4 + $0x390] sm:$0xff] %v1448
  %1455 = vst [vmem:[#allocation4 + $0x398] sm:$0xff] %v1449
  %1456 = vst [vmem:[#allocation4 + $0x3a0] sm:$0xff] %v1450
  %v1457 = vld [vmem:[%s527 + $0x20] sm:$0xff]
  %v1458 = vld [vmem:[%s527 + $0x28] sm:$0xff]
  %v1459 = vld [vmem:[%s527 + $0x30] sm:$0xff]
  %v1460 = vld [vmem:[%s527 + $0x38] sm:$0xff]
  %1465 = vrot.lane.b32.xlu0 %v1457, 32
  %v1466 = vpop.permute.xlu0 %1465
  %1467 = vrot.lane.b32.xlu0 %v1458, 32
  %v1468 = vpop.permute.xlu0 %1467
  %1469 = vrot.lane.b32.xlu0 %v1459, 32
  %v1470 = vpop.permute.xlu0 %1469
  %1471 = vrot.lane.b32.xlu0 %v1460, 32
  %v1472 = vpop.permute.xlu0 %1471
  %v1473 = vsel %vm1447, %v1466, %v1468
  %v1474 = vsel %vm1447, %v1468, %v1470
  %v1475 = vsel %vm1447, %v1470, %v1472
  %1479 = vst [vmem:[#allocation4 + $0x3a8] sm:$0xff] %v1473
  %1480 = vst [vmem:[#allocation4 + $0x3b0] sm:$0xff] %v1474
  %1481 = vst [vmem:[#allocation4 + $0x3b8] sm:$0xff] %v1475
  %v1482 = vld [vmem:[#allocation2 + $0x20] sm:$0xff]
  %v1483 = vld [vmem:[#allocation2 + $0x28] sm:$0xff]
  %v1484 = vld [vmem:[#allocation2 + $0x30] sm:$0xff]
  %v1485 = vld [vmem:[#allocation2 + $0x38] sm:$0xff]
  %1490 = vrot.lane.b32.xlu0 %v1482, 28
  %v1491 = vpop.permute.xlu0 %1490
  %1492 = vrot.lane.b32.xlu0 %v1483, 28
  %v1493 = vpop.permute.xlu0 %1492
  %1494 = vrot.lane.b32.xlu0 %v1484, 28
  %v1495 = vpop.permute.xlu0 %1494
  %1496 = vrot.lane.b32.xlu0 %v1485, 28
  %v1497 = vpop.permute.xlu0 %1496
  %vm1498 = vcmask 228352
  %v1499 = vsel %vm1498, %v1491, %v1493
  %v1500 = vsel %vm1498, %v1493, %v1495
  %v1501 = vsel %vm1498, %v1495, %v1497
  %1505 = vst [vmem:[#allocation4 + $0x3c0] sm:$0xff] %v1499
  %1506 = vst [vmem:[#allocation4 + $0x3c8] sm:$0xff] %v1500
  %1507 = vst [vmem:[#allocation4 + $0x3d0] sm:$0xff] %v1501
  %v1508 = vld [vmem:[%s527 + $0x20] sm:$0xff]
  %v1509 = vld [vmem:[%s527 + $0x28] sm:$0xff]
  %v1510 = vld [vmem:[%s527 + $0x30] sm:$0xff]
  %v1511 = vld [vmem:[%s527 + $0x38] sm:$0xff]
  %1516 = vrot.lane.b32.xlu0 %v1508, 28
  %v1517 = vpop.permute.xlu0 %1516
  %1518 = vrot.lane.b32.xlu0 %v1509, 28
  %v1519 = vpop.permute.xlu0 %1518
  %1520 = vrot.lane.b32.xlu0 %v1510, 28
  %v1521 = vpop.permute.xlu0 %1520
  %1522 = vrot.lane.b32.xlu0 %v1511, 28
  %v1523 = vpop.permute.xlu0 %1522
  %v1524 = vsel %vm1498, %v1517, %v1519
  %v1525 = vsel %vm1498, %v1519, %v1521
  %v1526 = vsel %vm1498, %v1521, %v1523
  %1530 = vst [vmem:[#allocation4 + $0x3d8] sm:$0xff] %v1524
  %1531 = vst [vmem:[#allocation4 + $0x3e0] sm:$0xff] %v1525
  %1532 = vst [vmem:[#allocation4 + $0x3e8] sm:$0xff] %v1526
  %v1533 = vld [vmem:[#allocation2 + $0x28] sm:$0xff]
  %v1534 = vld [vmem:[#allocation2 + $0x30] sm:$0xff]
  %v1535 = vld [vmem:[#allocation2 + $0x38] sm:$0xff]
  %v1536 = vld [vmem:[#allocation2 + $0x40] sm:$0xff]
  %1541 = vrot.lane.b32.xlu0 %v1533, 4
  %v1542 = vpop.permute.xlu0 %1541
  %1543 = vrot.lane.b32.xlu0 %v1534, 4
  %v1544 = vpop.permute.xlu0 %1543
  %1545 = vrot.lane.b32.xlu0 %v1535, 4
  %v1546 = vpop.permute.xlu0 %1545
  %1547 = vrot.lane.b32.xlu0 %v1536, 4
  %v1548 = vpop.permute.xlu0 %1547
  %vm1549 = vcmask 31744
  %v1550 = vsel %vm1549, %v1542, %v1544
  %v1551 = vsel %vm1549, %v1544, %v1546
  %v1552 = vsel %vm1549, %v1546, %v1548
  %1556 = vst [vmem:[#allocation4 + $0x3f0] sm:$0xff] %v1550
  %1557 = vst [vmem:[#allocation4 + $0x3f8] sm:$0xff] %v1551
  %1558 = vst [vmem:[#allocation4 + $0x400] sm:$0xff] %v1552
  %v1559 = vld [vmem:[%s527 + $0x28] sm:$0xff]
  %v1560 = vld [vmem:[%s527 + $0x30] sm:$0xff]
  %v1561 = vld [vmem:[%s527 + $0x38] sm:$0xff]
  %v1562 = vld [vmem:[%s527 + $0x40] sm:$0xff]
  %1567 = vrot.lane.b32.xlu0 %v1559, 4
  %v1568 = vpop.permute.xlu0 %1567
  %1569 = vrot.lane.b32.xlu0 %v1560, 4
  %v1570 = vpop.permute.xlu0 %1569
  %1571 = vrot.lane.b32.xlu0 %v1561, 4
  %v1572 = vpop.permute.xlu0 %1571
  %1573 = vrot.lane.b32.xlu0 %v1562, 4
  %v1574 = vpop.permute.xlu0 %1573
  %v1575 = vsel %vm1549, %v1568, %v1570
  %v1576 = vsel %vm1549, %v1570, %v1572
  %v1577 = vsel %vm1549, %v1572, %v1574
  %1581 = vst [vmem:[#allocation4 + $0x408] sm:$0xff] %v1575
  %1582 = vst [vmem:[#allocation4 + $0x410] sm:$0xff] %v1576
  %1583 = vst [vmem:[#allocation4 + $0x418] sm:$0xff] %v1577
  %v1584 = vld [vmem:[#allocation2 + $0x30] sm:$0xff]
  %v1585 = vld [vmem:[#allocation2 + $0x38] sm:$0xff]
  %v1586 = vld [vmem:[#allocation2 + $0x40] sm:$0xff]
  %1587 = vst [vmem:[#allocation4 + $0x420] sm:$0xff] %v1584
  %1588 = vst [vmem:[#allocation4 + $0x428] sm:$0xff] %v1585
  %1589 = vst [vmem:[#allocation4 + $0x430] sm:$0xff] %v1586
  %v1590 = vld [vmem:[%s527 + $0x30] sm:$0xff]
  %v1591 = vld [vmem:[%s527 + $0x38] sm:$0xff]
  %v1592 = vld [vmem:[%s527 + $0x40] sm:$0xff]
  %1593 = vst [vmem:[#allocation4 + $0x438] sm:$0xff] %v1590
  %1594 = vst [vmem:[#allocation4 + $0x440] sm:$0xff] %v1591
  %1595 = vst [vmem:[#allocation4 + $0x448] sm:$0xff] %v1592
  %v1596 = vld [vmem:[#allocation2 + $0x30] sm:$0xff]
  %v1597 = vld [vmem:[#allocation2 + $0x38] sm:$0xff]
  %v1598 = vld [vmem:[#allocation2 + $0x40] sm:$0xff]
  %v1599 = vld [vmem:[#allocation2 + $0x48] sm:$0xff]
  %1604 = vrot.lane.b32.xlu0 %v1596, 124
  %v1605 = vpop.permute.xlu0 %1604
  %1606 = vrot.lane.b32.xlu0 %v1597, 124
  %v1607 = vpop.permute.xlu0 %1606
  %1608 = vrot.lane.b32.xlu0 %v1598, 124
  %v1609 = vpop.permute.xlu0 %1608
  %1610 = vrot.lane.b32.xlu0 %v1599, 124
  %v1611 = vpop.permute.xlu0 %1610
  %vm1612 = vcmask 1014784
  %v1613 = vsel %vm1612, %v1605, %v1607
  %v1614 = vsel %vm1612, %v1607, %v1609
  %v1615 = vsel %vm1612, %v1609, %v1611
  %1619 = vst [vmem:[#allocation4 + $0x450] sm:$0xff] %v1613
  %1620 = vst [vmem:[#allocation4 + $0x458] sm:$0xff] %v1614
  %1621 = vst [vmem:[#allocation4 + $0x460] sm:$0xff] %v1615
  %v1622 = vld [vmem:[%s527 + $0x30] sm:$0xff]
  %v1623 = vld [vmem:[%s527 + $0x38] sm:$0xff]
  %v1624 = vld [vmem:[%s527 + $0x40] sm:$0xff]
  %v1625 = vld [vmem:[%s527 + $0x48] sm:$0xff]
  %1630 = vrot.lane.b32.xlu0 %v1622, 124
  %v1631 = vpop.permute.xlu0 %1630
  %1632 = vrot.lane.b32.xlu0 %v1623, 124
  %v1633 = vpop.permute.xlu0 %1632
  %1634 = vrot.lane.b32.xlu0 %v1624, 124
  %v1635 = vpop.permute.xlu0 %1634
  %1636 = vrot.lane.b32.xlu0 %v1625, 124
  %v1637 = vpop.permute.xlu0 %1636
  %v1638 = vsel %vm1612, %v1631, %v1633
  %v1639 = vsel %vm1612, %v1633, %v1635
  %v1640 = vsel %vm1612, %v1635, %v1637
  %1644 = vst [vmem:[#allocation4 + $0x468] sm:$0xff] %v1638
  %1645 = vst [vmem:[#allocation4 + $0x470] sm:$0xff] %v1639
  %1646 = vst [vmem:[#allocation4 + $0x478] sm:$0xff] %v1640
  %v1647 = vld [vmem:[#allocation2 + $0x38] sm:$0xff]
  %v1648 = vld [vmem:[#allocation2 + $0x40] sm:$0xff]
  %v1649 = vld [vmem:[#allocation2 + $0x48] sm:$0xff]
  %v1650 = vld [vmem:[#allocation2 + $0x50] sm:$0xff]
  %1655 = vrot.lane.b32.xlu0 %v1647, 100
  %v1656 = vpop.permute.xlu0 %1655
  %1657 = vrot.lane.b32.xlu0 %v1648, 100
  %v1658 = vpop.permute.xlu0 %1657
  %1659 = vrot.lane.b32.xlu0 %v1649, 100
  %v1660 = vpop.permute.xlu0 %1659
  %1661 = vrot.lane.b32.xlu0 %v1650, 100
  %v1662 = vpop.permute.xlu0 %1661
  %vm1663 = vcmask 818176
  %v1664 = vsel %vm1663, %v1656, %v1658
  %v1665 = vsel %vm1663, %v1658, %v1660
  %v1666 = vsel %vm1663, %v1660, %v1662
  %1670 = vst [vmem:[#allocation4 + $0x480] sm:$0xff] %v1664
  %1671 = vst [vmem:[#allocation4 + $0x488] sm:$0xff] %v1665
  %1672 = vst [vmem:[#allocation4 + $0x490] sm:$0xff] %v1666
  %v1673 = vld [vmem:[%s527 + $0x38] sm:$0xff]
  %v1674 = vld [vmem:[%s527 + $0x40] sm:$0xff]
  %v1675 = vld [vmem:[%s527 + $0x48] sm:$0xff]
  %v1676 = vld [vmem:[%s527 + $0x50] sm:$0xff]
  %1681 = vrot.lane.b32.xlu0 %v1673, 100
  %v1682 = vpop.permute.xlu0 %1681
  %1683 = vrot.lane.b32.xlu0 %v1674, 100
  %v1684 = vpop.permute.xlu0 %1683
  %1685 = vrot.lane.b32.xlu0 %v1675, 100
  %v1686 = vpop.permute.xlu0 %1685
  %1687 = vrot.lane.b32.xlu0 %v1676, 100
  %v1688 = vpop.permute.xlu0 %1687
  %v1689 = vsel %vm1663, %v1682, %v1684
  %v1690 = vsel %vm1663, %v1684, %v1686
  %v1691 = vsel %vm1663, %v1686, %v1688
  %1695 = vst [vmem:[#allocation4 + $0x498] sm:$0xff] %v1689
  %1696 = vst [vmem:[#allocation4 + $0x4a0] sm:$0xff] %v1690
  %1697 = vst [vmem:[#allocation4 + $0x4a8] sm:$0xff] %v1691
  %v1698 = vld [vmem:[#allocation2 + $0x38] sm:$0xff]
  %v1699 = vld [vmem:[#allocation2 + $0x40] sm:$0xff]
  %v1700 = vld [vmem:[#allocation2 + $0x48] sm:$0xff]
  %v1701 = vld [vmem:[#allocation2 + $0x50] sm:$0xff]
  %1706 = vrot.lane.b32.xlu0 %v1698, 96
  %v1707 = vpop.permute.xlu0 %1706
  %1708 = vrot.lane.b32.xlu0 %v1699, 96
  %v1709 = vpop.permute.xlu0 %1708
  %1710 = vrot.lane.b32.xlu0 %v1700, 96
  %v1711 = vpop.permute.xlu0 %1710
  %1712 = vrot.lane.b32.xlu0 %v1701, 96
  %v1713 = vpop.permute.xlu0 %1712
  %vm1714 = vcmask 785408
  %v1715 = vsel %vm1714, %v1707, %v1709
  %v1716 = vsel %vm1714, %v1709, %v1711
  %v1717 = vsel %vm1714, %v1711, %v1713
  %1721 = vst [vmem:[#allocation4 + $0x4b0] sm:$0xff] %v1715
  %1722 = vst [vmem:[#allocation4 + $0x4b8] sm:$0xff] %v1716
  %1723 = vst [vmem:[#allocation4 + $0x4c0] sm:$0xff] %v1717
  %v1724 = vld [vmem:[%s527 + $0x38] sm:$0xff]
  %v1725 = vld [vmem:[%s527 + $0x40] sm:$0xff]
  %v1726 = vld [vmem:[%s527 + $0x48] sm:$0xff]
  %v1727 = vld [vmem:[%s527 + $0x50] sm:$0xff]
  %1732 = vrot.lane.b32.xlu0 %v1724, 96
  %v1733 = vpop.permute.xlu0 %1732
  %1734 = vrot.lane.b32.xlu0 %v1725, 96
  %v1735 = vpop.permute.xlu0 %1734
  %1736 = vrot.lane.b32.xlu0 %v1726, 96
  %v1737 = vpop.permute.xlu0 %1736
  %1738 = vrot.lane.b32.xlu0 %v1727, 96
  %v1739 = vpop.permute.xlu0 %1738
  %v1740 = vsel %vm1714, %v1733, %v1735
  %v1741 = vsel %vm1714, %v1735, %v1737
  %v1742 = vsel %vm1714, %v1737, %v1739
  %1746 = vst [vmem:[#allocation4 + $0x4c8] sm:$0xff] %v1740
  %1747 = vst [vmem:[#allocation4 + $0x4d0] sm:$0xff] %v1741
  %1748 = vst [vmem:[#allocation4 + $0x4d8] sm:$0xff] %v1742
  %v1749 = vld [vmem:[#allocation2 + $0x38] sm:$0xff]
  %v1750 = vld [vmem:[#allocation2 + $0x40] sm:$0xff]
  %v1751 = vld [vmem:[#allocation2 + $0x48] sm:$0xff]
  %v1752 = vld [vmem:[#allocation2 + $0x50] sm:$0xff]
  %1757 = vrot.lane.b32.xlu0 %v1749, 92
  %v1758 = vpop.permute.xlu0 %1757
  %1759 = vrot.lane.b32.xlu0 %v1750, 92
  %v1760 = vpop.permute.xlu0 %1759
  %1761 = vrot.lane.b32.xlu0 %v1751, 92
  %v1762 = vpop.permute.xlu0 %1761
  %1763 = vrot.lane.b32.xlu0 %v1752, 92
  %v1764 = vpop.permute.xlu0 %1763
  %vm1765 = vcmask 752640
  %v1766 = vsel %vm1765, %v1758, %v1760
  %v1767 = vsel %vm1765, %v1760, %v1762
  %v1768 = vsel %vm1765, %v1762, %v1764
  %1772 = vst [vmem:[#allocation4 + $0x4e0] sm:$0xff] %v1766
  %1773 = vst [vmem:[#allocation4 + $0x4e8] sm:$0xff] %v1767
  %1774 = vst [vmem:[#allocation4 + $0x4f0] sm:$0xff] %v1768
  %v1775 = vld [vmem:[%s527 + $0x38] sm:$0xff]
  %v1776 = vld [vmem:[%s527 + $0x40] sm:$0xff]
  %v1777 = vld [vmem:[%s527 + $0x48] sm:$0xff]
  %v1778 = vld [vmem:[%s527 + $0x50] sm:$0xff]
  %1783 = vrot.lane.b32.xlu0 %v1775, 92
  %v1784 = vpop.permute.xlu0 %1783
  %1785 = vrot.lane.b32.xlu0 %v1776, 92
  %v1786 = vpop.permute.xlu0 %1785
  %1787 = vrot.lane.b32.xlu0 %v1777, 92
  %v1788 = vpop.permute.xlu0 %1787
  %1789 = vrot.lane.b32.xlu0 %v1778, 92
  %v1790 = vpop.permute.xlu0 %1789
  %v1791 = vsel %vm1765, %v1784, %v1786
  %v1792 = vsel %vm1765, %v1786, %v1788
  %v1793 = vsel %vm1765, %v1788, %v1790
  %1797 = vst [vmem:[#allocation4 + $0x4f8] sm:$0xff] %v1791
  %1798 = vst [vmem:[#allocation4 + $0x500] sm:$0xff] %v1792
  %1799 = vst [vmem:[#allocation4 + $0x508] sm:$0xff] %v1793
  %v1800 = vld [vmem:[#allocation2 + $0x18] sm:$0xff]
  %v1801 = vld [vmem:[#allocation2 + $0x20] sm:$0xff]
  %v1802 = vld [vmem:[#allocation2 + $0x28] sm:$0xff]
  %v1803 = vld [vmem:[#allocation2 + $0x30] sm:$0xff]
  %1808 = vrot.lane.b32.xlu0 %v1800, 72
  %v1809 = vpop.permute.xlu0 %1808
  %1810 = vrot.lane.b32.xlu0 %v1801, 72
  %v1811 = vpop.permute.xlu0 %1810
  %1812 = vrot.lane.b32.xlu0 %v1802, 72
  %v1813 = vpop.permute.xlu0 %1812
  %1814 = vrot.lane.b32.xlu0 %v1803, 72
  %v1815 = vpop.permute.xlu0 %1814
  %v1816 = vsel %vm368, %v1809, %v1811
  %v1817 = vsel %vm368, %v1811, %v1813
  %v1818 = vsel %vm368, %v1813, %v1815
  %1822 = vst [vmem:[#allocation4 + $0x510] sm:$0xff] %v1816
  %1823 = vst [vmem:[#allocation4 + $0x518] sm:$0xff] %v1817
  %1824 = vst [vmem:[#allocation4 + $0x520] sm:$0xff] %v1818
  %v1825 = vld [vmem:[%s527 + $0x18] sm:$0xff]
  %v1826 = vld [vmem:[%s527 + $0x20] sm:$0xff]
  %v1827 = vld [vmem:[%s527 + $0x28] sm:$0xff]
  %v1828 = vld [vmem:[%s527 + $0x30] sm:$0xff]
  %1833 = vrot.lane.b32.xlu0 %v1825, 72
  %v1834 = vpop.permute.xlu0 %1833
  %1835 = vrot.lane.b32.xlu0 %v1826, 72
  %v1836 = vpop.permute.xlu0 %1835
  %1837 = vrot.lane.b32.xlu0 %v1827, 72
  %v1838 = vpop.permute.xlu0 %1837
  %1839 = vrot.lane.b32.xlu0 %v1828, 72
  %v1840 = vpop.permute.xlu0 %1839
  %v1841 = vsel %vm368, %v1834, %v1836
  %v1842 = vsel %vm368, %v1836, %v1838
  %v1843 = vsel %vm368, %v1838, %v1840
  %1847 = vst [vmem:[#allocation4 + $0x528] sm:$0xff] %v1841
  %1848 = vst [vmem:[#allocation4 + $0x530] sm:$0xff] %v1842
  %1849 = vst [vmem:[#allocation4 + $0x538] sm:$0xff] %v1843
  %v1850 = vld [vmem:[#allocation2 + $0x18] sm:$0xff]
  %v1851 = vld [vmem:[#allocation2 + $0x20] sm:$0xff]
  %v1852 = vld [vmem:[#allocation2 + $0x28] sm:$0xff]
  %v1853 = vld [vmem:[#allocation2 + $0x30] sm:$0xff]
  %1858 = vrot.lane.b32.xlu0 %v1850, 64
  %v1859 = vpop.permute.xlu0 %1858
  %1860 = vrot.lane.b32.xlu0 %v1851, 64
  %v1861 = vpop.permute.xlu0 %1860
  %1862 = vrot.lane.b32.xlu0 %v1852, 64
  %v1863 = vpop.permute.xlu0 %1862
  %1864 = vrot.lane.b32.xlu0 %v1853, 64
  %v1865 = vpop.permute.xlu0 %1864
  %vm1866 = vcmask 523264
  %v1867 = vsel %vm1866, %v1859, %v1861
  %v1868 = vsel %vm1866, %v1861, %v1863
  %v1869 = vsel %vm1866, %v1863, %v1865
  %1873 = vst [vmem:[#allocation4 + $0x540] sm:$0xff] %v1867
  %1874 = vst [vmem:[#allocation4 + $0x548] sm:$0xff] %v1868
  %1875 = vst [vmem:[#allocation4 + $0x550] sm:$0xff] %v1869
  %v1876 = vld [vmem:[%s527 + $0x18] sm:$0xff]
  %v1877 = vld [vmem:[%s527 + $0x20] sm:$0xff]
  %v1878 = vld [vmem:[%s527 + $0x28] sm:$0xff]
  %v1879 = vld [vmem:[%s527 + $0x30] sm:$0xff]
  %1884 = vrot.lane.b32.xlu0 %v1876, 64
  %v1885 = vpop.permute.xlu0 %1884
  %1886 = vrot.lane.b32.xlu0 %v1877, 64
  %v1887 = vpop.permute.xlu0 %1886
  %1888 = vrot.lane.b32.xlu0 %v1878, 64
  %v1889 = vpop.permute.xlu0 %1888
  %1890 = vrot.lane.b32.xlu0 %v1879, 64
  %v1891 = vpop.permute.xlu0 %1890
  %v1892 = vsel %vm1866, %v1885, %v1887
  %v1893 = vsel %vm1866, %v1887, %v1889
  %v1894 = vsel %vm1866, %v1889, %v1891
  %1898 = vst [vmem:[#allocation4 + $0x558] sm:$0xff] %v1892
  %1899 = vst [vmem:[#allocation4 + $0x560] sm:$0xff] %v1893
  %1900 = vst [vmem:[#allocation4 + $0x568] sm:$0xff] %v1894
  %v1901 = vld [vmem:[#allocation2 + $0x18] sm:$0xff]
  %v1902 = vld [vmem:[#allocation2 + $0x20] sm:$0xff]
  %v1903 = vld [vmem:[#allocation2 + $0x28] sm:$0xff]
  %v1904 = vld [vmem:[#allocation2 + $0x30] sm:$0xff]
  %1909 = vrot.lane.b32.xlu0 %v1901, 56
  %v1910 = vpop.permute.xlu0 %1909
  %1911 = vrot.lane.b32.xlu0 %v1902, 56
  %v1912 = vpop.permute.xlu0 %1911
  %1913 = vrot.lane.b32.xlu0 %v1903, 56
  %v1914 = vpop.permute.xlu0 %1913
  %1915 = vrot.lane.b32.xlu0 %v1904, 56
  %v1916 = vpop.permute.xlu0 %1915
  %vm1917 = vcmask 457728
  %v1918 = vsel %vm1917, %v1910, %v1912
  %v1919 = vsel %vm1917, %v1912, %v1914
  %v1920 = vsel %vm1917, %v1914, %v1916
  %1924 = vst [vmem:[#allocation4 + $0x570] sm:$0xff] %v1918
  %1925 = vst [vmem:[#allocation4 + $0x578] sm:$0xff] %v1919
  %1926 = vst [vmem:[#allocation4 + $0x580] sm:$0xff] %v1920
  %v1927 = vld [vmem:[%s527 + $0x18] sm:$0xff]
  %v1928 = vld [vmem:[%s527 + $0x20] sm:$0xff]
  %v1929 = vld [vmem:[%s527 + $0x28] sm:$0xff]
  %v1930 = vld [vmem:[%s527 + $0x30] sm:$0xff]
  %1935 = vrot.lane.b32.xlu0 %v1927, 56
  %v1936 = vpop.permute.xlu0 %1935
  %1937 = vrot.lane.b32.xlu0 %v1928, 56
  %v1938 = vpop.permute.xlu0 %1937
  %1939 = vrot.lane.b32.xlu0 %v1929, 56
  %v1940 = vpop.permute.xlu0 %1939
  %1941 = vrot.lane.b32.xlu0 %v1930, 56
  %v1942 = vpop.permute.xlu0 %1941
  %v1943 = vsel %vm1917, %v1936, %v1938
  %v1944 = vsel %vm1917, %v1938, %v1940
  %v1945 = vsel %vm1917, %v1940, %v1942
  %1949 = vst [vmem:[#allocation4 + $0x588] sm:$0xff] %v1943
  %1950 = vst [vmem:[#allocation4 + $0x590] sm:$0xff] %v1944
  %1951 = vst [vmem:[#allocation4 + $0x598] sm:$0xff] %v1945
  %v1952 = vld [vmem:[#allocation2 + $0x28] sm:$0xff]
  %v1953 = vld [vmem:[#allocation2 + $0x30] sm:$0xff]
  %v1954 = vld [vmem:[#allocation2 + $0x38] sm:$0xff]
  %v1955 = vld [vmem:[#allocation2 + $0x40] sm:$0xff]
  %1960 = vrot.lane.b32.xlu0 %v1952, 8
  %v1961 = vpop.permute.xlu0 %1960
  %1962 = vrot.lane.b32.xlu0 %v1953, 8
  %v1963 = vpop.permute.xlu0 %1962
  %1964 = vrot.lane.b32.xlu0 %v1954, 8
  %v1965 = vpop.permute.xlu0 %1964
  %1966 = vrot.lane.b32.xlu0 %v1955, 8
  %v1967 = vpop.permute.xlu0 %1966
  %vm1968 = vcmask 64512
  %v1969 = vsel %vm1968, %v1961, %v1963
  %v1970 = vsel %vm1968, %v1963, %v1965
  %v1971 = vsel %vm1968, %v1965, %v1967
  %1975 = vst [vmem:[#allocation4 + $0x5a0] sm:$0xff] %v1969
  %1976 = vst [vmem:[#allocation4 + $0x5a8] sm:$0xff] %v1970
  %1977 = vst [vmem:[#allocation4 + $0x5b0] sm:$0xff] %v1971
  %v1978 = vld [vmem:[%s527 + $0x28] sm:$0xff]
  %v1979 = vld [vmem:[%s527 + $0x30] sm:$0xff]
  %v1980 = vld [vmem:[%s527 + $0x38] sm:$0xff]
  %v1981 = vld [vmem:[%s527 + $0x40] sm:$0xff]
  %1986 = vrot.lane.b32.xlu0 %v1978, 8
  %v1987 = vpop.permute.xlu0 %1986
  %1988 = vrot.lane.b32.xlu0 %v1979, 8
  %v1989 = vpop.permute.xlu0 %1988
  %1990 = vrot.lane.b32.xlu0 %v1980, 8
  %v1991 = vpop.permute.xlu0 %1990
  %1992 = vrot.lane.b32.xlu0 %v1981, 8
  %v1993 = vpop.permute.xlu0 %1992
  %v1994 = vsel %vm1968, %v1987, %v1989
  %v1995 = vsel %vm1968, %v1989, %v1991
  %v1996 = vsel %vm1968, %v1991, %v1993
  %2000 = vst [vmem:[#allocation4 + $0x5b8] sm:$0xff] %v1994
  %2001 = vst [vmem:[#allocation4 + $0x5c0] sm:$0xff] %v1995
  %2002 = vst [vmem:[#allocation4 + $0x5c8] sm:$0xff] %v1996
  %v2003 = vld [vmem:[#allocation2 + $0x30] sm:$0xff]
  %v2004 = vld [vmem:[#allocation2 + $0x38] sm:$0xff]
  %v2005 = vld [vmem:[#allocation2 + $0x40] sm:$0xff]
  %2006 = vst [vmem:[#allocation4 + $0x5d0] sm:$0xff] %v2003
  %2007 = vst [vmem:[#allocation4 + $0x5d8] sm:$0xff] %v2004
  %2008 = vst [vmem:[#allocation4 + $0x5e0] sm:$0xff] %v2005
  %v2009 = vld [vmem:[%s527 + $0x30] sm:$0xff]
  %v2010 = vld [vmem:[%s527 + $0x38] sm:$0xff]
  %v2011 = vld [vmem:[%s527 + $0x40] sm:$0xff]
  %2012 = vst [vmem:[#allocation4 + $0x5e8] sm:$0xff] %v2009
  %2013 = vst [vmem:[#allocation4 + $0x5f0] sm:$0xff] %v2010
  %2014 = vst [vmem:[#allocation4 + $0x5f8] sm:$0xff] %v2011
  %v2015 = vld [vmem:[#allocation2 + $0x30] sm:$0xff]
  %v2016 = vld [vmem:[#allocation2 + $0x38] sm:$0xff]
  %v2017 = vld [vmem:[#allocation2 + $0x40] sm:$0xff]
  %v2018 = vld [vmem:[#allocation2 + $0x48] sm:$0xff]
  %2023 = vrot.lane.b32.xlu0 %v2015, 120
  %v2024 = vpop.permute.xlu0 %2023
  %2025 = vrot.lane.b32.xlu0 %v2016, 120
  %v2026 = vpop.permute.xlu0 %2025
  %2027 = vrot.lane.b32.xlu0 %v2017, 120
  %v2028 = vpop.permute.xlu0 %2027
  %2029 = vrot.lane.b32.xlu0 %v2018, 120
  %v2030 = vpop.permute.xlu0 %2029
  %vm2031 = vcmask 982016
  %v2032 = vsel %vm2031, %v2024, %v2026
  %v2033 = vsel %vm2031, %v2026, %v2028
  %v2034 = vsel %vm2031, %v2028, %v2030
  %2038 = vst [vmem:[#allocation4 + $0x600] sm:$0xff] %v2032
  %2039 = vst [vmem:[#allocation4 + $0x608] sm:$0xff] %v2033
  %2040 = vst [vmem:[#allocation4 + $0x610] sm:$0xff] %v2034
  %v2041 = vld [vmem:[%s527 + $0x30] sm:$0xff]
  %v2042 = vld [vmem:[%s527 + $0x38] sm:$0xff]
  %v2043 = vld [vmem:[%s527 + $0x40] sm:$0xff]
  %v2044 = vld [vmem:[%s527 + $0x48] sm:$0xff]
  %2049 = vrot.lane.b32.xlu0 %v2041, 120
  %v2050 = vpop.permute.xlu0 %2049
  %2051 = vrot.lane.b32.xlu0 %v2042, 120
  %v2052 = vpop.permute.xlu0 %2051
  %2053 = vrot.lane.b32.xlu0 %v2043, 120
  %v2054 = vpop.permute.xlu0 %2053
  %2055 = vrot.lane.b32.xlu0 %v2044, 120
  %v2056 = vpop.permute.xlu0 %2055
  %v2057 = vsel %vm2031, %v2050, %v2052
  %v2058 = vsel %vm2031, %v2052, %v2054
  %v2059 = vsel %vm2031, %v2054, %v2056
  %2063 = vst [vmem:[#allocation4 + $0x618] sm:$0xff] %v2057
  %2064 = vst [vmem:[#allocation4 + $0x620] sm:$0xff] %v2058
  %2065 = vst [vmem:[#allocation4 + $0x628] sm:$0xff] %v2059
  %v2066 = vld [vmem:[#allocation2 + $0x40] sm:$0xff]
  %v2067 = vld [vmem:[#allocation2 + $0x48] sm:$0xff]
  %v2068 = vld [vmem:[#allocation2 + $0x50] sm:$0xff]
  %v2069 = vld [vmem:[#allocation2 + $0x58] sm:$0xff]
  %2074 = vrot.lane.b32.xlu0 %v2066, 72
  %v2075 = vpop.permute.xlu0 %2074
  %2076 = vrot.lane.b32.xlu0 %v2067, 72
  %v2077 = vpop.permute.xlu0 %2076
  %2078 = vrot.lane.b32.xlu0 %v2068, 72
  %v2079 = vpop.permute.xlu0 %2078
  %2080 = vrot.lane.b32.xlu0 %v2069, 72
  %v2081 = vpop.permute.xlu0 %2080
  %v2082 = vsel %vm368, %v2075, %v2077
  %v2083 = vsel %vm368, %v2077, %v2079
  %v2084 = vsel %vm368, %v2079, %v2081
  %2088 = vst [vmem:[#allocation4 + $0x630] sm:$0xff] %v2082
  %2089 = vst [vmem:[#allocation4 + $0x638] sm:$0xff] %v2083
  %2090 = vst [vmem:[#allocation4 + $0x640] sm:$0xff] %v2084
  %v2091 = vld [vmem:[%s527 + $0x40] sm:$0xff]
  %v2092 = vld [vmem:[%s527 + $0x48] sm:$0xff]
  %v2093 = vld [vmem:[%s527 + $0x50] sm:$0xff]
  %v2094 = vld [vmem:[%s527 + $0x58] sm:$0xff]
  %2099 = vrot.lane.b32.xlu0 %v2091, 72
  %v2100 = vpop.permute.xlu0 %2099
  %2101 = vrot.lane.b32.xlu0 %v2092, 72
  %v2102 = vpop.permute.xlu0 %2101
  %2103 = vrot.lane.b32.xlu0 %v2093, 72
  %v2104 = vpop.permute.xlu0 %2103
  %2105 = vrot.lane.b32.xlu0 %v2094, 72
  %v2106 = vpop.permute.xlu0 %2105
  %v2107 = vsel %vm368, %v2100, %v2102
  %v2108 = vsel %vm368, %v2102, %v2104
  %v2109 = vsel %vm368, %v2104, %v2106
  %2113 = vst [vmem:[#allocation4 + $0x648] sm:$0xff] %v2107
  %2114 = vst [vmem:[#allocation4 + $0x650] sm:$0xff] %v2108
  %2115 = vst [vmem:[#allocation4 + $0x658] sm:$0xff] %v2109
  %v2116 = vld [vmem:[#allocation2 + $0x40] sm:$0xff]
  %v2117 = vld [vmem:[#allocation2 + $0x48] sm:$0xff]
  %v2118 = vld [vmem:[#allocation2 + $0x50] sm:$0xff]
  %v2119 = vld [vmem:[#allocation2 + $0x58] sm:$0xff]
  %2124 = vrot.lane.b32.xlu0 %v2116, 64
  %v2125 = vpop.permute.xlu0 %2124
  %2126 = vrot.lane.b32.xlu0 %v2117, 64
  %v2127 = vpop.permute.xlu0 %2126
  %2128 = vrot.lane.b32.xlu0 %v2118, 64
  %v2129 = vpop.permute.xlu0 %2128
  %2130 = vrot.lane.b32.xlu0 %v2119, 64
  %v2131 = vpop.permute.xlu0 %2130
  %v2132 = vsel %vm1866, %v2125, %v2127
  %v2133 = vsel %vm1866, %v2127, %v2129
  %v2134 = vsel %vm1866, %v2129, %v2131
  %2138 = vst [vmem:[#allocation4 + $0x660] sm:$0xff] %v2132
  %2139 = vst [vmem:[#allocation4 + $0x668] sm:$0xff] %v2133
  %2140 = vst [vmem:[#allocation4 + $0x670] sm:$0xff] %v2134
  %v2141 = vld [vmem:[%s527 + $0x40] sm:$0xff]
  %v2142 = vld [vmem:[%s527 + $0x48] sm:$0xff]
  %v2143 = vld [vmem:[%s527 + $0x50] sm:$0xff]
  %v2144 = vld [vmem:[%s527 + $0x58] sm:$0xff]
  %2149 = vrot.lane.b32.xlu0 %v2141, 64
  %v2150 = vpop.permute.xlu0 %2149
  %2151 = vrot.lane.b32.xlu0 %v2142, 64
  %v2152 = vpop.permute.xlu0 %2151
  %2153 = vrot.lane.b32.xlu0 %v2143, 64
  %v2154 = vpop.permute.xlu0 %2153
  %2155 = vrot.lane.b32.xlu0 %v2144, 64
  %v2156 = vpop.permute.xlu0 %2155
  %v2157 = vsel %vm1866, %v2150, %v2152
  %v2158 = vsel %vm1866, %v2152, %v2154
  %v2159 = vsel %vm1866, %v2154, %v2156
  %2163 = vst [vmem:[#allocation4 + $0x678] sm:$0xff] %v2157
  %2164 = vst [vmem:[#allocation4 + $0x680] sm:$0xff] %v2158
  %2165 = vst [vmem:[#allocation4 + $0x688] sm:$0xff] %v2159
  %v2166 = vld [vmem:[#allocation2 + $0x40] sm:$0xff]
  %v2167 = vld [vmem:[#allocation2 + $0x48] sm:$0xff]
  %v2168 = vld [vmem:[#allocation2 + $0x50] sm:$0xff]
  %v2169 = vld [vmem:[#allocation2 + $0x58] sm:$0xff]
  %2174 = vrot.lane.b32.xlu0 %v2166, 56
  %v2175 = vpop.permute.xlu0 %2174
  %2176 = vrot.lane.b32.xlu0 %v2167, 56
  %v2177 = vpop.permute.xlu0 %2176
  %2178 = vrot.lane.b32.xlu0 %v2168, 56
  %v2179 = vpop.permute.xlu0 %2178
  %2180 = vrot.lane.b32.xlu0 %v2169, 56
  %v2181 = vpop.permute.xlu0 %2180
  %v2182 = vsel %vm1917, %v2175, %v2177
  %v2183 = vsel %vm1917, %v2177, %v2179
  %v2184 = vsel %vm1917, %v2179, %v2181
  %2188 = vst [vmem:[#allocation4 + $0x690] sm:$0xff] %v2182
  %2189 = vst [vmem:[#allocation4 + $0x698] sm:$0xff] %v2183
  %2190 = vst [vmem:[#allocation4 + $0x6a0] sm:$0xff] %v2184
  %v2191 = vld [vmem:[%s527 + $0x40] sm:$0xff]
  %v2192 = vld [vmem:[%s527 + $0x48] sm:$0xff]
  %v2193 = vld [vmem:[%s527 + $0x50] sm:$0xff]
  %v2194 = vld [vmem:[%s527 + $0x58] sm:$0xff]
  %2199 = vrot.lane.b32.xlu0 %v2191, 56
  %v2200 = vpop.permute.xlu0 %2199
  %2201 = vrot.lane.b32.xlu0 %v2192, 56
  %v2202 = vpop.permute.xlu0 %2201
  %2203 = vrot.lane.b32.xlu0 %v2193, 56
  %v2204 = vpop.permute.xlu0 %2203
  %2205 = vrot.lane.b32.xlu0 %v2194, 56
  %v2206 = vpop.permute.xlu0 %2205
  %v2207 = vsel %vm1917, %v2200, %v2202
  %v2208 = vsel %vm1917, %v2202, %v2204
  %v2209 = vsel %vm1917, %v2204, %v2206
  %2213 = vst [vmem:[#allocation4 + $0x6a8] sm:$0xff] %v2207
  %2214 = vst [vmem:[#allocation4 + $0x6b0] sm:$0xff] %v2208
  %2215 = vst [vmem:[#allocation4 + $0x6b8] sm:$0xff] %v2209
  %v2216 = vld [vmem:[#allocation2] sm:$0xff]
  %v2217 = vld [vmem:[#allocation2 + $0x8] sm:$0xff]
  %v2218 = vld [vmem:[#allocation2 + $0x10] sm:$0xff]
  %v2219 = vld [vmem:[#allocation2 + $0x18] sm:$0xff]
  %2224 = vrot.lane.b32.xlu0 %v2216, 16
  %v2225 = vpop.permute.xlu0 %2224
  %2226 = vrot.lane.b32.xlu0 %v2217, 16
  %v2227 = vpop.permute.xlu0 %2226
  %2228 = vrot.lane.b32.xlu0 %v2218, 16
  %v2229 = vpop.permute.xlu0 %2228
  %2230 = vrot.lane.b32.xlu0 %v2219, 16
  %v2231 = vpop.permute.xlu0 %2230
  %vm2232 = vcmask 130048
  %v2233 = vsel %vm2232, %v2225, %v2227
  %v2234 = vsel %vm2232, %v2227, %v2229
  %v2235 = vsel %vm2232, %v2229, %v2231
  %2239 = vst [vmem:[#allocation4 + $0x6c0] sm:$0xff] %v2233
  %2240 = vst [vmem:[#allocation4 + $0x6c8] sm:$0xff] %v2234
  %2241 = vst [vmem:[#allocation4 + $0x6d0] sm:$0xff] %v2235
  %v2242 = vld [vmem:[%s527] sm:$0xff]
  %v2243 = vld [vmem:[%s527 + $0x8] sm:$0xff]
  %v2244 = vld [vmem:[%s527 + $0x10] sm:$0xff]
  %v2245 = vld [vmem:[%s527 + $0x18] sm:$0xff]
  %2250 = vrot.lane.b32.xlu0 %v2242, 16
  %v2251 = vpop.permute.xlu0 %2250
  %2252 = vrot.lane.b32.xlu0 %v2243, 16
  %v2253 = vpop.permute.xlu0 %2252
  %2254 = vrot.lane.b32.xlu0 %v2244, 16
  %v2255 = vpop.permute.xlu0 %2254
  %2256 = vrot.lane.b32.xlu0 %v2245, 16
  %v2257 = vpop.permute.xlu0 %2256
  %v2258 = vsel %vm2232, %v2251, %v2253
  %v2259 = vsel %vm2232, %v2253, %v2255
  %v2260 = vsel %vm2232, %v2255, %v2257
  %2264 = vst [vmem:[#allocation4 + $0x6d8] sm:$0xff] %v2258
  %2265 = vst [vmem:[#allocation4 + $0x6e0] sm:$0xff] %v2259
  %2266 = vst [vmem:[#allocation4 + $0x6e8] sm:$0xff] %v2260
  %v2267 = vld [vmem:[#allocation2 + $0x8] sm:$0xff]
  %v2268 = vld [vmem:[#allocation2 + $0x10] sm:$0xff]
  %v2269 = vld [vmem:[#allocation2 + $0x18] sm:$0xff]
  %2270 = vst [vmem:[#allocation4 + $0x6f0] sm:$0xff] %v2267
  %2271 = vst [vmem:[#allocation4 + $0x6f8] sm:$0xff] %v2268
  %2272 = vst [vmem:[#allocation4 + $0x700] sm:$0xff] %v2269
  %v2273 = vld [vmem:[%s527 + $0x8] sm:$0xff]
  %v2274 = vld [vmem:[%s527 + $0x10] sm:$0xff]
  %v2275 = vld [vmem:[%s527 + $0x18] sm:$0xff]
  %2276 = vst [vmem:[#allocation4 + $0x708] sm:$0xff] %v2273
  %2277 = vst [vmem:[#allocation4 + $0x710] sm:$0xff] %v2274
  %2278 = vst [vmem:[#allocation4 + $0x718] sm:$0xff] %v2275
  %v2279 = vld [vmem:[#allocation2 + $0x8] sm:$0xff]
  %v2280 = vld [vmem:[#allocation2 + $0x10] sm:$0xff]
  %v2281 = vld [vmem:[#allocation2 + $0x18] sm:$0xff]
  %v2282 = vld [vmem:[#allocation2 + $0x20] sm:$0xff]
  %2287 = vrot.lane.b32.xlu0 %v2279, 112
  %v2288 = vpop.permute.xlu0 %2287
  %2289 = vrot.lane.b32.xlu0 %v2280, 112
  %v2290 = vpop.permute.xlu0 %2289
  %2291 = vrot.lane.b32.xlu0 %v2281, 112
  %v2292 = vpop.permute.xlu0 %2291
  %2293 = vrot.lane.b32.xlu0 %v2282, 112
  %v2294 = vpop.permute.xlu0 %2293
  %vm2295 = vcmask 916480
  %v2296 = vsel %vm2295, %v2288, %v2290
  %v2297 = vsel %vm2295, %v2290, %v2292
  %v2298 = vsel %vm2295, %v2292, %v2294
  %2302 = vst [vmem:[#allocation4 + $0x720] sm:$0xff] %v2296
  %2303 = vst [vmem:[#allocation4 + $0x728] sm:$0xff] %v2297
  %2304 = vst [vmem:[#allocation4 + $0x730] sm:$0xff] %v2298
  %v2305 = vld [vmem:[%s527 + $0x8] sm:$0xff]
  %v2306 = vld [vmem:[%s527 + $0x10] sm:$0xff]
  %v2307 = vld [vmem:[%s527 + $0x18] sm:$0xff]
  %v2308 = vld [vmem:[%s527 + $0x20] sm:$0xff]
  %2313 = vrot.lane.b32.xlu0 %v2305, 112
  %v2314 = vpop.permute.xlu0 %2313
  %2315 = vrot.lane.b32.xlu0 %v2306, 112
  %v2316 = vpop.permute.xlu0 %2315
  %2317 = vrot.lane.b32.xlu0 %v2307, 112
  %v2318 = vpop.permute.xlu0 %2317
  %2319 = vrot.lane.b32.xlu0 %v2308, 112
  %v2320 = vpop.permute.xlu0 %2319
  %v2321 = vsel %vm2295, %v2314, %v2316
  %v2322 = vsel %vm2295, %v2316, %v2318
  %v2323 = vsel %vm2295, %v2318, %v2320
  %2327 = vst [vmem:[#allocation4 + $0x738] sm:$0xff] %v2321
  %2328 = vst [vmem:[#allocation4 + $0x740] sm:$0xff] %v2322
  %2329 = vst [vmem:[#allocation4 + $0x748] sm:$0xff] %v2323
  %v2330 = vld [vmem:[#allocation2 + $0x28] sm:$0xff]
  %v2331 = vld [vmem:[#allocation2 + $0x30] sm:$0xff]
  %v2332 = vld [vmem:[#allocation2 + $0x38] sm:$0xff]
  %v2333 = vld [vmem:[#allocation2 + $0x40] sm:$0xff]
  %2338 = vrot.lane.b32.xlu0 %v2330, 16
  %v2339 = vpop.permute.xlu0 %2338
  %2340 = vrot.lane.b32.xlu0 %v2331, 16
  %v2341 = vpop.permute.xlu0 %2340
  %2342 = vrot.lane.b32.xlu0 %v2332, 16
  %v2343 = vpop.permute.xlu0 %2342
  %2344 = vrot.lane.b32.xlu0 %v2333, 16
  %v2345 = vpop.permute.xlu0 %2344
  %v2346 = vsel %vm2232, %v2339, %v2341
  %v2347 = vsel %vm2232, %v2341, %v2343
  %v2348 = vsel %vm2232, %v2343, %v2345
  %2352 = vst [vmem:[#allocation4 + $0x750] sm:$0xff] %v2346
  %2353 = vst [vmem:[#allocation4 + $0x758] sm:$0xff] %v2347
  %2354 = vst [vmem:[#allocation4 + $0x760] sm:$0xff] %v2348
  %v2355 = vld [vmem:[%s527 + $0x28] sm:$0xff]
  %v2356 = vld [vmem:[%s527 + $0x30] sm:$0xff]
  %v2357 = vld [vmem:[%s527 + $0x38] sm:$0xff]
  %v2358 = vld [vmem:[%s527 + $0x40] sm:$0xff]
  %2363 = vrot.lane.b32.xlu0 %v2355, 16
  %v2364 = vpop.permute.xlu0 %2363
  %2365 = vrot.lane.b32.xlu0 %v2356, 16
  %v2366 = vpop.permute.xlu0 %2365
  %2367 = vrot.lane.b32.xlu0 %v2357, 16
  %v2368 = vpop.permute.xlu0 %2367
  %2369 = vrot.lane.b32.xlu0 %v2358, 16
  %v2370 = vpop.permute.xlu0 %2369
  %v2371 = vsel %vm2232, %v2364, %v2366
  %v2372 = vsel %vm2232, %v2366, %v2368
  %v2373 = vsel %vm2232, %v2368, %v2370
  %2377 = vst [vmem:[#allocation4 + $0x768] sm:$0xff] %v2371
  %2378 = vst [vmem:[#allocation4 + $0x770] sm:$0xff] %v2372
  %2379 = vst [vmem:[#allocation4 + $0x778] sm:$0xff] %v2373
  %v2380 = vld [vmem:[#allocation2 + $0x30] sm:$0xff]
  %v2381 = vld [vmem:[#allocation2 + $0x38] sm:$0xff]
  %v2382 = vld [vmem:[#allocation2 + $0x40] sm:$0xff]
  %2383 = vst [vmem:[#allocation4 + $0x780] sm:$0xff] %v2380
  %2384 = vst [vmem:[#allocation4 + $0x788] sm:$0xff] %v2381
  %2385 = vst [vmem:[#allocation4 + $0x790] sm:$0xff] %v2382
  %v2386 = vld [vmem:[%s527 + $0x30] sm:$0xff]
  %v2387 = vld [vmem:[%s527 + $0x38] sm:$0xff]
  %v2388 = vld [vmem:[%s527 + $0x40] sm:$0xff]
  %2389 = vst [vmem:[#allocation4 + $0x798] sm:$0xff] %v2386
  %2390 = vst [vmem:[#allocation4 + $0x7a0] sm:$0xff] %v2387
  %2391 = vst [vmem:[#allocation4 + $0x7a8] sm:$0xff] %v2388
  %v2392 = vld [vmem:[#allocation2 + $0x30] sm:$0xff]
  %v2393 = vld [vmem:[#allocation2 + $0x38] sm:$0xff]
  %v2394 = vld [vmem:[#allocation2 + $0x40] sm:$0xff]
  %v2395 = vld [vmem:[#allocation2 + $0x48] sm:$0xff]
  %2400 = vrot.lane.b32.xlu0 %v2392, 112
  %v2401 = vpop.permute.xlu0 %2400
  %2402 = vrot.lane.b32.xlu0 %v2393, 112
  %v2403 = vpop.permute.xlu0 %2402
  %2404 = vrot.lane.b32.xlu0 %v2394, 112
  %v2405 = vpop.permute.xlu0 %2404
  %2406 = vrot.lane.b32.xlu0 %v2395, 112
  %v2407 = vpop.permute.xlu0 %2406
  %v2408 = vsel %vm2295, %v2401, %v2403
  %v2409 = vsel %vm2295, %v2403, %v2405
  %v2410 = vsel %vm2295, %v2405, %v2407
  %2414 = vst [vmem:[#allocation4 + $0x7b0] sm:$0xff] %v2408
  %2415 = vst [vmem:[#allocation4 + $0x7b8] sm:$0xff] %v2409
  %2416 = vst [vmem:[#allocation4 + $0x7c0] sm:$0xff] %v2410
  %v2417 = vld [vmem:[%s527 + $0x30] sm:$0xff]
  %v2418 = vld [vmem:[%s527 + $0x38] sm:$0xff]
  %v2419 = vld [vmem:[%s527 + $0x40] sm:$0xff]
  %v2420 = vld [vmem:[%s527 + $0x48] sm:$0xff]
  %2425 = vrot.lane.b32.xlu0 %v2417, 112
  %v2426 = vpop.permute.xlu0 %2425
  %2427 = vrot.lane.b32.xlu0 %v2418, 112
  %v2428 = vpop.permute.xlu0 %2427
  %2429 = vrot.lane.b32.xlu0 %v2419, 112
  %v2430 = vpop.permute.xlu0 %2429
  %2431 = vrot.lane.b32.xlu0 %v2420, 112
  %v2432 = vpop.permute.xlu0 %2431
  %v2433 = vsel %vm2295, %v2426, %v2428
  %v2434 = vsel %vm2295, %v2428, %v2430
  %v2435 = vsel %vm2295, %v2430, %v2432
  %2439 = vst [vmem:[#allocation4 + $0x7c8] sm:$0xff] %v2433
  %2440 = vst [vmem:[#allocation4 + $0x7d0] sm:$0xff] %v2434
  %2441 = vst [vmem:[#allocation4 + $0x7d8] sm:$0xff] %v2435
  %v2442 = vld [vmem:[#allocation2 + $0x50] sm:$0xff]
  %v2443 = vld [vmem:[#allocation2 + $0x58] sm:$0xff]
  %v2444 = vld [vmem:[#allocation2 + $0x60] sm:$0xff]
  %v2445 = vld [vmem:[#allocation2 + $0x68] sm:$0xff]
  %2450 = vrot.lane.b32.xlu0 %v2442, 16
  %v2451 = vpop.permute.xlu0 %2450
  %2452 = vrot.lane.b32.xlu0 %v2443, 16
  %v2453 = vpop.permute.xlu0 %2452
  %2454 = vrot.lane.b32.xlu0 %v2444, 16
  %v2455 = vpop.permute.xlu0 %2454
  %2456 = vrot.lane.b32.xlu0 %v2445, 16
  %v2457 = vpop.permute.xlu0 %2456
  %v2458 = vsel %vm2232, %v2451, %v2453
  %v2459 = vsel %vm2232, %v2453, %v2455
  %v2460 = vsel %vm2232, %v2455, %v2457
  %2464 = vst [vmem:[#allocation4 + $0x7e0] sm:$0xff] %v2458
  %2465 = vst [vmem:[#allocation4 + $0x7e8] sm:$0xff] %v2459
  %2466 = vst [vmem:[#allocation4 + $0x7f0] sm:$0xff] %v2460
  %v2467 = vld [vmem:[%s527 + $0x50] sm:$0xff]
  %v2468 = vld [vmem:[%s527 + $0x58] sm:$0xff]
  %v2469 = vld [vmem:[%s527 + $0x60] sm:$0xff]
  %v2470 = vld [vmem:[%s527 + $0x68] sm:$0xff]
  %2475 = vrot.lane.b32.xlu0 %v2467, 16
  %v2476 = vpop.permute.xlu0 %2475
  %2477 = vrot.lane.b32.xlu0 %v2468, 16
  %v2478 = vpop.permute.xlu0 %2477
  %2479 = vrot.lane.b32.xlu0 %v2469, 16
  %v2480 = vpop.permute.xlu0 %2479
  %2481 = vrot.lane.b32.xlu0 %v2470, 16
  %v2482 = vpop.permute.xlu0 %2481
  %v2483 = vsel %vm2232, %v2476, %v2478
  %v2484 = vsel %vm2232, %v2478, %v2480
  %v2485 = vsel %vm2232, %v2480, %v2482
  %2489 = vst [vmem:[#allocation4 + $0x7f8] sm:$0xff] %v2483
  %2490 = vst [vmem:[#allocation4 + $0x800] sm:$0xff] %v2484
  %2491 = vst [vmem:[#allocation4 + $0x808] sm:$0xff] %v2485
  %v2492 = vld [vmem:[#allocation2 + $0x58] sm:$0xff]
  %v2493 = vld [vmem:[#allocation2 + $0x60] sm:$0xff]
  %v2494 = vld [vmem:[#allocation2 + $0x68] sm:$0xff]
  %2495 = vst [vmem:[#allocation4 + $0x810] sm:$0xff] %v2492
  %2496 = vst [vmem:[#allocation4 + $0x818] sm:$0xff] %v2493
  %2497 = vst [vmem:[#allocation4 + $0x820] sm:$0xff] %v2494
  %v2498 = vld [vmem:[%s527 + $0x58] sm:$0xff]
  %v2499 = vld [vmem:[%s527 + $0x60] sm:$0xff]
  %v2500 = vld [vmem:[%s527 + $0x68] sm:$0xff]
  %2501 = vst [vmem:[#allocation4 + $0x828] sm:$0xff] %v2498
  %2502 = vst [vmem:[#allocation4 + $0x830] sm:$0xff] %v2499
  %2503 = vst [vmem:[#allocation4 + $0x838] sm:$0xff] %v2500
  %v2504 = vld [vmem:[#allocation2 + $0x58] sm:$0xff]
  %v2505 = vld [vmem:[#allocation2 + $0x60] sm:$0xff]
  %v2506 = vld [vmem:[#allocation2 + $0x68] sm:$0xff]
  %v2507 = vld [vmem:[#allocation2 + $0x70] sm:$0xff]
  %2512 = vrot.lane.b32.xlu0 %v2504, 112
  %v2513 = vpop.permute.xlu0 %2512
  %2514 = vrot.lane.b32.xlu0 %v2505, 112
  %v2515 = vpop.permute.xlu0 %2514
  %2516 = vrot.lane.b32.xlu0 %v2506, 112
  %v2517 = vpop.permute.xlu0 %2516
  %2518 = vrot.lane.b32.xlu0 %v2507, 112
  %v2519 = vpop.permute.xlu0 %2518
  %v2520 = vsel %vm2295, %v2513, %v2515
  %v2521 = vsel %vm2295, %v2515, %v2517
  %v2522 = vsel %vm2295, %v2517, %v2519
  %2526 = vst [vmem:[#allocation4 + $0x840] sm:$0xff] %v2520
  %2527 = vst [vmem:[#allocation4 + $0x848] sm:$0xff] %v2521
  %2528 = vst [vmem:[#allocation4 + $0x850] sm:$0xff] %v2522
  %v2529 = vld [vmem:[%s527 + $0x58] sm:$0xff]
  %v2530 = vld [vmem:[%s527 + $0x60] sm:$0xff]
  %v2531 = vld [vmem:[%s527 + $0x68] sm:$0xff]
  %v2532 = vld [vmem:[%s527 + $0x70] sm:$0xff]
  %2537 = vrot.lane.b32.xlu0 %v2529, 112
  %v2538 = vpop.permute.xlu0 %2537
  %2539 = vrot.lane.b32.xlu0 %v2530, 112
  %v2540 = vpop.permute.xlu0 %2539
  %2541 = vrot.lane.b32.xlu0 %v2531, 112
  %v2542 = vpop.permute.xlu0 %2541
  %2543 = vrot.lane.b32.xlu0 %v2532, 112
  %v2544 = vpop.permute.xlu0 %2543
  %v2545 = vsel %vm2295, %v2538, %v2540
  %v2546 = vsel %vm2295, %v2540, %v2542
  %v2547 = vsel %vm2295, %v2542, %v2544
  %2551 = vst [vmem:[#allocation4 + $0x858] sm:$0xff] %v2545
  %2552 = vst [vmem:[#allocation4 + $0x860] sm:$0xff] %v2546
  %2553 = vst [vmem:[#allocation4 + $0x868] sm:$0xff] %v2547
  %v2554 = vld [vmem:[%s2] sm:$0xff]
  %v2555 = vld [vmem:[%s2 + $0x8] sm:$0xff]
  %v2556 = vld [vmem:[%s2 + $0x10] sm:$0xff]
  %v2557 = vld [vmem:[%s2 + $0x18] sm:$0xff]
  %v2558 = vld [vmem:[%s2 + $0x20] sm:$0xff]
  %v2559 = vld [vmem:[%s2 + $0x28] sm:$0xff]
  %v2560 = vld [vmem:[%s2 + $0x30] sm:$0xff]
  %v2561 = vld [vmem:[%s2 + $0x38] sm:$0xff]
  %v2562 = vld [vmem:[%s2 + $0x40] sm:$0xff]
  %v2563 = vld [vmem:[#allocation4] sm:$0xff]
  %v2564 = vld [vmem:[#allocation4 + $0x8] sm:$0xff]
  %v2565 = vld [vmem:[#allocation4 + $0x10] sm:$0xff]
  %v2566 = vld [vmem:[#allocation4 + $0x18] sm:$0xff]
  %v2567 = vld [vmem:[#allocation4 + $0x20] sm:$0xff]
  %v2568 = vld [vmem:[#allocation4 + $0x28] sm:$0xff]
  %v2569 = vld [vmem:[#allocation4 + $0x30] sm:$0xff]
  %v2570 = vld [vmem:[#allocation4 + $0x38] sm:$0xff]
  %v2571 = vld [vmem:[#allocation4 + $0x40] sm:$0xff]
  %v2572 = vld [vmem:[#allocation4 + $0x48] sm:$0xff]
  %v2573 = vld [vmem:[#allocation4 + $0x50] sm:$0xff]
  %v2574 = vld [vmem:[#allocation4 + $0x58] sm:$0xff]
  %v2575 = vld [vmem:[#allocation4 + $0x60] sm:$0xff]
  %v2576 = vld [vmem:[#allocation4 + $0x68] sm:$0xff]
  %v2577 = vld [vmem:[#allocation4 + $0x70] sm:$0xff]
  %v2578 = vld [vmem:[#allocation4 + $0x78] sm:$0xff]
  %v2579 = vld [vmem:[#allocation4 + $0x80] sm:$0xff]
  %v2580 = vld [vmem:[#allocation4 + $0x88] sm:$0xff]
  %v2581 = vld [vmem:[#allocation4 + $0x90] sm:$0xff]
  %v2582 = vld [vmem:[#allocation4 + $0x98] sm:$0xff]
  %v2583 = vld [vmem:[#allocation4 + $0xa0] sm:$0xff]
  %v2584 = vld [vmem:[#allocation4 + $0xa8] sm:$0xff]
  %v2585 = vld [vmem:[#allocation4 + $0xb0] sm:$0xff]
  %v2586 = vld [vmem:[#allocation4 + $0xb8] sm:$0xff]
  %v2587 = vld [vmem:[#allocation4 + $0xc0] sm:$0xff]
  %v2588 = vld [vmem:[#allocation4 + $0xc8] sm:$0xff]
  %v2589 = vld [vmem:[#allocation4 + $0xd0] sm:$0xff]
  %v2590 = vld [vmem:[#allocation4 + $0xd8] sm:$0xff]
  %v2591 = vld [vmem:[#allocation4 + $0xe0] sm:$0xff]
  %v2592 = vld [vmem:[#allocation4 + $0xe8] sm:$0xff]
  %v2593 = vld [vmem:[#allocation4 + $0xf0] sm:$0xff]
  %v2594 = vld [vmem:[#allocation4 + $0xf8] sm:$0xff]
  %v2595 = vld [vmem:[#allocation4 + $0x100] sm:$0xff]
  %v2596 = vld [vmem:[#allocation4 + $0x108] sm:$0xff]
  %v2597 = vld [vmem:[#allocation4 + $0x110] sm:$0xff]
  %v2598 = vld [vmem:[#allocation4 + $0x118] sm:$0xff]
  %v2599 = vld [vmem:[#allocation4 + $0x120] sm:$0xff]
  %v2600 = vld [vmem:[#allocation4 + $0x128] sm:$0xff]
  %v2601 = vld [vmem:[#allocation4 + $0x130] sm:$0xff]
  %v2602 = vld [vmem:[#allocation4 + $0x138] sm:$0xff]
  %v2603 = vld [vmem:[#allocation4 + $0x140] sm:$0xff]
  %v2604 = vld [vmem:[#allocation4 + $0x148] sm:$0xff]
  %v2605 = vld [vmem:[#allocation4 + $0x150] sm:$0xff]
  %v2606 = vld [vmem:[#allocation4 + $0x158] sm:$0xff]
  %v2607 = vld [vmem:[#allocation4 + $0x160] sm:$0xff]
  %v2608 = vld [vmem:[#allocation4 + $0x168] sm:$0xff]
  %v2609 = vld [vmem:[#allocation4 + $0x170] sm:$0xff]
  %v2610 = vld [vmem:[#allocation4 + $0x178] sm:$0xff]
  %v2611 = vld [vmem:[#allocation4 + $0x180] sm:$0xff]
  %v2612 = vld [vmem:[#allocation4 + $0x188] sm:$0xff]
  %v2613 = vld [vmem:[#allocation4 + $0x190] sm:$0xff]
  %v2614 = vld [vmem:[#allocation4 + $0x198] sm:$0xff]
  %v2615 = vld [vmem:[#allocation4 + $0x1a0] sm:$0xff]
  %v2616 = vld [vmem:[#allocation4 + $0x1a8] sm:$0xff]
  %v2617 = vld [vmem:[#allocation4 + $0x1b0] sm:$0xff]
  %v2618 = vld [vmem:[#allocation4 + $0x1b8] sm:$0xff]
  %v2619 = vld [vmem:[#allocation4 + $0x1c0] sm:$0xff]
  %v2620 = vld [vmem:[#allocation4 + $0x1c8] sm:$0xff]
  %v2621 = vld [vmem:[#allocation4 + $0x1d0] sm:$0xff]
  %v2622 = vld [vmem:[#allocation4 + $0x1d8] sm:$0xff]
  %v2623 = vld [vmem:[#allocation4 + $0x1e0] sm:$0xff]
  %v2624 = vld [vmem:[#allocation4 + $0x1e8] sm:$0xff]
  %v2625 = vld [vmem:[#allocation4 + $0x1f0] sm:$0xff]
  %v2626 = vld [vmem:[#allocation4 + $0x1f8] sm:$0xff]
  %v2627 = vld [vmem:[#allocation4 + $0x200] sm:$0xff]
  %v2628 = vld [vmem:[#allocation4 + $0x208] sm:$0xff]
  %v2629 = vld [vmem:[#allocation4 + $0x210] sm:$0xff]
  %v2630 = vld [vmem:[#allocation4 + $0x218] sm:$0xff]
  %v2631 = vld [vmem:[#allocation4 + $0x220] sm:$0xff]
  %v2632 = vld [vmem:[#allocation4 + $0x228] sm:$0xff]
  %v2633 = vld [vmem:[#allocation4 + $0x230] sm:$0xff]
  %v2634 = vld [vmem:[#allocation4 + $0x238] sm:$0xff]
  %v2635 = vld [vmem:[#allocation4 + $0x240] sm:$0xff]
  %v2636 = vld [vmem:[#allocation4 + $0x248] sm:$0xff]
  %v2637 = vld [vmem:[#allocation4 + $0x250] sm:$0xff]
  %v2638 = vld [vmem:[#allocation4 + $0x258] sm:$0xff]
  %v2639 = vld [vmem:[#allocation4 + $0x260] sm:$0xff]
  %v2640 = vld [vmem:[#allocation4 + $0x268] sm:$0xff]
  %v2641 = vld [vmem:[#allocation4 + $0x270] sm:$0xff]
  %v2642 = vld [vmem:[#allocation4 + $0x278] sm:$0xff]
  %v2643 = vld [vmem:[#allocation4 + $0x280] sm:$0xff]
  %v2644 = vld [vmem:[#allocation4 + $0x288] sm:$0xff]
  %v2645 = vld [vmem:[#allocation4 + $0x290] sm:$0xff]
  %v2646 = vld [vmem:[#allocation4 + $0x298] sm:$0xff]
  %v2647 = vld [vmem:[#allocation4 + $0x2a0] sm:$0xff]
  %v2648 = vld [vmem:[#allocation4 + $0x2a8] sm:$0xff]
  %v2649 = vld [vmem:[#allocation4 + $0x2b0] sm:$0xff]
  %v2650 = vld [vmem:[#allocation4 + $0x2b8] sm:$0xff]
  %v2651 = vld [vmem:[#allocation4 + $0x2c0] sm:$0xff]
  %v2652 = vld [vmem:[#allocation4 + $0x2c8] sm:$0xff]
  %v2653 = vld [vmem:[#allocation4 + $0x2d0] sm:$0xff]
  %v2654 = vld [vmem:[#allocation4 + $0x2d8] sm:$0xff]
  %v2655 = vld [vmem:[#allocation4 + $0x2e0] sm:$0xff]
  %v2656 = vld [vmem:[#allocation4 + $0x2e8] sm:$0xff]
  %v2657 = vld [vmem:[#allocation4 + $0x2f0] sm:$0xff]
  %v2658 = vld [vmem:[#allocation4 + $0x2f8] sm:$0xff]
  %v2659 = vld [vmem:[#allocation4 + $0x300] sm:$0xff]
  %v2660 = vld [vmem:[#allocation4 + $0x308] sm:$0xff]
  %v2661 = vld [vmem:[#allocation4 + $0x310] sm:$0xff]
  %v2662 = vld [vmem:[#allocation4 + $0x318] sm:$0xff]
  %v2663 = vld [vmem:[#allocation4 + $0x320] sm:$0xff]
  %v2664 = vld [vmem:[#allocation4 + $0x328] sm:$0xff]
  %v2665 = vld [vmem:[#allocation4 + $0x330] sm:$0xff]
  %v2666 = vld [vmem:[#allocation4 + $0x338] sm:$0xff]
  %v2667 = vld [vmem:[#allocation4 + $0x340] sm:$0xff]
  %v2668 = vld [vmem:[#allocation4 + $0x348] sm:$0xff]
  %v2669 = vld [vmem:[#allocation4 + $0x350] sm:$0xff]
  %v2670 = vld [vmem:[#allocation4 + $0x358] sm:$0xff]
  %v2671 = vld [vmem:[#allocation4 + $0x360] sm:$0xff]
  %v2672 = vld [vmem:[#allocation4 + $0x368] sm:$0xff]
  %v2673 = vld [vmem:[#allocation4 + $0x370] sm:$0xff]
  %v2674 = vld [vmem:[#allocation4 + $0x378] sm:$0xff]
  %v2675 = vld [vmem:[#allocation4 + $0x380] sm:$0xff]
  %v2676 = vld [vmem:[#allocation4 + $0x388] sm:$0xff]
  %v2677 = vld [vmem:[#allocation4 + $0x390] sm:$0xff]
  %v2678 = vld [vmem:[#allocation4 + $0x398] sm:$0xff]
  %v2679 = vld [vmem:[#allocation4 + $0x3a0] sm:$0xff]
  %v2680 = vld [vmem:[#allocation4 + $0x3a8] sm:$0xff]
  %v2681 = vld [vmem:[#allocation4 + $0x3b0] sm:$0xff]
  %v2682 = vld [vmem:[#allocation4 + $0x3b8] sm:$0xff]
  %v2683 = vld [vmem:[#allocation4 + $0x3c0] sm:$0xff]
  %v2684 = vld [vmem:[#allocation4 + $0x3c8] sm:$0xff]
  %v2685 = vld [vmem:[#allocation4 + $0x3d0] sm:$0xff]
  %v2686 = vld [vmem:[#allocation4 + $0x3d8] sm:$0xff]
  %v2687 = vld [vmem:[#allocation4 + $0x3e0] sm:$0xff]
  %v2688 = vld [vmem:[#allocation4 + $0x3e8] sm:$0xff]
  %v2689 = vld [vmem:[#allocation4 + $0x3f0] sm:$0xff]
  %v2690 = vld [vmem:[#allocation4 + $0x3f8] sm:$0xff]
  %v2691 = vld [vmem:[#allocation4 + $0x400] sm:$0xff]
  %v2692 = vld [vmem:[#allocation4 + $0x408] sm:$0xff]
  %v2693 = vld [vmem:[#allocation4 + $0x410] sm:$0xff]
  %v2694 = vld [vmem:[#allocation4 + $0x418] sm:$0xff]
  %v2695 = vld [vmem:[#allocation4 + $0x420] sm:$0xff]
  %v2696 = vld [vmem:[#allocation4 + $0x428] sm:$0xff]
  %v2697 = vld [vmem:[#allocation4 + $0x430] sm:$0xff]
  %v2698 = vld [vmem:[#allocation4 + $0x438] sm:$0xff]
  %v2699 = vld [vmem:[#allocation4 + $0x440] sm:$0xff]
  %v2700 = vld [vmem:[#allocation4 + $0x448] sm:$0xff]
  %v2701 = vld [vmem:[#allocation4 + $0x450] sm:$0xff]
  %v2702 = vld [vmem:[#allocation4 + $0x458] sm:$0xff]
  %v2703 = vld [vmem:[#allocation4 + $0x460] sm:$0xff]
  %v2704 = vld [vmem:[#allocation4 + $0x468] sm:$0xff]
  %v2705 = vld [vmem:[#allocation4 + $0x470] sm:$0xff]
  %v2706 = vld [vmem:[#allocation4 + $0x478] sm:$0xff]
  %v2707 = vld [vmem:[#allocation4 + $0x480] sm:$0xff]
  %v2708 = vld [vmem:[#allocation4 + $0x488] sm:$0xff]
  %v2709 = vld [vmem:[#allocation4 + $0x490] sm:$0xff]
  %v2710 = vld [vmem:[#allocation4 + $0x498] sm:$0xff]
  %v2711 = vld [vmem:[#allocation4 + $0x4a0] sm:$0xff]
  %v2712 = vld [vmem:[#allocation4 + $0x4a8] sm:$0xff]
  %v2713 = vld [vmem:[#allocation4 + $0x4b0] sm:$0xff]
  %v2714 = vld [vmem:[#allocation4 + $0x4b8] sm:$0xff]
  %v2715 = vld [vmem:[#allocation4 + $0x4c0] sm:$0xff]
  %v2716 = vld [vmem:[#allocation4 + $0x4c8] sm:$0xff]
  %v2717 = vld [vmem:[#allocation4 + $0x4d0] sm:$0xff]
  %v2718 = vld [vmem:[#allocation4 + $0x4d8] sm:$0xff]
  %v2719 = vld [vmem:[#allocation4 + $0x4e0] sm:$0xff]
  %v2720 = vld [vmem:[#allocation4 + $0x4e8] sm:$0xff]
  %v2721 = vld [vmem:[#allocation4 + $0x4f0] sm:$0xff]
  %v2722 = vld [vmem:[#allocation4 + $0x4f8] sm:$0xff]
  %v2723 = vld [vmem:[#allocation4 + $0x500] sm:$0xff]
  %v2724 = vld [vmem:[#allocation4 + $0x508] sm:$0xff]
  %v2725 = vld [vmem:[#allocation4 + $0x510] sm:$0xff]
  %v2726 = vld [vmem:[#allocation4 + $0x518] sm:$0xff]
  %v2727 = vld [vmem:[#allocation4 + $0x520] sm:$0xff]
  %v2728 = vld [vmem:[#allocation4 + $0x528] sm:$0xff]
  %v2729 = vld [vmem:[#allocation4 + $0x530] sm:$0xff]
  %v2730 = vld [vmem:[#allocation4 + $0x538] sm:$0xff]
  %v2731 = vld [vmem:[#allocation4 + $0x540] sm:$0xff]
  %v2732 = vld [vmem:[#allocation4 + $0x548] sm:$0xff]
  %v2733 = vld [vmem:[#allocation4 + $0x550] sm:$0xff]
  %v2734 = vld [vmem:[#allocation4 + $0x558] sm:$0xff]
  %v2735 = vld [vmem:[#allocation4 + $0x560] sm:$0xff]
  %v2736 = vld [vmem:[#allocation4 + $0x568] sm:$0xff]
  %v2737 = vld [vmem:[#allocation4 + $0x570] sm:$0xff]
  %v2738 = vld [vmem:[#allocation4 + $0x578] sm:$0xff]
  %v2739 = vld [vmem:[#allocation4 + $0x580] sm:$0xff]
  %v2740 = vld [vmem:[#allocation4 + $0x588] sm:$0xff]
  %v2741 = vld [vmem:[#allocation4 + $0x590] sm:$0xff]
  %v2742 = vld [vmem:[#allocation4 + $0x598] sm:$0xff]
  %v2743 = vld [vmem:[#allocation4 + $0x5a0] sm:$0xff]
  %v2744 = vld [vmem:[#allocation4 + $0x5a8] sm:$0xff]
  %v2745 = vld [vmem:[#allocation4 + $0x5b0] sm:$0xff]
  %v2746 = vld [vmem:[#allocation4 + $0x5b8] sm:$0xff]
  %v2747 = vld [vmem:[#allocation4 + $0x5c0] sm:$0xff]
  %v2748 = vld [vmem:[#allocation4 + $0x5c8] sm:$0xff]
  %v2749 = vld [vmem:[#allocation4 + $0x5d0] sm:$0xff]
  %v2750 = vld [vmem:[#allocation4 + $0x5d8] sm:$0xff]
  %v2751 = vld [vmem:[#allocation4 + $0x5e0] sm:$0xff]
  %v2752 = vld [vmem:[#allocation4 + $0x5e8] sm:$0xff]
  %v2753 = vld [vmem:[#allocation4 + $0x5f0] sm:$0xff]
  %v2754 = vld [vmem:[#allocation4 + $0x5f8] sm:$0xff]
  %v2755 = vld [vmem:[#allocation4 + $0x600] sm:$0xff]
  %v2756 = vld [vmem:[#allocation4 + $0x608] sm:$0xff]
  %v2757 = vld [vmem:[#allocation4 + $0x610] sm:$0xff]
  %v2758 = vld [vmem:[#allocation4 + $0x618] sm:$0xff]
  %v2759 = vld [vmem:[#allocation4 + $0x620] sm:$0xff]
  %v2760 = vld [vmem:[#allocation4 + $0x628] sm:$0xff]
  %v2761 = vld [vmem:[#allocation4 + $0x630] sm:$0xff]
  %v2762 = vld [vmem:[#allocation4 + $0x638] sm:$0xff]
  %v2763 = vld [vmem:[#allocation4 + $0x640] sm:$0xff]
  %v2764 = vld [vmem:[#allocation4 + $0x648] sm:$0xff]
  %v2765 = vld [vmem:[#allocation4 + $0x650] sm:$0xff]
  %v2766 = vld [vmem:[#allocation4 + $0x658] sm:$0xff]
  %v2767 = vld [vmem:[#allocation4 + $0x660] sm:$0xff]
  %v2768 = vld [vmem:[#allocation4 + $0x668] sm:$0xff]
  %v2769 = vld [vmem:[#allocation4 + $0x670] sm:$0xff]
  %v2770 = vld [vmem:[#allocation4 + $0x678] sm:$0xff]
  %v2771 = vld [vmem:[#allocation4 + $0x680] sm:$0xff]
  %v2772 = vld [vmem:[#allocation4 + $0x688] sm:$0xff]
  %v2773 = vld [vmem:[#allocation4 + $0x690] sm:$0xff]
  %v2774 = vld [vmem:[#allocation4 + $0x698] sm:$0xff]
  %v2775 = vld [vmem:[#allocation4 + $0x6a0] sm:$0xff]
  %v2776 = vld [vmem:[#allocation4 + $0x6a8] sm:$0xff]
  %v2777 = vld [vmem:[#allocation4 + $0x6b0] sm:$0xff]
  %v2778 = vld [vmem:[#allocation4 + $0x6b8] sm:$0xff]
  %v2779 = vld [vmem:[#allocation4 + $0x6c0] sm:$0xff]
  %v2780 = vld [vmem:[#allocation4 + $0x6c8] sm:$0xff]
  %v2781 = vld [vmem:[#allocation4 + $0x6d0] sm:$0xff]
  %v2782 = vld [vmem:[#allocation4 + $0x6d8] sm:$0xff]
  %v2783 = vld [vmem:[#allocation4 + $0x6e0] sm:$0xff]
  %v2784 = vld [vmem:[#allocation4 + $0x6e8] sm:$0xff]
  %v2785 = vld [vmem:[#allocation4 + $0x6f0] sm:$0xff]
  %v2786 = vld [vmem:[#allocation4 + $0x6f8] sm:$0xff]
  %v2787 = vld [vmem:[#allocation4 + $0x700] sm:$0xff]
  %v2788 = vld [vmem:[#allocation4 + $0x708] sm:$0xff]
  %v2789 = vld [vmem:[#allocation4 + $0x710] sm:$0xff]
  %v2790 = vld [vmem:[#allocation4 + $0x718] sm:$0xff]
  %v2791 = vld [vmem:[#allocation4 + $0x720] sm:$0xff]
  %v2792 = vld [vmem:[#allocation4 + $0x728] sm:$0xff]
  %v2793 = vld [vmem:[#allocation4 + $0x730] sm:$0xff]
  %v2794 = vld [vmem:[#allocation4 + $0x738] sm:$0xff]
  %v2795 = vld [vmem:[#allocation4 + $0x740] sm:$0xff]
  %v2796 = vld [vmem:[#allocation4 + $0x748] sm:$0xff]
  %v2797 = vld [vmem:[#allocation4 + $0x750] sm:$0xff]
  %v2798 = vld [vmem:[#allocation4 + $0x758] sm:$0xff]
  %v2799 = vld [vmem:[#allocation4 + $0x760] sm:$0xff]
  %v2800 = vld [vmem:[#allocation4 + $0x768] sm:$0xff]
  %v2801 = vld [vmem:[#allocation4 + $0x770] sm:$0xff]
  %v2802 = vld [vmem:[#allocation4 + $0x778] sm:$0xff]
  %v2803 = vld [vmem:[#allocation4 + $0x780] sm:$0xff]
  %v2804 = vld [vmem:[#allocation4 + $0x788] sm:$0xff]
  %v2805 = vld [vmem:[#allocation4 + $0x790] sm:$0xff]
  %v2806 = vld [vmem:[#allocation4 + $0x798] sm:$0xff]
  %v2807 = vld [vmem:[#allocation4 + $0x7a0] sm:$0xff]
  %v2808 = vld [vmem:[#allocation4 + $0x7a8] sm:$0xff]
  %v2809 = vld [vmem:[#allocation4 + $0x7b0] sm:$0xff]
  %v2810 = vld [vmem:[#allocation4 + $0x7b8] sm:$0xff]
  %v2811 = vld [vmem:[#allocation4 + $0x7c0] sm:$0xff]
  %v2812 = vld [vmem:[#allocation4 + $0x7c8] sm:$0xff]
  %v2813 = vld [vmem:[#allocation4 + $0x7d0] sm:$0xff]
  %v2814 = vld [vmem:[#allocation4 + $0x7d8] sm:$0xff]
  %v2815 = vld [vmem:[#allocation4 + $0x7e0] sm:$0xff]
  %v2816 = vld [vmem:[#allocation4 + $0x7e8] sm:$0xff]
  %v2817 = vld [vmem:[#allocation4 + $0x7f0] sm:$0xff]
  %v2818 = vld [vmem:[#allocation4 + $0x7f8] sm:$0xff]
  %v2819 = vld [vmem:[#allocation4 + $0x800] sm:$0xff]
  %v2820 = vld [vmem:[#allocation4 + $0x808] sm:$0xff]
  %v2821 = vld [vmem:[#allocation4 + $0x810] sm:$0xff]
  %v2822 = vld [vmem:[#allocation4 + $0x818] sm:$0xff]
  %v2823 = vld [vmem:[#allocation4 + $0x820] sm:$0xff]
  %v2824 = vld [vmem:[#allocation4 + $0x828] sm:$0xff]
  %v2825 = vld [vmem:[#allocation4 + $0x830] sm:$0xff]
  %v2826 = vld [vmem:[#allocation4 + $0x838] sm:$0xff]
  %v2827 = vld [vmem:[#allocation4 + $0x840] sm:$0xff]
  %v2828 = vld [vmem:[#allocation4 + $0x848] sm:$0xff]
  %v2829 = vld [vmem:[#allocation4 + $0x850] sm:$0xff]
  %v2830 = vld [vmem:[#allocation4 + $0x858] sm:$0xff]
  %v2831 = vld [vmem:[#allocation4 + $0x860] sm:$0xff]
  %v2832 = vld [vmem:[#allocation4 + $0x868] sm:$0xff]
  %vm2833 = vcmask 850944
  %v2835 = vsel %vm2833, %v2556, 0
  %v2838 = vsel %vm2833, %v2559, 0
  %v2841 = vsel %vm2833, %v2562, 0
  %2843 = vmatpush.msra.mxu0 %v2653
  %2844 = vmatpush.msra.mxu0 %v2647
  %2845 = vmatpush.msra.mxu0 %v2641
  %2846 = vmatpush.msra.mxu0 %v2635
  %2847 = vmatpush.msra.mxu0 %v2629
  %2848 = vmatpush.msra.mxu0 %v2623
  %2849 = vmatpush.msra.mxu0 %v2617
  %2850 = vmatpush.msra.mxu0 %v2611
  %2851 = vmatpush.msra.mxu0 %v2605
  %2852 = vmatpush.msra.mxu0 %v2599
  %2853 = vmatpush.msra.mxu0 %v2593
  %2854 = vmatpush.msra.mxu0 %v2587
  %2855 = vmatpush.msra.mxu0 %v2581
  %2856 = vmatpush.msra.mxu0 %v2575
  %2857 = vmatpush.msra.mxu0 %v2569
  %2858 = vmatpush.msra.mxu0 %v2563
  %2859 = vmatmul.f32.gmra.mxu0 %v2554
  %v2860 = vpop.f32.mrf.mxu0
  %v2861 = vadd.f32 0.0, %v2860
  %2862 = vmatmul.f32.gmra.mxu0 %v2557
  %v2863 = vpop.f32.mrf.mxu0
  %v2864 = vadd.f32 0.0, %v2863
  %2865 = vmatmul.f32.gmra.mxu0 %v2560
  %v2866 = vpop.f32.mrf.mxu0
  %v2867 = vadd.f32 0.0, %v2866
  %2868 = vdwg.mxu0
  %2869 = vmatpush.msra.mxu0 %v2749
  %2870 = vmatpush.msra.mxu0 %v2743
  %2871 = vmatpush.msra.mxu0 %v2737
  %2872 = vmatpush.msra.mxu0 %v2731
  %2873 = vmatpush.msra.mxu0 %v2725
  %2874 = vmatpush.msra.mxu0 %v2719
  %2875 = vmatpush.msra.mxu0 %v2713
  %2876 = vmatpush.msra.mxu0 %v2707
  %2877 = vmatpush.msra.mxu0 %v2701
  %2878 = vmatpush.msra.mxu0 %v2695
  %2879 = vmatpush.msra.mxu0 %v2689
  %2880 = vmatpush.msra.mxu0 %v2683
  %2881 = vmatpush.msra.mxu0 %v2677
  %2882 = vmatpush.msra.mxu0 %v2671
  %2883 = vmatpush.msra.mxu0 %v2665
  %2884 = vmatpush.msra.mxu0 %v2659
  %2885 = vmatmul.f32.gmra.mxu0 %v2555
  %v2886 = vpop.f32.mrf.mxu0
  %v2887 = vadd.f32 %v2861, %v2886
  %2888 = vmatmul.f32.gmra.mxu0 %v2558
  %v2889 = vpop.f32.mrf.mxu0
  %v2890 = vadd.f32 %v2864, %v2889
  %2891 = vmatmul.f32.gmra.mxu0 %v2561
  %v2892 = vpop.f32.mrf.mxu0
  %v2893 = vadd.f32 %v2867, %v2892
  %2894 = vdwg.mxu0
  %2895 = vmatpush.msra.mxu0 0.0
  %2896 = vmatpush.msra.mxu0 0.0
  %2897 = vmatpush.msra.mxu0 0.0
  %2898 = vmatpush.msra.mxu0 %v2827
  %2899 = vmatpush.msra.mxu0 %v2821
  %2900 = vmatpush.msra.mxu0 %v2815
  %2901 = vmatpush.msra.mxu0 %v2809
  %2902 = vmatpush.msra.mxu0 %v2803
  %2903 = vmatpush.msra.mxu0 %v2797
  %2904 = vmatpush.msra.mxu0 %v2791
  %2905 = vmatpush.msra.mxu0 %v2785
  %2906 = vmatpush.msra.mxu0 %v2779
  %2907 = vmatpush.msra.mxu0 %v2773
  %2908 = vmatpush.msra.mxu0 %v2767
  %2909 = vmatpush.msra.mxu0 %v2761
  %2910 = vmatpush.msra.mxu0 %v2755
  %2911 = vmatmul.f32.gmra.mxu0 %v2835
  %v2912 = vpop.f32.mrf.mxu0
  %v2913 = vadd.f32 %v2887, %v2912
  %2914 = vmatmul.f32.gmra.mxu0 %v2838
  %v2915 = vpop.f32.mrf.mxu0
  %v2916 = vadd.f32 %v2890, %v2915
  %2917 = vmatmul.f32.gmra.mxu0 %v2841
  %v2918 = vpop.f32.mrf.mxu0
  %v2919 = vadd.f32 %v2893, %v2918
  %2920 = vdwg.mxu0
  %2921 = vmatpush.msra.mxu0 %v2654
  %2922 = vmatpush.msra.mxu0 %v2648
  %2923 = vmatpush.msra.mxu0 %v2642
  %2924 = vmatpush.msra.mxu0 %v2636
  %2925 = vmatpush.msra.mxu0 %v2630
  %2926 = vmatpush.msra.mxu0 %v2624
  %2927 = vmatpush.msra.mxu0 %v2618
  %2928 = vmatpush.msra.mxu0 %v2612
  %2929 = vmatpush.msra.mxu0 %v2606
  %2930 = vmatpush.msra.mxu0 %v2600
  %2931 = vmatpush.msra.mxu0 %v2594
  %2932 = vmatpush.msra.mxu0 %v2588
  %2933 = vmatpush.msra.mxu0 %v2582
  %2934 = vmatpush.msra.mxu0 %v2576
  %2935 = vmatpush.msra.mxu0 %v2570
  %2936 = vmatpush.msra.mxu0 %v2564
  %2937 = vmatmul.f32.gmra.mxu0 %v2554
  %v2938 = vpop.f32.mrf.mxu0
  %v2939 = vadd.f32 0.0, %v2938
  %2940 = vmatmul.f32.gmra.mxu0 %v2557
  %v2941 = vpop.f32.mrf.mxu0
  %v2942 = vadd.f32 0.0, %v2941
  %2943 = vmatmul.f32.gmra.mxu0 %v2560
  %v2944 = vpop.f32.mrf.mxu0
  %v2945 = vadd.f32 0.0, %v2944
  %2946 = vdwg.mxu0
  %2947 = vmatpush.msra.mxu0 %v2750
  %2948 = vmatpush.msra.mxu0 %v2744
  %2949 = vmatpush.msra.mxu0 %v2738
  %2950 = vmatpush.msra.mxu0 %v2732
  %2951 = vmatpush.msra.mxu0 %v2726
  %2952 = vmatpush.msra.mxu0 %v2720
  %2953 = vmatpush.msra.mxu0 %v2714
  %2954 = vmatpush.msra.mxu0 %v2708
  %2955 = vmatpush.msra.mxu0 %v2702
  %2956 = vmatpush.msra.mxu0 %v2696
  %2957 = vmatpush.msra.mxu0 %v2690
  %2958 = vmatpush.msra.mxu0 %v2684
  %2959 = vmatpush.msra.mxu0 %v2678
  %2960 = vmatpush.msra.mxu0 %v2672
  %2961 = vmatpush.msra.mxu0 %v2666
  %2962 = vmatpush.msra.mxu0 %v2660
  %2963 = vmatmul.f32.gmra.mxu0 %v2555
  %v2964 = vpop.f32.mrf.mxu0
  %v2965 = vadd.f32 %v2939, %v2964
  %2966 = vmatmul.f32.gmra.mxu0 %v2558
  %v2967 = vpop.f32.mrf.mxu0
  %v2968 = vadd.f32 %v2942, %v2967
  %2969 = vmatmul.f32.gmra.mxu0 %v2561
  %v2970 = vpop.f32.mrf.mxu0
  %v2971 = vadd.f32 %v2945, %v2970
  %2972 = vdwg.mxu0
  %2973 = vmatpush.msra.mxu0 0.0
  %2974 = vmatpush.msra.mxu0 0.0
  %2975 = vmatpush.msra.mxu0 0.0
  %2976 = vmatpush.msra.mxu0 %v2828
  %2977 = vmatpush.msra.mxu0 %v2822
  %2978 = vmatpush.msra.mxu0 %v2816
  %2979 = vmatpush.msra.mxu0 %v2810
  %2980 = vmatpush.msra.mxu0 %v2804
  %2981 = vmatpush.msra.mxu0 %v2798
  %2982 = vmatpush.msra.mxu0 %v2792
  %2983 = vmatpush.msra.mxu0 %v2786
  %2984 = vmatpush.msra.mxu0 %v2780
  %2985 = vmatpush.msra.mxu0 %v2774
  %2986 = vmatpush.msra.mxu0 %v2768
  %2987 = vmatpush.msra.mxu0 %v2762
  %2988 = vmatpush.msra.mxu0 %v2756
  %2989 = vmatmul.f32.gmra.mxu0 %v2835
  %v2990 = vpop.f32.mrf.mxu0
  %v2991 = vadd.f32 %v2965, %v2990
  %2992 = vmatmul.f32.gmra.mxu0 %v2838
  %v2993 = vpop.f32.mrf.mxu0
  %v2994 = vadd.f32 %v2968, %v2993
  %2995 = vmatmul.f32.gmra.mxu0 %v2841
  %v2996 = vpop.f32.mrf.mxu0
  %v2997 = vadd.f32 %v2971, %v2996
  %2998 = vdwg.mxu0
  %2999 = vmatpush.msra.mxu0 %v2655
  %3000 = vmatpush.msra.mxu0 %v2649
  %3001 = vmatpush.msra.mxu0 %v2643
  %3002 = vmatpush.msra.mxu0 %v2637
  %3003 = vmatpush.msra.mxu0 %v2631
  %3004 = vmatpush.msra.mxu0 %v2625
  %3005 = vmatpush.msra.mxu0 %v2619
  %3006 = vmatpush.msra.mxu0 %v2613
  %3007 = vmatpush.msra.mxu0 %v2607
  %3008 = vmatpush.msra.mxu0 %v2601
  %3009 = vmatpush.msra.mxu0 %v2595
  %3010 = vmatpush.msra.mxu0 %v2589
  %3011 = vmatpush.msra.mxu0 %v2583
  %3012 = vmatpush.msra.mxu0 %v2577
  %3013 = vmatpush.msra.mxu0 %v2571
  %3014 = vmatpush.msra.mxu0 %v2565
  %3015 = vmatmul.f32.gmra.mxu0 %v2554
  %v3016 = vpop.f32.mrf.mxu0
  %v3017 = vadd.f32 0.0, %v3016
  %3018 = vmatmul.f32.gmra.mxu0 %v2557
  %v3019 = vpop.f32.mrf.mxu0
  %v3020 = vadd.f32 0.0, %v3019
  %3021 = vmatmul.f32.gmra.mxu0 %v2560
  %v3022 = vpop.f32.mrf.mxu0
  %v3023 = vadd.f32 0.0, %v3022
  %3024 = vdwg.mxu0
  %3025 = vmatpush.msra.mxu0 %v2751
  %3026 = vmatpush.msra.mxu0 %v2745
  %3027 = vmatpush.msra.mxu0 %v2739
  %3028 = vmatpush.msra.mxu0 %v2733
  %3029 = vmatpush.msra.mxu0 %v2727
  %3030 = vmatpush.msra.mxu0 %v2721
  %3031 = vmatpush.msra.mxu0 %v2715
  %3032 = vmatpush.msra.mxu0 %v2709
  %3033 = vmatpush.msra.mxu0 %v2703
  %3034 = vmatpush.msra.mxu0 %v2697
  %3035 = vmatpush.msra.mxu0 %v2691
  %3036 = vmatpush.msra.mxu0 %v2685
  %3037 = vmatpush.msra.mxu0 %v2679
  %3038 = vmatpush.msra.mxu0 %v2673
  %3039 = vmatpush.msra.mxu0 %v2667
  %3040 = vmatpush.msra.mxu0 %v2661
  %3041 = vmatmul.f32.gmra.mxu0 %v2555
  %v3042 = vpop.f32.mrf.mxu0
  %v3043 = vadd.f32 %v3017, %v3042
  %3044 = vmatmul.f32.gmra.mxu0 %v2558
  %v3045 = vpop.f32.mrf.mxu0
  %v3046 = vadd.f32 %v3020, %v3045
  %3047 = vmatmul.f32.gmra.mxu0 %v2561
  %v3048 = vpop.f32.mrf.mxu0
  %v3049 = vadd.f32 %v3023, %v3048
  %3050 = vdwg.mxu0
  %3051 = vmatpush.msra.mxu0 0.0
  %3052 = vmatpush.msra.mxu0 0.0
  %3053 = vmatpush.msra.mxu0 0.0
  %3054 = vmatpush.msra.mxu0 %v2829
  %3055 = vmatpush.msra.mxu0 %v2823
  %3056 = vmatpush.msra.mxu0 %v2817
  %3057 = vmatpush.msra.mxu0 %v2811
  %3058 = vmatpush.msra.mxu0 %v2805
  %3059 = vmatpush.msra.mxu0 %v2799
  %3060 = vmatpush.msra.mxu0 %v2793
  %3061 = vmatpush.msra.mxu0 %v2787
  %3062 = vmatpush.msra.mxu0 %v2781
  %3063 = vmatpush.msra.mxu0 %v2775
  %3064 = vmatpush.msra.mxu0 %v2769
  %3065 = vmatpush.msra.mxu0 %v2763
  %3066 = vmatpush.msra.mxu0 %v2757
  %3067 = vmatmul.f32.gmra.mxu0 %v2835
  %v3068 = vpop.f32.mrf.mxu0
  %v3069 = vadd.f32 %v3043, %v3068
  %3070 = vmatmul.f32.gmra.mxu0 %v2838
  %v3071 = vpop.f32.mrf.mxu0
  %v3072 = vadd.f32 %v3046, %v3071
  %3073 = vmatmul.f32.gmra.mxu0 %v2841
  %v3074 = vpop.f32.mrf.mxu0
  %v3075 = vadd.f32 %v3049, %v3074
  %3076 = vdwg.mxu0
  %3077 = vmatpush.msra.mxu0 %v2656
  %3078 = vmatpush.msra.mxu0 %v2650
  %3079 = vmatpush.msra.mxu0 %v2644
  %3080 = vmatpush.msra.mxu0 %v2638
  %3081 = vmatpush.msra.mxu0 %v2632
  %3082 = vmatpush.msra.mxu0 %v2626
  %3083 = vmatpush.msra.mxu0 %v2620
  %3084 = vmatpush.msra.mxu0 %v2614
  %3085 = vmatpush.msra.mxu0 %v2608
  %3086 = vmatpush.msra.mxu0 %v2602
  %3087 = vmatpush.msra.mxu0 %v2596
  %3088 = vmatpush.msra.mxu0 %v2590
  %3089 = vmatpush.msra.mxu0 %v2584
  %3090 = vmatpush.msra.mxu0 %v2578
  %3091 = vmatpush.msra.mxu0 %v2572
  %3092 = vmatpush.msra.mxu0 %v2566
  %3093 = vmatmul.f32.gmra.mxu0 %v2554
  %v3094 = vpop.f32.mrf.mxu0
  %v3095 = vadd.f32 0.0, %v3094
  %3096 = vmatmul.f32.gmra.mxu0 %v2557
  %v3097 = vpop.f32.mrf.mxu0
  %v3098 = vadd.f32 0.0, %v3097
  %3099 = vmatmul.f32.gmra.mxu0 %v2560
  %v3100 = vpop.f32.mrf.mxu0
  %v3101 = vadd.f32 0.0, %v3100
  %3102 = vdwg.mxu0
  %3103 = vmatpush.msra.mxu0 %v2752
  %3104 = vmatpush.msra.mxu0 %v2746
  %3105 = vmatpush.msra.mxu0 %v2740
  %3106 = vmatpush.msra.mxu0 %v2734
  %3107 = vmatpush.msra.mxu0 %v2728
  %3108 = vmatpush.msra.mxu0 %v2722
  %3109 = vmatpush.msra.mxu0 %v2716
  %3110 = vmatpush.msra.mxu0 %v2710
  %3111 = vmatpush.msra.mxu0 %v2704
  %3112 = vmatpush.msra.mxu0 %v2698
  %3113 = vmatpush.msra.mxu0 %v2692
  %3114 = vmatpush.msra.mxu0 %v2686
  %3115 = vmatpush.msra.mxu0 %v2680
  %3116 = vmatpush.msra.mxu0 %v2674
  %3117 = vmatpush.msra.mxu0 %v2668
  %3118 = vmatpush.msra.mxu0 %v2662
  %3119 = vmatmul.f32.gmra.mxu0 %v2555
  %v3120 = vpop.f32.mrf.mxu0
  %v3121 = vadd.f32 %v3095, %v3120
  %3122 = vmatmul.f32.gmra.mxu0 %v2558
  %v3123 = vpop.f32.mrf.mxu0
  %v3124 = vadd.f32 %v3098, %v3123
  %3125 = vmatmul.f32.gmra.mxu0 %v2561
  %v3126 = vpop.f32.mrf.mxu0
  %v3127 = vadd.f32 %v3101, %v3126
  %3128 = vdwg.mxu0
  %3129 = vmatpush.msra.mxu0 0.0
  %3130 = vmatpush.msra.mxu0 0.0
  %3131 = vmatpush.msra.mxu0 0.0
  %3132 = vmatpush.msra.mxu0 %v2830
  %3133 = vmatpush.msra.mxu0 %v2824
  %3134 = vmatpush.msra.mxu0 %v2818
  %3135 = vmatpush.msra.mxu0 %v2812
  %3136 = vmatpush.msra.mxu0 %v2806
  %3137 = vmatpush.msra.mxu0 %v2800
  %3138 = vmatpush.msra.mxu0 %v2794
  %3139 = vmatpush.msra.mxu0 %v2788
  %3140 = vmatpush.msra.mxu0 %v2782
  %3141 = vmatpush.msra.mxu0 %v2776
  %3142 = vmatpush.msra.mxu0 %v2770
  %3143 = vmatpush.msra.mxu0 %v2764
  %3144 = vmatpush.msra.mxu0 %v2758
  %3145 = vmatmul.f32.gmra.mxu0 %v2835
  %v3146 = vpop.f32.mrf.mxu0
  %v3147 = vadd.f32 %v3121, %v3146
  %3148 = vmatmul.f32.gmra.mxu0 %v2838
  %v3149 = vpop.f32.mrf.mxu0
  %v3150 = vadd.f32 %v3124, %v3149
  %3151 = vmatmul.f32.gmra.mxu0 %v2841
  %v3152 = vpop.f32.mrf.mxu0
  %v3153 = vadd.f32 %v3127, %v3152
  %3154 = vdwg.mxu0
  %3155 = vmatpush.msra.mxu0 %v2657
  %3156 = vmatpush.msra.mxu0 %v2651
  %3157 = vmatpush.msra.mxu0 %v2645
  %3158 = vmatpush.msra.mxu0 %v2639
  %3159 = vmatpush.msra.mxu0 %v2633
  %3160 = vmatpush.msra.mxu0 %v2627
  %3161 = vmatpush.msra.mxu0 %v2621
  %3162 = vmatpush.msra.mxu0 %v2615
  %3163 = vmatpush.msra.mxu0 %v2609
  %3164 = vmatpush.msra.mxu0 %v2603
  %3165 = vmatpush.msra.mxu0 %v2597
  %3166 = vmatpush.msra.mxu0 %v2591
  %3167 = vmatpush.msra.mxu0 %v2585
  %3168 = vmatpush.msra.mxu0 %v2579
  %3169 = vmatpush.msra.mxu0 %v2573
  %3170 = vmatpush.msra.mxu0 %v2567
  %3171 = vmatmul.f32.gmra.mxu0 %v2554
  %v3172 = vpop.f32.mrf.mxu0
  %v3173 = vadd.f32 0.0, %v3172
  %3174 = vmatmul.f32.gmra.mxu0 %v2557
  %v3175 = vpop.f32.mrf.mxu0
  %v3176 = vadd.f32 0.0, %v3175
  %3177 = vmatmul.f32.gmra.mxu0 %v2560
  %v3178 = vpop.f32.mrf.mxu0
  %v3179 = vadd.f32 0.0, %v3178
  %3180 = vdwg.mxu0
  %3181 = vmatpush.msra.mxu0 %v2753
  %3182 = vmatpush.msra.mxu0 %v2747
  %3183 = vmatpush.msra.mxu0 %v2741
  %3184 = vmatpush.msra.mxu0 %v2735
  %3185 = vmatpush.msra.mxu0 %v2729
  %3186 = vmatpush.msra.mxu0 %v2723
  %3187 = vmatpush.msra.mxu0 %v2717
  %3188 = vmatpush.msra.mxu0 %v2711
  %3189 = vmatpush.msra.mxu0 %v2705
  %3190 = vmatpush.msra.mxu0 %v2699
  %3191 = vmatpush.msra.mxu0 %v2693
  %3192 = vmatpush.msra.mxu0 %v2687
  %3193 = vmatpush.msra.mxu0 %v2681
  %3194 = vmatpush.msra.mxu0 %v2675
  %3195 = vmatpush.msra.mxu0 %v2669
  %3196 = vmatpush.msra.mxu0 %v2663
  %3197 = vmatmul.f32.gmra.mxu0 %v2555
  %v3198 = vpop.f32.mrf.mxu0
  %v3199 = vadd.f32 %v3173, %v3198
  %3200 = vmatmul.f32.gmra.mxu0 %v2558
  %v3201 = vpop.f32.mrf.mxu0
  %v3202 = vadd.f32 %v3176, %v3201
  %3203 = vmatmul.f32.gmra.mxu0 %v2561
  %v3204 = vpop.f32.mrf.mxu0
  %v3205 = vadd.f32 %v3179, %v3204
  %3206 = vdwg.mxu0
  %3207 = vmatpush.msra.mxu0 0.0
  %3208 = vmatpush.msra.mxu0 0.0
  %3209 = vmatpush.msra.mxu0 0.0
  %3210 = vmatpush.msra.mxu0 %v2831
  %3211 = vmatpush.msra.mxu0 %v2825
  %3212 = vmatpush.msra.mxu0 %v2819
  %3213 = vmatpush.msra.mxu0 %v2813
  %3214 = vmatpush.msra.mxu0 %v2807
  %3215 = vmatpush.msra.mxu0 %v2801
  %3216 = vmatpush.msra.mxu0 %v2795
  %3217 = vmatpush.msra.mxu0 %v2789
  %3218 = vmatpush.msra.mxu0 %v2783
  %3219 = vmatpush.msra.mxu0 %v2777
  %3220 = vmatpush.msra.mxu0 %v2771
  %3221 = vmatpush.msra.mxu0 %v2765
  %3222 = vmatpush.msra.mxu0 %v2759
  %3223 = vmatmul.f32.gmra.mxu0 %v2835
  %v3224 = vpop.f32.mrf.mxu0
  %v3225 = vadd.f32 %v3199, %v3224
  %3226 = vmatmul.f32.gmra.mxu0 %v2838
  %v3227 = vpop.f32.mrf.mxu0
  %v3228 = vadd.f32 %v3202, %v3227
  %3229 = vmatmul.f32.gmra.mxu0 %v2841
  %v3230 = vpop.f32.mrf.mxu0
  %v3231 = vadd.f32 %v3205, %v3230
  %3232 = vdwg.mxu0
  %3233 = vmatpush.msra.mxu0 %v2658
  %3234 = vmatpush.msra.mxu0 %v2652
  %3235 = vmatpush.msra.mxu0 %v2646
  %3236 = vmatpush.msra.mxu0 %v2640
  %3237 = vmatpush.msra.mxu0 %v2634
  %3238 = vmatpush.msra.mxu0 %v2628
  %3239 = vmatpush.msra.mxu0 %v2622
  %3240 = vmatpush.msra.mxu0 %v2616
  %3241 = vmatpush.msra.mxu0 %v2610
  %3242 = vmatpush.msra.mxu0 %v2604
  %3243 = vmatpush.msra.mxu0 %v2598
  %3244 = vmatpush.msra.mxu0 %v2592
  %3245 = vmatpush.msra.mxu0 %v2586
  %3246 = vmatpush.msra.mxu0 %v2580
  %3247 = vmatpush.msra.mxu0 %v2574
  %3248 = vmatpush.msra.mxu0 %v2568
  %3249 = vmatmul.f32.gmra.mxu0 %v2554
  %v3250 = vpop.f32.mrf.mxu0
  %v3251 = vadd.f32 0.0, %v3250
  %3252 = vmatmul.f32.gmra.mxu0 %v2557
  %v3253 = vpop.f32.mrf.mxu0
  %v3254 = vadd.f32 0.0, %v3253
  %3255 = vmatmul.f32.gmra.mxu0 %v2560
  %v3256 = vpop.f32.mrf.mxu0
  %v3257 = vadd.f32 0.0, %v3256
  %3258 = vdwg.mxu0
  %3259 = vmatpush.msra.mxu0 %v2754
  %3260 = vmatpush.msra.mxu0 %v2748
  %3261 = vmatpush.msra.mxu0 %v2742
  %3262 = vmatpush.msra.mxu0 %v2736
  %3263 = vmatpush.msra.mxu0 %v2730
  %3264 = vmatpush.msra.mxu0 %v2724
  %3265 = vmatpush.msra.mxu0 %v2718
  %3266 = vmatpush.msra.mxu0 %v2712
  %3267 = vmatpush.msra.mxu0 %v2706
  %3268 = vmatpush.msra.mxu0 %v2700
  %3269 = vmatpush.msra.mxu0 %v2694
  %3270 = vmatpush.msra.mxu0 %v2688
  %3271 = vmatpush.msra.mxu0 %v2682
  %3272 = vmatpush.msra.mxu0 %v2676
  %3273 = vmatpush.msra.mxu0 %v2670
  %3274 = vmatpush.msra.mxu0 %v2664
  %3275 = vmatmul.f32.gmra.mxu0 %v2555
  %v3276 = vpop.f32.mrf.mxu0
  %v3277 = vadd.f32 %v3251, %v3276
  %3278 = vmatmul.f32.gmra.mxu0 %v2558
  %v3279 = vpop.f32.mrf.mxu0
  %v3280 = vadd.f32 %v3254, %v3279
  %3281 = vmatmul.f32.gmra.mxu0 %v2561
  %v3282 = vpop.f32.mrf.mxu0
  %v3283 = vadd.f32 %v3257, %v3282
  %3284 = vdwg.mxu0
  %3285 = vmatpush.msra.mxu0 0.0
  %3286 = vmatpush.msra.mxu0 0.0
  %3287 = vmatpush.msra.mxu0 0.0
  %3288 = vmatpush.msra.mxu0 %v2832
  %3289 = vmatpush.msra.mxu0 %v2826
  %3290 = vmatpush.msra.mxu0 %v2820
  %3291 = vmatpush.msra.mxu0 %v2814
  %3292 = vmatpush.msra.mxu0 %v2808
  %3293 = vmatpush.msra.mxu0 %v2802
  %3294 = vmatpush.msra.mxu0 %v2796
  %3295 = vmatpush.msra.mxu0 %v2790
  %3296 = vmatpush.msra.mxu0 %v2784
  %3297 = vmatpush.msra.mxu0 %v2778
  %3298 = vmatpush.msra.mxu0 %v2772
  %3299 = vmatpush.msra.mxu0 %v2766
  %3300 = vmatpush.msra.mxu0 %v2760
  %3301 = vmatmul.f32.gmra.mxu0 %v2835
  %v3302 = vpop.f32.mrf.mxu0
  %v3303 = vadd.f32 %v3277, %v3302
  %3304 = vmatmul.f32.gmra.mxu0 %v2838
  %v3305 = vpop.f32.mrf.mxu0
  %v3306 = vadd.f32 %v3280, %v3305
  %3307 = vmatmul.f32.gmra.mxu0 %v2841
  %v3308 = vpop.f32.mrf.mxu0
  %v3309 = vadd.f32 %v3283, %v3308
  %3310 = vdwg.mxu0
  %v3311 = vld [vmem:[%s7] sm:$0x3f]
  %v3313 = vperm.slane %v3311, 0
  %v3314 = vperm.slane %v3311, 1
  %v3315 = vperm.slane %v3311, 2
  %v3316 = vperm.slane %v3311, 3
  %v3317 = vperm.slane %v3311, 4
  %v3318 = vperm.slane %v3311, 5
  %v3325 = vmul.f32 %v2913, %v3313
  %v3326 = vmul.f32 %v2991, %v3314
  %v3327 = vmul.f32 %v3069, %v3315
  %v3328 = vmul.f32 %v3147, %v3316
  %v3329 = vmul.f32 %v3225, %v3317
  %v3330 = vmul.f32 %v3303, %v3318
  %v3331 = vmul.f32 %v2916, %v3313
  %v3332 = vmul.f32 %v2994, %v3314
  %v3333 = vmul.f32 %v3072, %v3315
  %v3334 = vmul.f32 %v3150, %v3316
  %v3335 = vmul.f32 %v3228, %v3317
  %v3336 = vmul.f32 %v3306, %v3318
  %v3337 = vmul.f32 %v2919, %v3313
  %v3338 = vmul.f32 %v2997, %v3314
  %v3339 = vmul.f32 %v3075, %v3315
  %v3340 = vmul.f32 %v3153, %v3316
  %v3341 = vmul.f32 %v3231, %v3317
  %v3342 = vmul.f32 %v3309, %v3318
  %v3343 = vadd.f32 %v3325, %v3326
  %v3344 = vadd.f32 %v3343, %v3327
  %v3345 = vadd.f32 %v3344, %v3328
  %v3346 = vadd.f32 %v3345, %v3329
  %v3347 = vadd.f32 %v3346, %v3330
  %3348 = vadd.xlane.f32.xlu0 %v3347
  %v3349 = vpop.xlane.xlu0 %3348
  %v3350 = vadd.f32 %v3331, %v3332
  %v3351 = vadd.f32 %v3350, %v3333
  %v3352 = vadd.f32 %v3351, %v3334
  %v3353 = vadd.f32 %v3352, %v3335
  %v3354 = vadd.f32 %v3353, %v3336
  %3355 = vadd.xlane.f32.xlu0 %v3354
  %v3356 = vpop.xlane.xlu0 %3355
  %v3357 = vadd.f32 %v3337, %v3338
  %v3358 = vadd.f32 %v3357, %v3339
  %v3359 = vadd.f32 %v3358, %v3340
  %v3360 = vadd.f32 %v3359, %v3341
  %v3361 = vadd.f32 %v3360, %v3342
  %3362 = vadd.xlane.f32.xlu0 %v3361
  %v3363 = vpop.xlane.xlu0 %3362
  %v3364 = vmul.f32 %v3349, 0.0078125
  %v3365 = vmul.f32 %v3356, 0.0078125
  %v3366 = vmul.f32 %v3363, 0.0078125
  %v3367 = vmul.f32 %v3325, %v2913
  %v3368 = vmul.f32 %v3326, %v2991
  %v3369 = vmul.f32 %v3327, %v3069
  %v3370 = vmul.f32 %v3328, %v3147
  %v3371 = vmul.f32 %v3329, %v3225
  %v3372 = vmul.f32 %v3330, %v3303
  %v3373 = vmul.f32 %v3331, %v2916
  %v3374 = vmul.f32 %v3332, %v2994
  %v3375 = vmul.f32 %v3333, %v3072
  %v3376 = vmul.f32 %v3334, %v3150
  %v3377 = vmul.f32 %v3335, %v3228
  %v3378 = vmul.f32 %v3336, %v3306
  %v3379 = vmul.f32 %v3337, %v2919
  %v3380 = vmul.f32 %v3338, %v2997
  %v3381 = vmul.f32 %v3339, %v3075
  %v3382 = vmul.f32 %v3340, %v3153
  %v3383 = vmul.f32 %v3341, %v3231
  %v3384 = vmul.f32 %v3342, %v3309
  %v3385 = vadd.f32 %v3367, %v3368
  %v3386 = vadd.f32 %v3385, %v3369
  %v3387 = vadd.f32 %v3386, %v3370
  %v3388 = vadd.f32 %v3387, %v3371
  %v3389 = vadd.f32 %v3388, %v3372
  %3390 = vadd.xlane.f32.xlu0 %v3389
  %v3391 = vpop.xlane.xlu0 %3390
  %v3392 = vadd.f32 %v3373, %v3374
  %v3393 = vadd.f32 %v3392, %v3375
  %v3394 = vadd.f32 %v3393, %v3376
  %v3395 = vadd.f32 %v3394, %v3377
  %v3396 = vadd.f32 %v3395, %v3378
  %3397 = vadd.xlane.f32.xlu0 %v3396
  %v3398 = vpop.xlane.xlu0 %3397
  %v3399 = vadd.f32 %v3379, %v3380
  %v3400 = vadd.f32 %v3399, %v3381
  %v3401 = vadd.f32 %v3400, %v3382
  %v3402 = vadd.f32 %v3401, %v3383
  %v3403 = vadd.f32 %v3402, %v3384
  %3404 = vadd.xlane.f32.xlu0 %v3403
  %v3405 = vpop.xlane.xlu0 %3404
  %v3406 = vmul.f32 %v3391, 0.0078125
  %v3407 = vmul.f32 %v3398, 0.0078125
  %v3408 = vmul.f32 %v3405, 0.0078125
  %v3409 = vmul.f32 %v3364, %v3364
  %v3410 = vmul.f32 %v3365, %v3365
  %v3411 = vmul.f32 %v3366, %v3366
  %v3412 = vsub.f32 %v3406, %v3409
  %v3413 = vsub.f32 %v3407, %v3410
  %v3414 = vsub.f32 %v3408, %v3411
  %v3415 = vld [vmem:[%s3] sm:$0xff]
  %v3416 = vld [vmem:[%s3 + $0x8] sm:$0xff]
  %v3417 = vld [vmem:[%s3 + $0x10] sm:$0xff]
  %v3418 = vadd.f32 %v3412, 0.001
  %v3419 = vadd.f32 %v3413, 0.001
  %v3420 = vadd.f32 %v3414, 0.001
  %v3421 = vrsqrt.pop %v3418
  %v3422 = vmul.f32 %v3421, %v3418
  %v3423 = vmul.f32 %v3422, %v3421
  %v3424 = vmul.f32 0.5, %v3423
  %v3425 = vsub.f32 1.5, %v3424
  %v3426 = vmul.f32 %v3421, %v3425
  %vm3427 = vweird.f32 %v3418
  %vm3428 = vweird.f32 %v3421
  %vm3429 = vmor %vm3427, %vm3428
  %v3430 = vsel %vm3429, %v3421, %v3426
  %v3431 = vrsqrt.pop %v3419
  %v3432 = vmul.f32 %v3431, %v3419
  %v3433 = vmul.f32 %v3432, %v3431
  %v3434 = vmul.f32 0.5, %v3433
  %v3435 = vsub.f32 1.5, %v3434
  %v3436 = vmul.f32 %v3431, %v3435
  %vm3437 = vweird.f32 %v3419
  %vm3438 = vweird.f32 %v3431
  %vm3439 = vmor %vm3437, %vm3438
  %v3440 = vsel %vm3439, %v3431, %v3436
  %v3441 = vrsqrt.pop %v3420
  %v3442 = vmul.f32 %v3441, %v3420
  %v3443 = vmul.f32 %v3442, %v3441
  %v3444 = vmul.f32 0.5, %v3443
  %v3445 = vsub.f32 1.5, %v3444
  %v3446 = vmul.f32 %v3441, %v3445
  %vm3447 = vweird.f32 %v3420
  %vm3448 = vweird.f32 %v3441
  %vm3449 = vmor %vm3447, %vm3448
  %v3450 = vsel %vm3449, %v3441, %v3446
  %v3451 = vmul.f32 %v3415, %v3430
  %v3452 = vmul.f32 %v3416, %v3440
  %v3453 = vmul.f32 %v3417, %v3450
  %v3454 = vld [vmem:[%s4] sm:$0xff]
  %v3455 = vld [vmem:[%s4 + $0x8] sm:$0xff]
  %v3456 = vld [vmem:[%s4 + $0x10] sm:$0xff]
  %v3457 = vmul.f32 %v3364, %v3451
  %v3458 = vmul.f32 %v3365, %v3452
  %v3459 = vmul.f32 %v3366, %v3453
  %v3460 = vsub.f32 %v3454, %v3457
  %v3461 = vsub.f32 %v3455, %v3458
  %v3462 = vsub.f32 %v3456, %v3459
  %3464 = vset.pattern.permute.xlu0 0
  %3465 = vperm.xlu0 %3464, %v3451
  %v3466 = vpop.permute.xlu0 %3465
  %3469 = vset.pattern.permute.xlu0 0
  %3470 = vperm.xlu0 %3469, %v3452
  %v3471 = vpop.permute.xlu0 %3470
  %3474 = vset.pattern.permute.xlu0 0
  %3475 = vperm.xlu0 %3474, %v3453
  %v3476 = vpop.permute.xlu0 %3475
  %v3478 = vmul.f32 %v2913, %v3466
  %v3479 = vmul.f32 %v2991, %v3466
  %v3480 = vmul.f32 %v3069, %v3466
  %v3481 = vmul.f32 %v3147, %v3466
  %v3482 = vmul.f32 %v3225, %v3466
  %v3483 = vmul.f32 %v3303, %v3466
  %v3484 = vmul.f32 %v2916, %v3471
  %v3485 = vmul.f32 %v2994, %v3471
  %v3486 = vmul.f32 %v3072, %v3471
  %v3487 = vmul.f32 %v3150, %v3471
  %v3488 = vmul.f32 %v3228, %v3471
  %v3489 = vmul.f32 %v3306, %v3471
  %v3490 = vmul.f32 %v2919, %v3476
  %v3491 = vmul.f32 %v2997, %v3476
  %v3492 = vmul.f32 %v3075, %v3476
  %v3493 = vmul.f32 %v3153, %v3476
  %v3494 = vmul.f32 %v3231, %v3476
  %v3495 = vmul.f32 %v3309, %v3476
  %3497 = vset.pattern.permute.xlu0 0
  %3498 = vperm.xlu0 %3497, %v3460
  %v3499 = vpop.permute.xlu0 %3498
  %3502 = vset.pattern.permute.xlu0 0
  %3503 = vperm.xlu0 %3502, %v3461
  %v3504 = vpop.permute.xlu0 %3503
  %3507 = vset.pattern.permute.xlu0 0
  %3508 = vperm.xlu0 %3507, %v3462
  %v3509 = vpop.permute.xlu0 %3508
  %v3511 = vadd.f32 %v3478, %v3499
  %v3512 = vadd.f32 %v3479, %v3499
  %v3513 = vadd.f32 %v3480, %v3499
  %v3514 = vadd.f32 %v3481, %v3499
  %v3515 = vadd.f32 %v3482, %v3499
  %v3516 = vadd.f32 %v3483, %v3499
  %v3517 = vadd.f32 %v3484, %v3504
  %v3518 = vadd.f32 %v3485, %v3504
  %v3519 = vadd.f32 %v3486, %v3504
  %v3520 = vadd.f32 %v3487, %v3504
  %v3521 = vadd.f32 %v3488, %v3504
  %v3522 = vadd.f32 %v3489, %v3504
  %v3523 = vadd.f32 %v3490, %v3509
  %v3524 = vadd.f32 %v3491, %v3509
  %v3525 = vadd.f32 %v3492, %v3509
  %v3526 = vadd.f32 %v3493, %v3509
  %v3527 = vadd.f32 %v3494, %v3509
  %v3528 = vadd.f32 %v3495, %v3509
  %vm3529 = vcmp.gt.f32.partialorder %v3511, 0.0
  %vm3530 = vcmp.gt.f32.partialorder %v3512, 0.0
  %vm3531 = vcmp.gt.f32.partialorder %v3513, 0.0
  %vm3532 = vcmp.gt.f32.partialorder %v3514, 0.0
  %vm3533 = vcmp.gt.f32.partialorder %v3515, 0.0
  %vm3534 = vcmp.gt.f32.partialorder %v3516, 0.0
  %vm3535 = vcmp.gt.f32.partialorder %v3517, 0.0
  %vm3536 = vcmp.gt.f32.partialorder %v3518, 0.0
  %vm3537 = vcmp.gt.f32.partialorder %v3519, 0.0
  %vm3538 = vcmp.gt.f32.partialorder %v3520, 0.0
  %vm3539 = vcmp.gt.f32.partialorder %v3521, 0.0
  %vm3540 = vcmp.gt.f32.partialorder %v3522, 0.0
  %vm3541 = vcmp.gt.f32.partialorder %v3523, 0.0
  %vm3542 = vcmp.gt.f32.partialorder %v3524, 0.0
  %vm3543 = vcmp.gt.f32.partialorder %v3525, 0.0
  %vm3544 = vcmp.gt.f32.partialorder %v3526, 0.0
  %vm3545 = vcmp.gt.f32.partialorder %v3527, 0.0
  %vm3546 = vcmp.gt.f32.partialorder %v3528, 0.0
  %v3547 = vld [vmem:[%s5] sm:$0xff]
  %v3548 = vld [vmem:[%s5 + $0x8] sm:$0xff]
  %v3549 = vld [vmem:[%s5 + $0x10] sm:$0xff]
  %3551 = vset.pattern.permute.xlu0 0
  %3552 = vperm.xlu0 %3551, %v3547
  %v3553 = vpop.permute.xlu0 %3552
  %3556 = vset.pattern.permute.xlu0 0
  %3557 = vperm.xlu0 %3556, %v3548
  %v3558 = vpop.permute.xlu0 %3557
  %3561 = vset.pattern.permute.xlu0 0
  %3562 = vperm.xlu0 %3561, %v3549
  %v3563 = vpop.permute.xlu0 %3562
  %v3565 = vmul.f32 %v3553, %v3511
  %v3566 = vmul.f32 %v3553, %v3512
  %v3567 = vmul.f32 %v3553, %v3513
  %v3568 = vmul.f32 %v3553, %v3514
  %v3569 = vmul.f32 %v3553, %v3515
  %v3570 = vmul.f32 %v3553, %v3516
  %v3571 = vmul.f32 %v3558, %v3517
  %v3572 = vmul.f32 %v3558, %v3518
  %v3573 = vmul.f32 %v3558, %v3519
  %v3574 = vmul.f32 %v3558, %v3520
  %v3575 = vmul.f32 %v3558, %v3521
  %v3576 = vmul.f32 %v3558, %v3522
  %v3577 = vmul.f32 %v3563, %v3523
  %v3578 = vmul.f32 %v3563, %v3524
  %v3579 = vmul.f32 %v3563, %v3525
  %v3580 = vmul.f32 %v3563, %v3526
  %v3581 = vmul.f32 %v3563, %v3527
  %v3582 = vmul.f32 %v3563, %v3528
  %v3583 = vsel %vm3529, %v3511, %v3565
  %v3584 = vsel %vm3530, %v3512, %v3566
  %v3585 = vsel %vm3531, %v3513, %v3567
  %v3586 = vsel %vm3532, %v3514, %v3568
  %v3587 = vsel %vm3533, %v3515, %v3569
  %v3588 = vsel %vm3534, %v3516, %v3570
  %v3589 = vsel %vm3535, %v3517, %v3571
  %v3590 = vsel %vm3536, %v3518, %v3572
  %v3591 = vsel %vm3537, %v3519, %v3573
  %v3592 = vsel %vm3538, %v3520, %v3574
  %v3593 = vsel %vm3539, %v3521, %v3575
  %v3594 = vsel %vm3540, %v3522, %v3576
  %v3595 = vsel %vm3541, %v3523, %v3577
  %v3596 = vsel %vm3542, %v3524, %v3578
  %v3597 = vsel %vm3543, %v3525, %v3579
  %v3598 = vsel %vm3544, %v3526, %v3580
  %v3599 = vsel %vm3545, %v3527, %v3581
  %v3600 = vsel %vm3546, %v3528, %v3582
  %3601 = vst [vmem:[%s8] sm:$0xff] %v3583
  %3602 = vst [vmem:[%s8 + $0x8] sm:$0xff] %v3584
  %3603 = vst [vmem:[%s8 + $0x10] sm:$0xff] %v3585
  %3604 = vst [vmem:[%s8 + $0x18] sm:$0xff] %v3589
  %3605 = vst [vmem:[%s8 + $0x20] sm:$0xff] %v3590
  %3606 = vst [vmem:[%s8 + $0x28] sm:$0xff] %v3591
  %3607 = vst [vmem:[%s8 + $0x30] sm:$0xff] %v3595
  %3608 = vst [vmem:[%s8 + $0x38] sm:$0xff] %v3596
  %3609 = vst [vmem:[%s8 + $0x40] sm:$0xff] %v3597
  %s3610 = scalar_lea.vmem %s8, 72
  %3611 = vst [vmem:[%s3610] sm:$0xff] %v3586
  %3612 = vst [vmem:[%s3610 + $0x8] sm:$0xff] %v3587
  %3613 = vst [vmem:[%s3610 + $0x10] sm:$0xff] %v3588
  %3614 = vst [vmem:[%s3610 + $0x18] sm:$0xff] %v3592
  %3615 = vst [vmem:[%s3610 + $0x20] sm:$0xff] %v3593
  %3616 = vst [vmem:[%s3610 + $0x28] sm:$0xff] %v3594
  %3617 = vst [vmem:[%s3610 + $0x30] sm:$0xff] %v3598
  %3618 = vst [vmem:[%s3610 + $0x38] sm:$0xff] %v3599
  %3619 = vst [vmem:[%s3610 + $0x40] sm:$0xff] %v3600
  // Predicated region
  $region34: #{downsampler_b.1} parent=0 // pred_check
    _
  $region35: #{downsampler_b.1} parent=0 // pred_check_branch
    %3621 = sbr.rel (0) target = $region37
  $region36: #{downsampler_b.1} parent=0 // pred_region
    _
  $region37: #{downsampler_b.1} parent=0 // pred_fallthru
    _
  // Predicated region
  $region38: #{downsampler_b.1} parent=0 // pred_check
    _
  $region39: #{downsampler_b.1} parent=0 // pred_check_branch
    %3623 = sbr.rel (0) target = $region41
  $region40: #{downsampler_b.1} parent=0 // pred_region
    _
  $region41: #{downsampler_b.1} parent=0 // pred_fallthru
    _

</llo_original>
